<compile_context>
chip_gen: v7x
topology: tpu7x:2x2x1
jax: 0.10.0
libtpu: 0.0.40
codegen_flags: <defaults>
</compile_context>

<pallas_src>
import functools

import jax
import jax.numpy as jnp
import numpy as np
from jax import lax
from jax.experimental import pallas as pl
from jax.experimental.pallas import tpu as pltpu


def _leaky(x, slope):
    return jnp.where(x >= 0, x, slope * x)


def _dot_dtype(mxu_dtype):
    return jnp.float32 if mxu_dtype is None else mxu_dtype


@functools.lru_cache(maxsize=1)
def _vmem_limit_bytes():
    # Generation-aware scoped-VMEM limit: ~3/4 of physical, capped at 96 MiB
    # (v5e/v6e: 128 MiB physical -> 96 MiB; v7x: 64 MiB physical -> 48 MiB).
    try:
        cap = pltpu.get_tpu_info().vmem_capacity_bytes
        return int(min(96 * 1024 * 1024, (cap * 3) // 4))
    except Exception:
        return 64 * 1024 * 1024


# --------------------------------------------------------------------------- #
# Tile pickers.  Tiles are divisors of the full extent that are multiples of
# 128 (or the full extent), prefer >=2 grid steps (v7x dual-TC), and target
# ~1K lanes per step (amortize the ~0.35 us/step pipeline overhead).
# --------------------------------------------------------------------------- #
def _pick_time_tile(tout, target=1024):
    if tout % 128 != 0:
        return tout
    cands = [d for d in range(128, tout + 1, 128) if tout % d == 0]
    multi = [d for d in cands if tout // d >= 2]
    pool = multi if multi else cands
    under = [d for d in pool if d <= target]
    return max(under) if under else min(pool)


def _pick_cout_tile(cout, kcin, elem_bytes=4, weight_budget=8 * 1024 * 1024):
    if cout % 128 != 0 or kcin * cout * elem_bytes <= weight_budget:
        return cout
    best = 128
    for m in range(1, cout // 128 + 1):
        tn = 128 * m
        if cout % tn == 0 and kcin * tn * elem_bytes <= weight_budget:
            best = tn
    return best


def _pick_lvc_chunks(L, hop, max_chunks=16, target_cols=1024):
    """hop-chunks per grid step: store width multiple of 128 (or full T), small unroll."""
    cands = [cp for cp in range(1, min(L, max_chunks) + 1)
             if L % cp == 0 and (cp * hop) % 128 == 0]
    if not cands:
        return L                       # full-length fallback (lane dim == full array dim)
    multi = [cp for cp in cands if L // cp >= 2]
    pool = multi if multi else cands
    under = [cp for cp in pool if cp * hop <= target_cols]
    return max(under) if under else min(pool)


def _time_windows(xp, stride, width):
    """xp: (B, C, Tp) -> (B, nW, C, width); window w covers xp[:, :, w*stride : w*stride+width].

    Overlap between consecutive windows is only (width - stride) columns, so this
    wrapper gather costs ~one extra pass over x while making every Pallas block
    O(window) instead of O(full T)."""
    B, C, Tp = xp.shape
    nW = (Tp - width) // stride + 1
    if nW == 1:
        return xp[:, None, :, :]
    idx = (jnp.arange(nW) * stride)[:, None] + jnp.arange(width)[None, :]
    return jnp.transpose(xp[:, :, idx], (0, 2, 1, 3))


# --------------------------------------------------------------------------- #
# Pallas kernel 1: NCW Conv1d on pre-windowed input (channels small, time on
# lanes).  im2col over the K taps -> single MXU matmul, optional fused
# LeakyReLU in/out.  Used for the kernel-predictor input conv.
# --------------------------------------------------------------------------- #
def _conv1d_ncw_kernel(xw_ref, w_ref, b_ref, o_ref, *, K, dilation, TT,
                       slope_in, slope_out, mxu_dtype):
    dt = _dot_dtype(mxu_dtype)
    xw = xw_ref[...].astype(jnp.float32)                 # (Cin, TT + dilation*(K-1))
    if slope_in is not None:
        xw = _leaky(xw, slope_in)                        # leaky(0)=0 -> zero padding stays zero
    parts = [xw[:, k * dilation: k * dilation + TT] for k in range(K)]
    xkm = parts[0] if K == 1 else jnp.concatenate(parts, axis=0)   # (K*Cin, TT)
    acc = jnp.dot(w_ref[...].astype(dt), xkm.astype(dt),
                  preferred_element_type=jnp.float32)
    acc = acc + b_ref[...].astype(jnp.float32)
    if slope_out is not None:
        acc = _leaky(acc, slope_out)
    o_ref[...] = acc.astype(o_ref.dtype)


def conv1d_ncw(x, weight, bias, *, padding, dilation=1,
               slope_in=None, slope_out=None, mxu_dtype=None):
    """(LeakyReLU ->) Conv1d (-> LeakyReLU), PyTorch NCL semantics, NCW layout."""
    B, Cin, T = x.shape
    Cout, _, K = weight.shape
    halo = dilation * (K - 1)
    Tout = T + 2 * padding - halo
    xp = jnp.pad(x, ((0, 0), (0, 0), (padding, padding)))
    TT = _pick_time_tile(Tout)
    n_tt = Tout // TT
    xw = _time_windows(xp, TT, TT + halo)                # (B, n_tt, Cin, TT+halo)
    # weight (Cout, K*Cin), columns ordered (k, i) to match the im2col rows
    w_mat = jnp.transpose(weight, (0, 2, 1)).reshape(Cout, K * Cin)
    if mxu_dtype is not None:
        w_mat = w_mat.astype(mxu_dtype)
    b2 = bias.reshape(Cout, 1).astype(jnp.float32)
    kern = functools.partial(_conv1d_ncw_kernel, K=K, dilation=dilation, TT=TT,
                             slope_in=slope_in, slope_out=slope_out,
                             mxu_dtype=mxu_dtype)
    return pl.pallas_call(
        kern,
        out_shape=jax.ShapeDtypeStruct((B, Cout, Tout), x.dtype),
        grid=(B, n_tt),
        in_specs=[
            pl.BlockSpec((None, None, Cin, TT + halo), lambda b, t: (b, t, 0, 0)),
            pl.BlockSpec((Cout, K * Cin), lambda b, t: (0, 0)),
            pl.BlockSpec((Cout, 1), lambda b, t: (0, 0)),
        ],
        out_specs=pl.BlockSpec((None, Cout, TT), lambda b, t: (b, 0, t)),
        compiler_params=pltpu.CompilerParams(
            dimension_semantics=("parallel", "parallel"),
            vmem_limit_bytes=_vmem_limit_bytes()),
    )(xw, w_mat, b2)


# --------------------------------------------------------------------------- #
# Pallas kernel 2: NWC Conv1d for the wide kernel-predictor output conv (large
# channel dim on lanes -> lane-dense stores, big MXU N-dim, output-channel
# tiling).  Grid is (cout_tile, batch) so each weight tile is DMA'd once.
# --------------------------------------------------------------------------- #
def _conv1d_nwc_kernel(xp_ref, w_ref, b_ref, o_ref, *, K, dilation, Tout,
                       slope_in, slope_out, mxu_dtype):
    dt = _dot_dtype(mxu_dtype)
    x = xp_ref[...].astype(jnp.float32)                  # (Tpad, Cin)
    if slope_in is not None:
        x = _leaky(x, slope_in)
    parts = [x[k * dilation: k * dilation + Tout, :] for k in range(K)]
    xkm = parts[0] if K == 1 else jnp.concatenate(parts, axis=1)   # (Tout, K*Cin)
    acc = jnp.dot(xkm.astype(dt), w_ref[...].astype(dt),
                  preferred_element_type=jnp.float32)
    acc = acc + b_ref[...].astype(jnp.float32)
    if slope_out is not None:
        acc = _leaky(acc, slope_out)
    o_ref[...] = acc.astype(o_ref.dtype)


def conv1d_nwc(x, weight, bias, *, padding, dilation=1,
               slope_in=None, slope_out=None, mxu_dtype=None):
    """Conv1d with activations in (B, T, C) layout (channels on lanes)."""
    B, T, Cin = x.shape
    Cout, _, K = weight.shape
    Tout = T + 2 * padding - dilation * (K - 1)
    Tpad = T + 2 * padding
    xp = jnp.pad(x, ((0, 0), (padding, padding), (0, 0)))
    # weight (K*Cin, Cout): contraction on sublanes, big Cout on lanes
    w_mat = jnp.transpose(weight, (2, 1, 0)).reshape(K * Cin, Cout)
    if mxu_dtype is not None:
        w_mat = w_mat.astype(mxu_dtype)
    b2 = bias.reshape(1, Cout).astype(jnp.float32)
    TN = _pick_cout_tile(Cout, K * Cin)
    n_ct = Cout // TN
    kern = functools.partial(_conv1d_nwc_kernel, K=K, dilation=dilation, Tout=Tout,
                             slope_in=slope_in, slope_out=slope_out,
                             mxu_dtype=mxu_dtype)
    flops = 2 * B * Tout * K * Cin * Cout
    bytes_accessed = 4 * (B * Tpad * Cin + K * Cin * Cout + B * Tout * Cout)
    return pl.pallas_call(
        kern,
        out_shape=jax.ShapeDtypeStruct((B, Tout, Cout), x.dtype),
        # weight-tile axis OUTERMOST (batch innermost): each Cout weight tile is
        # fetched once and reused across the batch.
        grid=(n_ct, B),
        in_specs=[
            pl.BlockSpec((None, Tpad, Cin), lambda j, b: (b, 0, 0)),
            pl.BlockSpec((K * Cin, TN), lambda j, b: (0, j)),
            pl.BlockSpec((1, TN), lambda j, b: (0, j)),
        ],
        out_specs=pl.BlockSpec((None, Tout, TN), lambda j, b: (b, 0, j)),
        compiler_params=pltpu.CompilerParams(
            dimension_semantics=("parallel", "parallel"),
            vmem_limit_bytes=_vmem_limit_bytes()),
        cost_estimate=pl.CostEstimate(flops=int(flops), transcendentals=0,
                                      bytes_accessed=int(bytes_accessed)),
    )(xp, w_mat, b2)


# --------------------------------------------------------------------------- #
# Pallas kernel 3: fused kernel-predictor residual block in NCW layout (time on
# lanes), time-tiled on pre-windowed input:
#   r = LReLU(conv1(h)); r = LReLU(conv2(r)); out = h + r     (Dropout(0) = id)
# --------------------------------------------------------------------------- #
def _kp_resblock_kernel(hw_ref, w1_ref, b1_ref, w2_ref, b2_ref, o_ref, *,
                        Kp, pad, TT, Lc, slope, mxu_dtype):
    dt = _dot_dtype(mxu_dtype)
    t = pl.program_id(1)
    hw = hw_ref[...].astype(jnp.float32)                 # (H, TT + 4*pad)
    W1c = TT + 2 * pad
    parts = [hw[:, k: k + W1c] for k in range(Kp)]
    xk = parts[0] if Kp == 1 else jnp.concatenate(parts, axis=0)
    r1 = _leaky(jnp.dot(w1_ref[...].astype(dt), xk.astype(dt),
                        preferred_element_type=jnp.float32)
                + b1_ref[...].astype(jnp.float32), slope)            # (H, TT+2*pad)
    # conv2 zero-pads r1 at the sequence boundary: mask halo columns outside [0, Lc)
    pos = t * TT - pad + lax.broadcasted_iota(jnp.int32, (1, W1c), 1)
    r1 = jnp.where((pos >= 0) & (pos < Lc), r1, 0.0)
    parts2 = [r1[:, k: k + TT] for k in range(Kp)]
    xk2 = parts2[0] if Kp == 1 else jnp.concatenate(parts2, axis=0)
    r2 = _leaky(jnp.dot(w2_ref[...].astype(dt), xk2.astype(dt),
                        preferred_element_type=jnp.float32)
                + b2_ref[...].astype(jnp.float32), slope)            # (H, TT)
    o_ref[...] = (hw[:, 2 * pad: 2 * pad + TT] + r2).astype(o_ref.dtype)


def kp_res_block(h, rb, *, padding, slope, mxu_dtype=None):
    B, H, Lc = h.shape
    Kp = rb["w1"].shape[2]
    pad = padding
    TT = _pick_time_tile(Lc)
    n_tt = Lc // TT
    hp = jnp.pad(h, ((0, 0), (0, 0), (2 * pad, 2 * pad)))
    hw = _time_windows(hp, TT, TT + 4 * pad)             # (B, n_tt, H, TT+4*pad)

    def prep(w):
        m = jnp.transpose(w, (0, 2, 1)).reshape(H, Kp * H)   # columns ordered (k, i)
        return m.astype(mxu_dtype) if mxu_dtype is not None else m

    w1, w2 = prep(rb["w1"]), prep(rb["w2"])
    b1 = rb["b1"].reshape(H, 1).astype(jnp.float32)
    b2 = rb["b2"].reshape(H, 1).astype(jnp.float32)
    kern = functools.partial(_kp_resblock_kernel, Kp=Kp, pad=pad, TT=TT, Lc=Lc,
                             slope=slope, mxu_dtype=mxu_dtype)
    return pl.pallas_call(
        kern,
        out_shape=jax.ShapeDtypeStruct((B, H, Lc), h.dtype),
        grid=(B, n_tt),
        in_specs=[
            pl.BlockSpec((None, None, H, TT + 4 * pad), lambda b, t: (b, t, 0, 0)),
            pl.BlockSpec((H, Kp * H), lambda b, t: (0, 0)),
            pl.BlockSpec((H, 1), lambda b, t: (0, 0)),
            pl.BlockSpec((H, Kp * H), lambda b, t: (0, 0)),
            pl.BlockSpec((H, 1), lambda b, t: (0, 0)),
        ],
        out_specs=pl.BlockSpec((None, H, TT), lambda b, t: (b, 0, t)),
        compiler_params=pltpu.CompilerParams(
            dimension_semantics=("parallel", "parallel"),
            vmem_limit_bytes=_vmem_limit_bytes()),
    )(hw, w1, b1, w2, b2)


# --------------------------------------------------------------------------- #
# Pallas kernel 4: FUSED per-layer main-path step
#   out  = LReLU(dilated Conv1d(LReLU(x)))            (never written to HBM)
#   gate = sigmoid(LVC(out)[:C]) * tanh(LVC(out)[C:])
#   x'   = x + gate
# grid = (B, nG); each step consumes one pre-windowed group of CP hop-chunks.
# --------------------------------------------------------------------------- #
def _conv_lvc_gate_kernel(xw_ref, wc_ref, bc_ref, kern_ref, kb_ref, o_ref, *,
                          hop, Kc, C, CP, dil, pad_conv, pad_lvc, T, slope,
                          mxu_dtype):
    dt = _dot_dtype(mxu_dtype)
    g = pl.program_id(1)
    Wc = CP * hop + 2 * pad_lvc
    xw = xw_ref[...].astype(jnp.float32)                 # (C, CP*hop + 2*(pad_conv+pad_lvc))
    # ---- dilated Conv1d with fused LeakyReLU in/out over the group window ----
    xl = _leaky(xw, slope)
    parts = [xl[:, k * dil: k * dil + Wc] for k in range(Kc)]
    xkm = parts[0] if Kc == 1 else jnp.concatenate(parts, axis=0)   # (Kc*C, Wc)
    conv = jnp.dot(wc_ref[...].astype(dt), xkm.astype(dt),
                   preferred_element_type=jnp.float32)
    conv = _leaky(conv + bc_ref[...].astype(jnp.float32), slope)    # (C, Wc)
    # LVC zero-pads the conv OUTPUT at the sequence boundary: mask halo columns
    pos = g * (CP * hop) - pad_lvc + lax.broadcasted_iota(jnp.int32, (1, Wc), 1)
    conv = jnp.where((pos >= 0) & (pos < T), conv, 0.0)
    # ---- location-variable convolution (one matmul per hop chunk) ----
    accs = []
    for cp in range(CP):                                 # small static chunk loop
        p2 = [conv[:, cp * hop + k: cp * hop + k + hop] for k in range(Kc)]
        xk2 = p2[0] if Kc == 1 else jnp.concatenate(p2, axis=0)     # (Kc*C, hop)
        a = jnp.dot(kern_ref[cp].astype(dt), xk2.astype(dt),
                    preferred_element_type=jnp.float32)
        accs.append(a + kb_ref[cp].astype(jnp.float32))
    acc = accs[0] if CP == 1 else jnp.concatenate(accs, axis=1)     # (2C, CP*hop)
    gated = jax.nn.sigmoid(acc[:C]) * jnp.tanh(acc[C:])
    x_res = xw[:, pad_conv + pad_lvc: pad_conv + pad_lvc + CP * hop]
    o_ref[...] = (x_res + gated).astype(o_ref.dtype)


def fused_conv_lvc_gate(x, conv_w, conv_b, kernels4, bias4, *, layer, n_layers,
                        dilation, hop, slope, mxu_dtype=None):
    # x: (B, C, T)   kernels4: (B, Lc, nL*2C, Kc*C)   bias4: (B, Lc, nL*2C, 1)
    B, C, T = x.shape
    _, Lc, nLCo, KC = kernels4.shape
    Co = nLCo // n_layers
    Kc = KC // C
    assert T == Lc * hop, "length of (x, kernel) is not matched"
    pad_lvc = (Kc - 1) // 2                              # LVC dilation = 1 in LVCBlock
    pad_conv = dilation * (Kc - 1) // 2
    pad_tot = pad_lvc + pad_conv
    CP = _pick_lvc_chunks(Lc, hop)
    nG = Lc // CP
    W = CP * hop + 2 * pad_tot
    xp = jnp.pad(x, ((0, 0), (0, 0), (pad_tot, pad_tot)))
    xw = _time_windows(xp, CP * hop, W)                  # (B, nG, C, W)
    w_mat = jnp.transpose(conv_w, (0, 2, 1)).reshape(C, Kc * C)
    if mxu_dtype is not None:
        w_mat = w_mat.astype(mxu_dtype)
    b2 = conv_b.reshape(C, 1).astype(jnp.float32)

    if Co % 8 == 0:
        # layer selected inside the BlockSpec index_map (no XLA slice of the predictor output)
        karr, barr, li = kernels4, bias4, layer
    else:
        karr = kernels4[:, :, layer * Co:(layer + 1) * Co]
        barr = bias4[:, :, layer * Co:(layer + 1) * Co]
        li = 0

    kern = functools.partial(_conv_lvc_gate_kernel, hop=hop, Kc=Kc, C=C, CP=CP,
                             dil=dilation, pad_conv=pad_conv, pad_lvc=pad_lvc,
                             T=T, slope=slope, mxu_dtype=mxu_dtype)
    flops = 2 * B * T * Kc * C * (C + Co)
    bytes_accessed = 4 * (B * nG * C * W + B * Lc * Co * (KC + 1) + B * C * T)
    return pl.pallas_call(
        kern,
        out_shape=jax.ShapeDtypeStruct((B, C, T), x.dtype),
        grid=(B, nG),
        in_specs=[
            pl.BlockSpec((None, None, C, W), lambda b, g: (b, g, 0, 0)),
            pl.BlockSpec((C, Kc * C), lambda b, g: (0, 0)),
            pl.BlockSpec((C, 1), lambda b, g: (0, 0)),
            pl.BlockSpec((None, CP, Co, KC), lambda b, g: (b, g, li, 0)),
            pl.BlockSpec((None, CP, Co, 1), lambda b, g: (b, g, li, 0)),
        ],
        out_specs=pl.BlockSpec((None, C, CP * hop), lambda b, g: (b, 0, g)),
        compiler_params=pltpu.CompilerParams(
            dimension_semantics=("parallel", "parallel"),
            vmem_limit_bytes=_vmem_limit_bytes()),
        cost_estimate=pl.CostEstimate(flops=int(flops),
                                      transcendentals=int(2 * B * T * Co),
                                      bytes_accessed=int(bytes_accessed)),
    )(xw, w_mat, b2, karr, barr)


# --------------------------------------------------------------------------- #
# Pallas kernel 5: ConvTranspose1d via stride-phase decomposition.  The phase
# shift/add is fused into the kernel; only one interleave reshape stays in XLA.
# --------------------------------------------------------------------------- #
def _convt_phase_kernel(xw_ref, wlo_ref, whi_ref, b_ref, o_ref, *, TL, slope,
                        mxu_dtype):
    dt = _dot_dtype(mxu_dtype)
    xl = _leaky(xw_ref[...].astype(jnp.float32), slope)  # (Cin, TL+1); col 0 is the left halo
    zlo = jnp.dot(wlo_ref[...].astype(dt), xl[:, 1:].astype(dt),
                  preferred_element_type=jnp.float32)    # taps k in [0, s)   at column q
    zhi = jnp.dot(whi_ref[...].astype(dt), xl[:, :TL].astype(dt),
                  preferred_element_type=jnp.float32)    # taps k in [s, 2s)  at column q-1
    o_ref[...] = (zlo + zhi + b_ref[...].astype(jnp.float32)).astype(o_ref.dtype)


def conv_transpose1d(x, weight, bias, *, stride, padding, output_padding,
                     slope_in, mxu_dtype=None):
    """(LeakyReLU ->) ConvTranspose1d, weight (Cin, Cout, K) PyTorch layout."""
    B, Cin, L = x.shape
    _, Cout, Kt = weight.shape
    s = stride
    assert Kt == 2 * s, "LVCBlock uses kernel_size == 2*stride"
    Tout = (L - 1) * s - 2 * padding + Kt + output_padding
    assert Tout == L * s
    TL = _pick_time_tile(L)
    nT = L // TL
    xp = jnp.pad(x, ((0, 0), (0, 0), (1, 0)))            # 1-column left halo (q-1 term)
    xw = _time_windows(xp, TL, TL + 1)                   # (B, nT, Cin, TL+1)
    wt = jnp.transpose(weight, (1, 2, 0))                # (Cout, Kt, Cin)
    wlo = wt[:, :s].reshape(Cout * s, Cin)
    whi = wt[:, s:].reshape(Cout * s, Cin)
    if mxu_dtype is not None:
        wlo = wlo.astype(mxu_dtype)
        whi = whi.astype(mxu_dtype)
    brep = jnp.repeat(bias, s).reshape(Cout * s, 1).astype(jnp.float32)
    kern = functools.partial(_convt_phase_kernel, TL=TL, slope=slope_in,
                             mxu_dtype=mxu_dtype)
    u = pl.pallas_call(
        kern,
        out_shape=jax.ShapeDtypeStruct((B, Cout * s, L), x.dtype),
        grid=(B, nT),
        in_specs=[
            pl.BlockSpec((None, None, Cin, TL + 1), lambda b, t: (b, t, 0, 0)),
            pl.BlockSpec((Cout * s, Cin), lambda b, t: (0, 0)),
            pl.BlockSpec((Cout * s, Cin), lambda b, t: (0, 0)),
            pl.BlockSpec((Cout * s, 1), lambda b, t: (0, 0)),
        ],
        out_specs=pl.BlockSpec((None, Cout * s, TL), lambda b, t: (b, 0, t)),
        compiler_params=pltpu.CompilerParams(
            dimension_semantics=("parallel", "parallel"),
            vmem_limit_bytes=_vmem_limit_bytes()),
    )(xw, wlo, whi, brep)
    # interleave phases: (B, Cout*s, L) -> (B, Cout, L*s); drop the first `padding` samples
    y = jnp.transpose(u.reshape(B, Cout, s, L), (0, 1, 3, 2)).reshape(B, Cout, L * s)
    y_main = y[:, :, padding:]
    # the last `padding` output samples come only from the high-phase taps at the final column
    xl_last = _leaky(x[:, :, -1].astype(jnp.float32), slope_in)      # (B, Cin)
    tail = jnp.einsum("bi,iop->bop", xl_last,
                      weight[:, :, s:s + padding].astype(jnp.float32))
    tail = tail + bias.astype(jnp.float32)[None, :, None]
    return jnp.concatenate([y_main, tail.astype(x.dtype)], axis=-1)


# --------------------------------------------------------------------------- #
# Parameter init (deterministic, synthetic; PyTorch weight layouts).
# --------------------------------------------------------------------------- #
def init_params(key, cfg):
    Cin = cfg["in_channels"]
    Ccond = cfg["cond_channels"]
    H = cfg["kpnet_hidden_channels"]
    Kc = cfg["conv_kernel_size"]
    Kp = cfg["kpnet_conv_size"]
    nL = cfg["n_layers"]
    stride = cfg["stride"]
    Cout = 2 * Cin

    def w(k, shape):
        return 0.1 * jax.random.normal(k, shape, jnp.float32)

    keys = iter(jax.random.split(key, 64))
    params = {
        "convt_pre": {"w": w(next(keys), (Cin, Cin, 2 * stride)),  # (Cin, Cout, K)
                      "b": w(next(keys), (Cin,))},
        "conv_blocks": [{"w": w(next(keys), (Cin, Cin, Kc)),
                         "b": w(next(keys), (Cin,))} for _ in range(nL)],
        "kp": {
            "in_w": w(next(keys), (H, Ccond, 5)),
            "in_b": w(next(keys), (H,)),
            "res": [{"w1": w(next(keys), (H, H, Kp)), "b1": w(next(keys), (H,)),
                     "w2": w(next(keys), (H, H, Kp)), "b2": w(next(keys), (H,))}
                    for _ in range(3)],
            "k_w": w(next(keys), (nL * Cin * Cout * Kc, H, Kp)),
            "k_b": w(next(keys), (nL * Cin * Cout * Kc,)),
            "b_w": w(next(keys), (nL * Cout, H, Kp)),
            "b_b": w(next(keys), (nL * Cout,)),
        },
    }
    return params


# --------------------------------------------------------------------------- #
# Forward passes (Pallas path).
# --------------------------------------------------------------------------- #
def kernel_predictor_forward(c, p, cfg, mxu_dtype=None):
    slope = cfg["slope"]
    Kp = cfg["kpnet_conv_size"]
    padp = (Kp - 1) // 2
    Cin, nL, Kc = cfg["in_channels"], cfg["n_layers"], cfg["conv_kernel_size"]
    Co = 2 * Cin
    H = cfg["kpnet_hidden_channels"]
    CK = nL * Cin * Co * Kc

    # hidden path in NCW layout (time on lanes -> lane-dense stores, bigger MXU N)
    h = conv1d_ncw(c, p["in_w"], p["in_b"], padding=2, slope_out=slope,
                   mxu_dtype=mxu_dtype)
    for rb in p["res"]:
        h = kp_res_block(h, rb, padding=padp, slope=slope, mxu_dtype=mxu_dtype)

    # one transpose to channel-last for the wide fused kernel+bias conv
    h_nwc = jnp.transpose(h, (0, 2, 1))                  # (B, Lc, H)
    # permute kernel-conv output channels (at the weight level) from PyTorch's
    # (layer, i, o, k) to (layer, o, k, i) so the LVC consumes a plain reshape.
    k_w = p["k_w"].reshape(nL, Cin, Co, Kc, H, Kp)
    k_w = jnp.transpose(k_w, (0, 2, 3, 1, 4, 5)).reshape(CK, H, Kp)
    k_b = jnp.transpose(p["k_b"].reshape(nL, Cin, Co, Kc), (0, 2, 3, 1)).reshape(CK)
    w_cat = jnp.concatenate([k_w, p["b_w"]], axis=0)
    b_cat = jnp.concatenate([k_b, p["b_b"]], axis=0)
    out = conv1d_nwc(h_nwc, w_cat, b_cat, padding=padp, mxu_dtype=mxu_dtype)
    B, Lc, _ = out.shape
    kernels4 = out[:, :, :CK].reshape(B, Lc, nL * Co, Kc * Cin)   # (B, L, layer*2C, K*C)
    bias4 = out[:, :, CK:].reshape(B, Lc, nL * Co, 1)             # (B, L, layer*2C, 1)
    return kernels4, bias4


def lvc_block_forward(x, c, params, cfg, mxu_dtype=None):
    stride = cfg["stride"]
    slope = cfg["slope"]
    hop = cfg["cond_hop_length"]
    nL = cfg["n_layers"]
    # convt_pre: LeakyReLU -> ConvTranspose1d (fused Pallas phase kernel)
    x = conv_transpose1d(x, params["convt_pre"]["w"], params["convt_pre"]["b"],
                         stride=stride, padding=stride // 2 + stride % 2,
                         output_padding=stride % 2, slope_in=slope,
                         mxu_dtype=mxu_dtype)
    kernels4, bias4 = kernel_predictor_forward(c, params["kp"], cfg, mxu_dtype)
    if mxu_dtype is not None:
        kernels4 = kernels4.astype(mxu_dtype)            # cast once, reused by all layers
    for i, dilation in enumerate(cfg["dilations"]):
        blk = params["conv_blocks"][i]
        # fused: LeakyReLU -> dilated Conv1d -> LeakyReLU -> LVC -> gating -> +x
        x = fused_conv_lvc_gate(x, blk["w"], blk["b"], kernels4, bias4,
                                layer=i, n_layers=nL, dilation=dilation,
                                hop=hop, slope=slope, mxu_dtype=mxu_dtype)
    return x


# --------------------------------------------------------------------------- #
# Pure-JAX reference (for correctness check against the Pallas path).
# --------------------------------------------------------------------------- #
def _ref_conv1d(x, w, b, padding, dilation=1):
    out = lax.conv_general_dilated(
        x, w, window_strides=(1,), padding=[(padding, padding)],
        rhs_dilation=(dilation,), dimension_numbers=("NCH", "OIH", "NCH"))
    return out + b[None, :, None]


def _ref_conv_transpose1d(x, w, b, stride, padding, output_padding):
    K = w.shape[2]
    w_eq = jnp.transpose(jnp.flip(w, 2), (1, 0, 2))
    out = lax.conv_general_dilated(
        x, w_eq, window_strides=(1,),
        padding=[(K - 1 - padding, K - 1 - padding + output_padding)],
        lhs_dilation=(stride,), dimension_numbers=("NCH", "OIH", "NCH"))
    return out + b[None, :, None]


def _ref_lvc(xc, kern, bias, hop):
    B, Ci, T = xc.shape
    _, _, Co, K, L = kern.shape
    pad = (K - 1) // 2
    xp = jnp.pad(xc, ((0, 0), (0, 0), (pad, pad)))
    idx = (jnp.arange(L)[:, None, None] * hop
           + jnp.arange(hop)[None, :, None]
           + jnp.arange(K)[None, None, :])
    xw = xp[:, :, idx]                                   # (B, Ci, L, hop, K)
    o = jnp.einsum("bilsk,biokl->bols", xw, kern) + bias[:, :, :, None]
    return o.reshape(B, Co, L * hop)


def ref_forward(x, c, params, cfg):
    slope = cfg["slope"]
    stride = cfg["stride"]
    Cin = cfg["in_channels"]
    Kc = cfg["conv_kernel_size"]
    x = _ref_conv_transpose1d(_leaky(x, slope), params["convt_pre"]["w"],
                              params["convt_pre"]["b"], stride,
                              stride // 2 + stride % 2, stride % 2)
    p = params["kp"]
    Kp = cfg["kpnet_conv_size"]
    padp = (Kp - 1) // 2
    h = _leaky(_ref_conv1d(c, p["in_w"], p["in_b"], 2), slope)
    for rb in p["res"]:
        r = _leaky(_ref_conv1d(h, rb["w1"], rb["b1"], padp), slope)
        r = _leaky(_ref_conv1d(r, rb["w2"], rb["b2"], padp), slope)
        h = h + r
    k = _ref_conv1d(h, p["k_w"], p["k_b"], padp)
    bb = _ref_conv1d(h, p["b_w"], p["b_b"], padp)
    B, _, Lc = c.shape
    nL = cfg["n_layers"]
    Cout = 2 * Cin
    kernels = k.reshape(B, nL, Cin, Cout, Kc, Lc)
    bias = bb.reshape(B, nL, Cout, Lc)
    for i, dilation in enumerate(cfg["dilations"]):
        blk = params["conv_blocks"][i]
        pad = dilation * (Kc - 1) // 2
        out = _leaky(_ref_conv1d(_leaky(x, slope), blk["w"], blk["b"], pad, dilation), slope)
        o = _ref_lvc(out, kernels[:, i], bias[:, i], cfg["cond_hop_length"])
        x = x + jax.nn.sigmoid(o[:, :Cin]) * jnp.tanh(o[:, Cin:])
    return x


# --------------------------------------------------------------------------- #
def _run_case(cfg, B, Lin, key, mxu_dtype=None, rtol=1e-4, atol=1e-4):
    k_params, kx, kc = jax.random.split(key, 3)
    params = init_params(k_params, cfg)
    T_out = Lin * cfg["stride"]
    Lc = T_out // cfg["cond_hop_length"]
    x = jax.random.normal(kx, (B, cfg["in_channels"], Lin), jnp.float32)
    c = jax.random.normal(kc, (B, cfg["cond_channels"], Lc), jnp.float32)
    y_ref = ref_forward(x, c, params, cfg)
    fwd = jax.jit(lambda a, b: lvc_block_forward(a, b, params, cfg, mxu_dtype=mxu_dtype))
    y = jax.block_until_ready(fwd(x, c))
    assert y.shape == (B, cfg["in_channels"], T_out)
    np.testing.assert_allclose(np.asarray(y), np.asarray(y_ref), rtol=rtol, atol=atol)
    return y


if __name__ == "__main__":
    cfg = dict(
        in_channels=4,
        cond_channels=8,
        stride=2,
        dilations=(1, 3),
        slope=0.2,                 # lReLU_slope
        conv_kernel_size=3,
        cond_hop_length=8,
        kpnet_hidden_channels=16,
        kpnet_conv_size=3,
        kpnet_dropout=0.0,         # identity at inference
    )
    cfg["n_layers"] = len(cfg["dilations"])

    key = jax.random.PRNGKey(0)
    k1, k2 = jax.random.split(key)

    # Case 1: tiny shapes (B=2, Cin=4, Lin=16) — single-tile everywhere, f32 exact check.
    _run_case(cfg, B=2, Lin=16, key=k1, mxu_dtype=None, rtol=1e-4, atol=1e-4)

    # Case 1b: bf16 MXU operands (f32 accumulation, f32 VPU/EUP math) — v6e/v7x fast path.
    _run_case(cfg, B=2, Lin=16, key=k1, mxu_dtype=jnp.bfloat16, rtol=5e-2, atol=5e-2)

    # Case 2: larger shapes (B=1, Lin=1024 -> T=2048, Lc=256) — exercises the windowed
    # multi-tile / multi-group paths (time tiling of the predictor convs, nG>1 groups in
    # the fused conv+LVC kernel with boundary masking, 2-tile ConvTranspose).
    _run_case(cfg, B=1, Lin=1024, key=k2, mxu_dtype=None, rtol=1e-4, atol=1e-4)

    print("KERNEL_OK")
</pallas_src>

<mosaic_0001>
module attributes {stable_mosaic.version = 11 : i64} {
  func.func @_convt_phase_kernel(%arg0: i32, %arg1: i32, %arg2: memref<1x1x4x17xf32, #tpu.memory_space<vmem>>, %arg3: memref<8x4xf32, #tpu.memory_space<vmem>>, %arg4: memref<8x4xf32, #tpu.memory_space<vmem>>, %arg5: memref<8x1xf32, #tpu.memory_space<vmem>>, %arg6: memref<1x8x16xf32, #tpu.memory_space<vmem>>) attributes {dimension_semantics = [#tpu.dimension_semantics<parallel>, #tpu.dimension_semantics<parallel>], iteration_bounds = array<i64: 2, 1>, scalar_prefetch = 0 : i64, scratch_operands = 0 : i64, tpu.core_type = #tpu.core_type<tc>, window_params = [{transform_indices = @transform_0, window_bounds = array<i64: 1, 1, 4, 17>}, {pipeline_mode = #tpu.pipeline_mode<synchronous>, transform_indices = @transform_1, window_bounds = array<i64: 8, 4>}, {pipeline_mode = #tpu.pipeline_mode<synchronous>, transform_indices = @transform_2, window_bounds = array<i64: 8, 4>}, {pipeline_mode = #tpu.pipeline_mode<synchronous>, transform_indices = @transform_3, window_bounds = array<i64: 8, 1>}, {transform_indices = @transform_4, window_bounds = array<i64: 1, 8, 16>}]} {
    %c0 = arith.constant 0 : index
    %c0_0 = arith.constant 0 : index
    %c0_1 = arith.constant 0 : index
    %c0_2 = arith.constant 0 : index
    %0 = vector.load %arg2[%c0, %c0_0, %c0_1, %c0_2] : memref<1x1x4x17xf32, #tpu.memory_space<vmem>>, vector<1x1x4x17xf32>
    %1 = vector.shape_cast %0 : vector<1x1x4x17xf32> to vector<4x17xf32>
    %cst = arith.constant 0.000000e+00 : f32
    %2 = vector.broadcast %cst : f32 to vector<4x17xf32>
    %3 = arith.cmpf oge, %1, %2 : vector<4x17xf32>
    %cst_3 = arith.constant 2.000000e-01 : f32
    %4 = vector.broadcast %cst_3 : f32 to vector<4x17xf32>
    %5 = arith.mulf %4, %1 : vector<4x17xf32>
    %6 = arith.select %3, %1, %5 : vector<4x17xi1>, vector<4x17xf32>
    %c0_4 = arith.constant 0 : index
    %c0_5 = arith.constant 0 : index
    %7 = vector.load %arg3[%c0_4, %c0_5] : memref<8x4xf32, #tpu.memory_space<vmem>>, vector<8x4xf32>
    %8 = vector.extract_strided_slice %6 {offsets = [0, 1], sizes = [4, 16], strides = [1, 1]} : vector<4x17xf32> to vector<4x16xf32>
    %cst_6 = arith.constant dense<0.000000e+00> : vector<8x16xf32>
    %9 = tpu.matmul %7, %8, %cst_6 {dimension_numbers = #tpu.dot_dimension_numbers<[1], [0], [0], [1], [0, 0, 1, 1], [], []>} : vector<8x4xf32>, vector<4x16xf32>, vector<8x16xf32> -> vector<8x16xf32>
    %c0_7 = arith.constant 0 : index
    %c0_8 = arith.constant 0 : index
    %10 = vector.load %arg4[%c0_7, %c0_8] : memref<8x4xf32, #tpu.memory_space<vmem>>, vector<8x4xf32>
    %11 = vector.extract_strided_slice %6 {offsets = [0, 0], sizes = [4, 16], strides = [1, 1]} : vector<4x17xf32> to vector<4x16xf32>
    %cst_9 = arith.constant dense<0.000000e+00> : vector<8x16xf32>
    %12 = tpu.matmul %10, %11, %cst_9 {dimension_numbers = #tpu.dot_dimension_numbers<[1], [0], [0], [1], [0, 0, 1, 1], [], []>} : vector<8x4xf32>, vector<4x16xf32>, vector<8x16xf32> -> vector<8x16xf32>
    %13 = arith.addf %9, %12 : vector<8x16xf32>
    %c0_10 = arith.constant 0 : index
    %c0_11 = arith.constant 0 : index
    %14 = vector.load %arg5[%c0_10, %c0_11] : memref<8x1xf32, #tpu.memory_space<vmem>>, vector<8x1xf32>
    %15 = vector.broadcast %14 : vector<8x1xf32> to vector<8x16xf32>
    %16 = arith.addf %13, %15 : vector<8x16xf32>
    %c0_12 = arith.constant 0 : index
    %c0_13 = arith.constant 0 : index
    %c0_14 = arith.constant 0 : index
    %17 = vector.load %arg6[%c0_12, %c0_13, %c0_14] : memref<1x8x16xf32, #tpu.memory_space<vmem>>, vector<1x8x16xf32>
    %18 = vector.shape_cast %17 : vector<1x8x16xf32> to vector<8x16xf32>
    %19 = vector.shape_cast %16 : vector<8x16xf32> to vector<1x8x16xf32>
    tpu.vector_store %arg6[%c0_12, %c0_13, %c0_14], %19 {strides = array<i32>} : memref<1x8x16xf32, #tpu.memory_space<vmem>>, vector<1x8x16xf32>,
    return
  }
  func.func @transform_0(%arg0: i32, %arg1: i32) -> (i32, i32, i32, i32) {
    %c0_i32 = arith.constant 0 : i32
    %c0_i32_0 = arith.constant 0 : i32
    %c0_i32_1 = arith.constant 0 : i32
    return %arg0, %arg1, %c0_i32, %c0_i32_0 : i32, i32, i32, i32
  }
  func.func @transform_1(%arg0: i32, %arg1: i32) -> (i32, i32) {
    %c0_i32 = arith.constant 0 : i32
    %c0_i32_0 = arith.constant 0 : i32
    %c0_i32_1 = arith.constant 0 : i32
    return %c0_i32, %c0_i32_0 : i32, i32
  }
  func.func @transform_2(%arg0: i32, %arg1: i32) -> (i32, i32) {
    %c0_i32 = arith.constant 0 : i32
    %c0_i32_0 = arith.constant 0 : i32
    %c0_i32_1 = arith.constant 0 : i32
    return %c0_i32, %c0_i32_0 : i32, i32
  }
  func.func @transform_3(%arg0: i32, %arg1: i32) -> (i32, i32) {
    %c0_i32 = arith.constant 0 : i32
    %c0_i32_0 = arith.constant 0 : i32
    %c0_i32_1 = arith.constant 0 : i32
    return %c0_i32, %c0_i32_0 : i32, i32
  }
  func.func @transform_4(%arg0: i32, %arg1: i32) -> (i32, i32, i32) {
    %c0_i32 = arith.constant 0 : i32
    %c0_i32_0 = arith.constant 0 : i32
    return %arg0, %c0_i32, %arg1 : i32, i32, i32
  }
}

module attributes {stable_mosaic.version = 11 : i64} {
  func.func @_kp_resblock_kernel(%arg0: i32, %arg1: i32, %arg2: memref<1x1x16x8xf32, #tpu.memory_space<vmem>>, %arg3: memref<16x48xf32, #tpu.memory_space<vmem>>, %arg4: memref<16x1xf32, #tpu.memory_space<vmem>>, %arg5: memref<16x48xf32, #tpu.memory_space<vmem>>, %arg6: memref<16x1xf32, #tpu.memory_space<vmem>>, %arg7: memref<1x16x4xf32, #tpu.memory_space<vmem>>) attributes {dimension_semantics = [#tpu.dimension_semantics<parallel>, #tpu.dimension_semantics<parallel>], iteration_bounds = array<i64: 2, 1>, scalar_prefetch = 0 : i64, scratch_operands = 0 : i64, tpu.core_type = #tpu.core_type<tc>, window_params = [{transform_indices = @transform_0, window_bounds = array<i64: 1, 1, 16, 8>}, {pipeline_mode = #tpu.pipeline_mode<synchronous>, transform_indices = @transform_1, window_bounds = array<i64: 16, 48>}, {pipeline_mode = #tpu.pipeline_mode<synchronous>, transform_indices = @transform_2, window_bounds = array<i64: 16, 1>}, {pipeline_mode = #tpu.pipeline_mode<synchronous>, transform_indices = @transform_3, window_bounds = array<i64: 16, 48>}, {pipeline_mode = #tpu.pipeline_mode<synchronous>, transform_indices = @transform_4, window_bounds = array<i64: 16, 1>}, {transform_indices = @transform_5, window_bounds = array<i64: 1, 16, 4>}]} {
    %c0 = arith.constant 0 : index
    %c0_0 = arith.constant 0 : index
    %c0_1 = arith.constant 0 : index
    %c0_2 = arith.constant 0 : index
    %0 = vector.load %arg2[%c0, %c0_0, %c0_1, %c0_2] : memref<1x1x16x8xf32, #tpu.memory_space<vmem>>, vector<1x1x16x8xf32>
    %1 = vector.shape_cast %0 : vector<1x1x16x8xf32> to vector<16x8xf32>
    %2 = vector.extract_strided_slice %1 {offsets = [0, 0], sizes = [16, 6], strides = [1, 1]} : vector<16x8xf32> to vector<16x6xf32>
    %3 = vector.extract_strided_slice %1 {offsets = [0, 1], sizes = [16, 6], strides = [1, 1]} : vector<16x8xf32> to vector<16x6xf32>
    %4 = vector.extract_strided_slice %1 {offsets = [0, 2], sizes = [16, 6], strides = [1, 1]} : vector<16x8xf32> to vector<16x6xf32>
    %5 = tpu.concatenate %2, %3, %4 in 0 : vector<16x6xf32>, vector<16x6xf32>, vector<16x6xf32> -> vector<48x6xf32>
    %c0_3 = arith.constant 0 : index
    %c0_4 = arith.constant 0 : index
    %6 = vector.load %arg3[%c0_3, %c0_4] : memref<16x48xf32, #tpu.memory_space<vmem>>, vector<16x48xf32>
    %cst = arith.constant dense<0.000000e+00> : vector<16x6xf32>
    %7 = tpu.matmul %6, %5, %cst {dimension_numbers = #tpu.dot_dimension_numbers<[1], [0], [0], [1], [0, 0, 1, 1], [], []>} : vector<16x48xf32>, vector<48x6xf32>, vector<16x6xf32> -> vector<16x6xf32>
    %c0_5 = arith.constant 0 : index
    %c0_6 = arith.constant 0 : index
    %8 = vector.load %arg4[%c0_5, %c0_6] : memref<16x1xf32, #tpu.memory_space<vmem>>, vector<16x1xf32>
    %9 = vector.broadcast %8 : vector<16x1xf32> to vector<16x6xf32>
    %10 = arith.addf %7, %9 : vector<16x6xf32>
    %cst_7 = arith.constant 0.000000e+00 : f32
    %11 = vector.broadcast %cst_7 : f32 to vector<16x6xf32>
    %12 = arith.cmpf oge, %10, %11 : vector<16x6xf32>
    %cst_8 = arith.constant 2.000000e-01 : f32
    %13 = vector.broadcast %cst_8 : f32 to vector<16x6xf32>
    %14 = arith.mulf %13, %10 : vector<16x6xf32>
    %15 = arith.select %12, %10, %14 : vector<16x6xi1>, vector<16x6xf32>
    %c4_i32 = arith.constant 4 : i32
    %16 = arith.muli %arg1, %c4_i32 : i32
    %c1_i32 = arith.constant 1 : i32
    %17 = arith.subi %16, %c1_i32 : i32
    %18 = tpu.iota {dimensions = array<i32: 1>} : vector<1x6xi32>
    %19 = vector.broadcast %17 : i32 to vector<1x6xi32>
    %20 = arith.addi %19, %18 : vector<1x6xi32>
    %c0_i32 = arith.constant 0 : i32
    %21 = vector.broadcast %c0_i32 : i32 to vector<1x6xi32>
    %22 = arith.cmpi sge, %20, %21 : vector<1x6xi32>
    %c4_i32_9 = arith.constant 4 : i32
    %23 = vector.broadcast %c4_i32_9 : i32 to vector<1x6xi32>
    %24 = arith.cmpi slt, %20, %23 : vector<1x6xi32>
    %25 = arith.andi %22, %24 : vector<1x6xi1>
    %cst_10 = arith.constant 0.000000e+00 : f32
    %26 = vector.shape_cast %25 : vector<1x6xi1> to vector<1x6xi1>
    %27 = vector.broadcast %26 : vector<1x6xi1> to vector<16x6xi1>
    %28 = vector.broadcast %cst_10 : f32 to vector<16x6xf32>
    %29 = arith.select %27, %15, %28 : vector<16x6xi1>, vector<16x6xf32>
    %30 = vector.extract_strided_slice %29 {offsets = [0, 0], sizes = [16, 4], strides = [1, 1]} : vector<16x6xf32> to vector<16x4xf32>
    %31 = vector.extract_strided_slice %29 {offsets = [0, 1], sizes = [16, 4], strides = [1, 1]} : vector<16x6xf32> to vector<16x4xf32>
    %32 = vector.extract_strided_slice %29 {offsets = [0, 2], sizes = [16, 4], strides = [1, 1]} : vector<16x6xf32> to vector<16x4xf32>
    %33 = tpu.concatenate %30, %31, %32 in 0 : vector<16x4xf32>, vector<16x4xf32>, vector<16x4xf32> -> vector<48x4xf32>
    %c0_11 = arith.constant 0 : index
    %c0_12 = arith.constant 0 : index
    %34 = vector.load %arg5[%c0_11, %c0_12] : memref<16x48xf32, #tpu.memory_space<vmem>>, vector<16x48xf32>
    %cst_13 = arith.constant dense<0.000000e+00> : vector<16x4xf32>
    %35 = tpu.matmul %34, %33, %cst_13 {dimension_numbers = #tpu.dot_dimension_numbers<[1], [0], [0], [1], [0, 0, 1, 1], [], []>} : vector<16x48xf32>, vector<48x4xf32>, vector<16x4xf32> -> vector<16x4xf32>
    %c0_14 = arith.constant 0 : index
    %c0_15 = arith.constant 0 : index
    %36 = vector.load %arg6[%c0_14, %c0_15] : memref<16x1xf32, #tpu.memory_space<vmem>>, vector<16x1xf32>
    %37 = vector.broadcast %36 : vector<16x1xf32> to vector<16x4xf32>
    %38 = arith.addf %35, %37 : vector<16x4xf32>
    %cst_16 = arith.constant 0.000000e+00 : f32
    %39 = vector.broadcast %cst_16 : f32 to vector<16x4xf32>
    %40 = arith.cmpf oge, %38, %39 : vector<16x4xf32>
    %cst_17 = arith.constant 2.000000e-01 : f32
    %41 = vector.broadcast %cst_17 : f32 to vector<16x4xf32>
    %42 = arith.mulf %41, %38 : vector<16x4xf32>
    %43 = arith.select %40, %38, %42 : vector<16x4xi1>, vector<16x4xf32>
    %44 = vector.extract_strided_slice %1 {offsets = [0, 2], sizes = [16, 4], strides = [1, 1]} : vector<16x8xf32> to vector<16x4xf32>
    %45 = arith.addf %44, %43 : vector<16x4xf32>
    %c0_18 = arith.constant 0 : index
    %c0_19 = arith.constant 0 : index
    %c0_20 = arith.constant 0 : index
    %46 = vector.load %arg7[%c0_18, %c0_19, %c0_20] : memref<1x16x4xf32, #tpu.memory_space<vmem>>, vector<1x16x4xf32>
    %47 = vector.shape_cast %46 : vector<1x16x4xf32> to vector<16x4xf32>
    %48 = vector.shape_cast %45 : vector<16x4xf32> to vector<1x16x4xf32>
    tpu.vector_store %arg7[%c0_18, %c0_19, %c0_20], %48 {strides = array<i32>} : memref<1x16x4xf32, #tpu.memory_space<vmem>>, vector<1x16x4xf32>,
    return
  }
  func.func @transform_0(%arg0: i32, %arg1: i32) -> (i32, i32, i32, i32) {
    %c0_i32 = arith.constant 0 : i32
    %c0_i32_0 = arith.constant 0 : i32
    %c0_i32_1 = arith.constant 0 : i32
    return %arg0, %arg1, %c0_i32, %c0_i32_0 : i32, i32, i32, i32
  }
  func.func @transform_1(%arg0: i32, %arg1: i32) -> (i32, i32) {
    %c0_i32 = arith.constant 0 : i32
    %c0_i32_0 = arith.constant 0 : i32
    %c0_i32_1 = arith.constant 0 : i32
    return %c0_i32, %c0_i32_0 : i32, i32
  }
  func.func @transform_2(%arg0: i32, %arg1: i32) -> (i32, i32) {
    %c0_i32 = arith.constant 0 : i32
    %c0_i32_0 = arith.constant 0 : i32
    %c0_i32_1 = arith.constant 0 : i32
    return %c0_i32, %c0_i32_0 : i32, i32
  }
  func.func @transform_3(%arg0: i32, %arg1: i32) -> (i32, i32) {
    %c0_i32 = arith.constant 0 : i32
    %c0_i32_0 = arith.constant 0 : i32
    %c0_i32_1 = arith.constant 0 : i32
    return %c0_i32, %c0_i32_0 : i32, i32
  }
  func.func @transform_4(%arg0: i32, %arg1: i32) -> (i32, i32) {
    %c0_i32 = arith.constant 0 : i32
    %c0_i32_0 = arith.constant 0 : i32
    %c0_i32_1 = arith.constant 0 : i32
    return %c0_i32, %c0_i32_0 : i32, i32
  }
  func.func @transform_5(%arg0: i32, %arg1: i32) -> (i32, i32, i32) {
    %c0_i32 = arith.constant 0 : i32
    %c0_i32_0 = arith.constant 0 : i32
    return %arg0, %c0_i32, %arg1 : i32, i32, i32
  }
}

module attributes {stable_mosaic.version = 11 : i64} {
  func.func @_conv1d_ncw_kernel(%arg0: i32, %arg1: i32, %arg2: memref<1x1x8x8xf32, #tpu.memory_space<vmem>>, %arg3: memref<16x40xf32, #tpu.memory_space<vmem>>, %arg4: memref<16x1xf32, #tpu.memory_space<vmem>>, %arg5: memref<1x16x4xf32, #tpu.memory_space<vmem>>) attributes {dimension_semantics = [#tpu.dimension_semantics<parallel>, #tpu.dimension_semantics<parallel>], iteration_bounds = array<i64: 2, 1>, scalar_prefetch = 0 : i64, scratch_operands = 0 : i64, tpu.core_type = #tpu.core_type<tc>, window_params = [{transform_indices = @transform_0, window_bounds = array<i64: 1, 1, 8, 8>}, {pipeline_mode = #tpu.pipeline_mode<synchronous>, transform_indices = @transform_1, window_bounds = array<i64: 16, 40>}, {pipeline_mode = #tpu.pipeline_mode<synchronous>, transform_indices = @transform_2, window_bounds = array<i64: 16, 1>}, {transform_indices = @transform_3, window_bounds = array<i64: 1, 16, 4>}]} {
    %c0 = arith.constant 0 : index
    %c0_0 = arith.constant 0 : index
    %c0_1 = arith.constant 0 : index
    %c0_2 = arith.constant 0 : index
    %0 = vector.load %arg2[%c0, %c0_0, %c0_1, %c0_2] : memref<1x1x8x8xf32, #tpu.memory_space<vmem>>, vector<1x1x8x8xf32>
    %1 = vector.shape_cast %0 : vector<1x1x8x8xf32> to vector<8x8xf32>
    %2 = vector.extract_strided_slice %1 {offsets = [0, 0], sizes = [8, 4], strides = [1, 1]} : vector<8x8xf32> to vector<8x4xf32>
    %3 = vector.extract_strided_slice %1 {offsets = [0, 1], sizes = [8, 4], strides = [1, 1]} : vector<8x8xf32> to vector<8x4xf32>
    %4 = vector.extract_strided_slice %1 {offsets = [0, 2], sizes = [8, 4], strides = [1, 1]} : vector<8x8xf32> to vector<8x4xf32>
    %5 = vector.extract_strided_slice %1 {offsets = [0, 3], sizes = [8, 4], strides = [1, 1]} : vector<8x8xf32> to vector<8x4xf32>
    %6 = vector.extract_strided_slice %1 {offsets = [0, 4], sizes = [8, 4], strides = [1, 1]} : vector<8x8xf32> to vector<8x4xf32>
    %7 = tpu.concatenate %2, %3, %4, %5, %6 in 0 : vector<8x4xf32>, vector<8x4xf32>, vector<8x4xf32>, vector<8x4xf32>, vector<8x4xf32> -> vector<40x4xf32>
    %c0_3 = arith.constant 0 : index
    %c0_4 = arith.constant 0 : index
    %8 = vector.load %arg3[%c0_3, %c0_4] : memref<16x40xf32, #tpu.memory_space<vmem>>, vector<16x40xf32>
    %cst = arith.constant dense<0.000000e+00> : vector<16x4xf32>
    %9 = tpu.matmul %8, %7, %cst {dimension_numbers = #tpu.dot_dimension_numbers<[1], [0], [0], [1], [0, 0, 1, 1], [], []>} : vector<16x40xf32>, vector<40x4xf32>, vector<16x4xf32> -> vector<16x4xf32>
    %c0_5 = arith.constant 0 : index
    %c0_6 = arith.constant 0 : index
    %10 = vector.load %arg4[%c0_5, %c0_6] : memref<16x1xf32, #tpu.memory_space<vmem>>, vector<16x1xf32>
    %11 = vector.broadcast %10 : vector<16x1xf32> to vector<16x4xf32>
    %12 = arith.addf %9, %11 : vector<16x4xf32>
    %cst_7 = arith.constant 0.000000e+00 : f32
    %13 = vector.broadcast %cst_7 : f32 to vector<16x4xf32>
    %14 = arith.cmpf oge, %12, %13 : vector<16x4xf32>
    %cst_8 = arith.constant 2.000000e-01 : f32
    %15 = vector.broadcast %cst_8 : f32 to vector<16x4xf32>
    %16 = arith.mulf %15, %12 : vector<16x4xf32>
    %17 = arith.select %14, %12, %16 : vector<16x4xi1>, vector<16x4xf32>
    %c0_9 = arith.constant 0 : index
    %c0_10 = arith.constant 0 : index
    %c0_11 = arith.constant 0 : index
    %18 = vector.load %arg5[%c0_9, %c0_10, %c0_11] : memref<1x16x4xf32, #tpu.memory_space<vmem>>, vector<1x16x4xf32>
    %19 = vector.shape_cast %18 : vector<1x16x4xf32> to vector<16x4xf32>
    %20 = vector.shape_cast %17 : vector<16x4xf32> to vector<1x16x4xf32>
    tpu.vector_store %arg5[%c0_9, %c0_10, %c0_11], %20 {strides = array<i32>} : memref<1x16x4xf32, #tpu.memory_space<vmem>>, vector<1x16x4xf32>,
    return
  }
  func.func @transform_0(%arg0: i32, %arg1: i32) -> (i32, i32, i32, i32) {
    %c0_i32 = arith.constant 0 : i32
    %c0_i32_0 = arith.constant 0 : i32
    %c0_i32_1 = arith.constant 0 : i32
    return %arg0, %arg1, %c0_i32, %c0_i32_0 : i32, i32, i32, i32
  }
  func.func @transform_1(%arg0: i32, %arg1: i32) -> (i32, i32) {
    %c0_i32 = arith.constant 0 : i32
    %c0_i32_0 = arith.constant 0 : i32
    %c0_i32_1 = arith.constant 0 : i32
    return %c0_i32, %c0_i32_0 : i32, i32
  }
  func.func @transform_2(%arg0: i32, %arg1: i32) -> (i32, i32) {
    %c0_i32 = arith.constant 0 : i32
    %c0_i32_0 = arith.constant 0 : i32
    %c0_i32_1 = arith.constant 0 : i32
    return %c0_i32, %c0_i32_0 : i32, i32
  }
  func.func @transform_3(%arg0: i32, %arg1: i32) -> (i32, i32, i32) {
    %c0_i32 = arith.constant 0 : i32
    %c0_i32_0 = arith.constant 0 : i32
    return %arg0, %c0_i32, %arg1 : i32, i32, i32
  }
}

module attributes {stable_mosaic.version = 11 : i64} {
  func.func @_conv1d_nwc_kernel(%arg0: i32, %arg1: i32, %arg2: memref<1x6x16xf32, #tpu.memory_space<vmem>>, %arg3: memref<48x208xf32, #tpu.memory_space<vmem>>, %arg4: memref<1x208xf32, #tpu.memory_space<vmem>>, %arg5: memref<1x4x208xf32, #tpu.memory_space<vmem>>) attributes {dimension_semantics = [#tpu.dimension_semantics<parallel>, #tpu.dimension_semantics<parallel>], iteration_bounds = array<i64: 1, 2>, scalar_prefetch = 0 : i64, scratch_operands = 0 : i64, tpu.core_type = #tpu.core_type<tc>, window_params = [{transform_indices = @transform_0, window_bounds = array<i64: 1, 6, 16>}, {transform_indices = @transform_1, window_bounds = array<i64: 48, 208>}, {transform_indices = @transform_2, window_bounds = array<i64: 1, 208>}, {transform_indices = @transform_3, window_bounds = array<i64: 1, 4, 208>}]} {
    %c0 = arith.constant 0 : index
    %c0_0 = arith.constant 0 : index
    %c0_1 = arith.constant 0 : index
    %0 = vector.load %arg2[%c0, %c0_0, %c0_1] : memref<1x6x16xf32, #tpu.memory_space<vmem>>, vector<1x6x16xf32>
    %1 = vector.shape_cast %0 : vector<1x6x16xf32> to vector<6x16xf32>
    %2 = vector.extract_strided_slice %1 {offsets = [0, 0], sizes = [4, 16], strides = [1, 1]} : vector<6x16xf32> to vector<4x16xf32>
    %3 = vector.extract_strided_slice %1 {offsets = [1, 0], sizes = [4, 16], strides = [1, 1]} : vector<6x16xf32> to vector<4x16xf32>
    %4 = vector.extract_strided_slice %1 {offsets = [2, 0], sizes = [4, 16], strides = [1, 1]} : vector<6x16xf32> to vector<4x16xf32>
    %5 = tpu.concatenate %2, %3, %4 in 1 : vector<4x16xf32>, vector<4x16xf32>, vector<4x16xf32> -> vector<4x48xf32>
    %c0_2 = arith.constant 0 : index
    %c0_3 = arith.constant 0 : index
    %6 = vector.load %arg3[%c0_2, %c0_3] : memref<48x208xf32, #tpu.memory_space<vmem>>, vector<48x208xf32>
    %cst = arith.constant dense<0.000000e+00> : vector<4x208xf32>
    %7 = tpu.matmul %5, %6, %cst {dimension_numbers = #tpu.dot_dimension_numbers<[1], [0], [0], [1], [0, 0, 1, 1], [], []>} : vector<4x48xf32>, vector<48x208xf32>, vector<4x208xf32> -> vector<4x208xf32>
    %c0_4 = arith.constant 0 : index
    %c0_5 = arith.constant 0 : index
    %8 = vector.load %arg4[%c0_4, %c0_5] : memref<1x208xf32, #tpu.memory_space<vmem>>, vector<1x208xf32>
    %9 = vector.broadcast %8 : vector<1x208xf32> to vector<4x208xf32>
    %10 = arith.addf %7, %9 : vector<4x208xf32>
    %c0_6 = arith.constant 0 : index
    %c0_7 = arith.constant 0 : index
    %c0_8 = arith.constant 0 : index
    %11 = vector.load %arg5[%c0_6, %c0_7, %c0_8] : memref<1x4x208xf32, #tpu.memory_space<vmem>>, vector<1x4x208xf32>
    %12 = vector.shape_cast %11 : vector<1x4x208xf32> to vector<4x208xf32>
    %13 = vector.shape_cast %10 : vector<4x208xf32> to vector<1x4x208xf32>
    tpu.vector_store %arg5[%c0_6, %c0_7, %c0_8], %13 {strides = array<i32>} : memref<1x4x208xf32, #tpu.memory_space<vmem>>, vector<1x4x208xf32>,
    return
  }
  func.func @transform_0(%arg0: i32, %arg1: i32) -> (i32, i32, i32) {
    %c0_i32 = arith.constant 0 : i32
    %c0_i32_0 = arith.constant 0 : i32
    %c0_i32_1 = arith.constant 0 : i32
    return %arg1, %c0_i32, %c0_i32_0 : i32, i32, i32
  }
  func.func @transform_1(%arg0: i32, %arg1: i32) -> (i32, i32) {
    %c0_i32 = arith.constant 0 : i32
    %c0_i32_0 = arith.constant 0 : i32
    return %c0_i32, %arg0 : i32, i32
  }
  func.func @transform_2(%arg0: i32, %arg1: i32) -> (i32, i32) {
    %c0_i32 = arith.constant 0 : i32
    %c0_i32_0 = arith.constant 0 : i32
    return %c0_i32, %arg0 : i32, i32
  }
  func.func @transform_3(%arg0: i32, %arg1: i32) -> (i32, i32, i32) {
    %c0_i32 = arith.constant 0 : i32
    %c0_i32_0 = arith.constant 0 : i32
    return %arg1, %c0_i32, %arg0 : i32, i32, i32
  }
}

module attributes {stable_mosaic.version = 11 : i64} {
  func.func @_conv_lvc_gate_kernel(%arg0: i32, %arg1: i32, %arg2: memref<1x1x4x36xf32, #tpu.memory_space<vmem>>, %arg3: memref<4x12xf32, #tpu.memory_space<vmem>>, %arg4: memref<4x1xf32, #tpu.memory_space<vmem>>, %arg5: memref<1x4x8x12xf32, #tpu.memory_space<vmem>>, %arg6: memref<1x4x8x1xf32, #tpu.memory_space<vmem>>, %arg7: memref<1x4x32xf32, #tpu.memory_space<vmem>>) attributes {dimension_semantics = [#tpu.dimension_semantics<parallel>, #tpu.dimension_semantics<parallel>], iteration_bounds = array<i64: 2, 1>, scalar_prefetch = 0 : i64, scratch_operands = 0 : i64, tpu.core_type = #tpu.core_type<tc>, window_params = [{transform_indices = @transform_0, window_bounds = array<i64: 1, 1, 4, 36>}, {pipeline_mode = #tpu.pipeline_mode<synchronous>, transform_indices = @transform_1, window_bounds = array<i64: 4, 12>}, {pipeline_mode = #tpu.pipeline_mode<synchronous>, transform_indices = @transform_2, window_bounds = array<i64: 4, 1>}, {transform_indices = @transform_3, window_bounds = array<i64: 1, 4, 8, 12>}, {transform_indices = @transform_4, window_bounds = array<i64: 1, 4, 8, 1>}, {transform_indices = @transform_5, window_bounds = array<i64: 1, 4, 32>}]} {
    %c0 = arith.constant 0 : index
    %c0_0 = arith.constant 0 : index
    %c0_1 = arith.constant 0 : index
    %c0_2 = arith.constant 0 : index
    %0 = vector.load %arg2[%c0, %c0_0, %c0_1, %c0_2] : memref<1x1x4x36xf32, #tpu.memory_space<vmem>>, vector<1x1x4x36xf32>
    %1 = vector.shape_cast %0 : vector<1x1x4x36xf32> to vector<4x36xf32>
    %cst = arith.constant 0.000000e+00 : f32
    %2 = vector.broadcast %cst : f32 to vector<4x36xf32>
    %3 = arith.cmpf oge, %1, %2 : vector<4x36xf32>
    %cst_3 = arith.constant 2.000000e-01 : f32
    %4 = vector.broadcast %cst_3 : f32 to vector<4x36xf32>
    %5 = arith.mulf %4, %1 : vector<4x36xf32>
    %6 = arith.select %3, %1, %5 : vector<4x36xi1>, vector<4x36xf32>
    %7 = vector.extract_strided_slice %6 {offsets = [0, 0], sizes = [4, 34], strides = [1, 1]} : vector<4x36xf32> to vector<4x34xf32>
    %8 = vector.extract_strided_slice %6 {offsets = [0, 1], sizes = [4, 34], strides = [1, 1]} : vector<4x36xf32> to vector<4x34xf32>
    %9 = vector.extract_strided_slice %6 {offsets = [0, 2], sizes = [4, 34], strides = [1, 1]} : vector<4x36xf32> to vector<4x34xf32>
    %10 = tpu.concatenate %7, %8, %9 in 0 : vector<4x34xf32>, vector<4x34xf32>, vector<4x34xf32> -> vector<12x34xf32>
    %c0_4 = arith.constant 0 : index
    %c0_5 = arith.constant 0 : index
    %11 = vector.load %arg3[%c0_4, %c0_5] : memref<4x12xf32, #tpu.memory_space<vmem>>, vector<4x12xf32>
    %cst_6 = arith.constant dense<0.000000e+00> : vector<4x34xf32>
    %12 = tpu.matmul %11, %10, %cst_6 {dimension_numbers = #tpu.dot_dimension_numbers<[1], [0], [0], [1], [0, 0, 1, 1], [], []>} : vector<4x12xf32>, vector<12x34xf32>, vector<4x34xf32> -> vector<4x34xf32>
    %c0_7 = arith.constant 0 : index
    %c0_8 = arith.constant 0 : index
    %13 = vector.load %arg4[%c0_7, %c0_8] : memref<4x1xf32, #tpu.memory_space<vmem>>, vector<4x1xf32>
    %14 = vector.broadcast %13 : vector<4x1xf32> to vector<4x34xf32>
    %15 = arith.addf %12, %14 : vector<4x34xf32>
    %cst_9 = arith.constant 0.000000e+00 : f32
    %16 = vector.broadcast %cst_9 : f32 to vector<4x34xf32>
    %17 = arith.cmpf oge, %15, %16 : vector<4x34xf32>
    %cst_10 = arith.constant 2.000000e-01 : f32
    %18 = vector.broadcast %cst_10 : f32 to vector<4x34xf32>
    %19 = arith.mulf %18, %15 : vector<4x34xf32>
    %20 = arith.select %17, %15, %19 : vector<4x34xi1>, vector<4x34xf32>
    %c32_i32 = arith.constant 32 : i32
    %21 = arith.muli %arg1, %c32_i32 : i32
    %c1_i32 = arith.constant 1 : i32
    %22 = arith.subi %21, %c1_i32 : i32
    %23 = tpu.iota {dimensions = array<i32: 1>} : vector<1x34xi32>
    %24 = vector.broadcast %22 : i32 to vector<1x34xi32>
    %25 = arith.addi %24, %23 : vector<1x34xi32>
    %c0_i32 = arith.constant 0 : i32
    %26 = vector.broadcast %c0_i32 : i32 to vector<1x34xi32>
    %27 = arith.cmpi sge, %25, %26 : vector<1x34xi32>
    %c32_i32_11 = arith.constant 32 : i32
    %28 = vector.broadcast %c32_i32_11 : i32 to vector<1x34xi32>
    %29 = arith.cmpi slt, %25, %28 : vector<1x34xi32>
    %30 = arith.andi %27, %29 : vector<1x34xi1>
    %cst_12 = arith.constant 0.000000e+00 : f32
    %31 = vector.shape_cast %30 : vector<1x34xi1> to vector<1x34xi1>
    %32 = vector.broadcast %31 : vector<1x34xi1> to vector<4x34xi1>
    %33 = vector.broadcast %cst_12 : f32 to vector<4x34xf32>
    %34 = arith.select %32, %20, %33 : vector<4x34xi1>, vector<4x34xf32>
    %35 = vector.extract_strided_slice %34 {offsets = [0, 0], sizes = [4, 8], strides = [1, 1]} : vector<4x34xf32> to vector<4x8xf32>
    %36 = vector.extract_strided_slice %34 {offsets = [0, 1], sizes = [4, 8], strides = [1, 1]} : vector<4x34xf32> to vector<4x8xf32>
    %37 = vector.extract_strided_slice %34 {offsets = [0, 2], sizes = [4, 8], strides = [1, 1]} : vector<4x34xf32> to vector<4x8xf32>
    %38 = tpu.concatenate %35, %36, %37 in 0 : vector<4x8xf32>, vector<4x8xf32>, vector<4x8xf32> -> vector<12x8xf32>
    %c0_13 = arith.constant 0 : index
    %c0_14 = arith.constant 0 : index
    %c0_15 = arith.constant 0 : index
    %c0_16 = arith.constant 0 : index
    %39 = vector.load %arg5[%c0_13, %c0_14, %c0_15, %c0_16] : memref<1x4x8x12xf32, #tpu.memory_space<vmem>>, vector<1x1x8x12xf32>
    %40 = vector.shape_cast %39 : vector<1x1x8x12xf32> to vector<8x12xf32>
    %cst_17 = arith.constant dense<0.000000e+00> : vector<8x8xf32>
    %41 = tpu.matmul %40, %38, %cst_17 {dimension_numbers = #tpu.dot_dimension_numbers<[1], [0], [0], [1], [0, 0, 1, 1], [], []>} : vector<8x12xf32>, vector<12x8xf32>, vector<8x8xf32> -> vector<8x8xf32>
    %c0_18 = arith.constant 0 : index
    %c0_19 = arith.constant 0 : index
    %c0_20 = arith.constant 0 : index
    %c0_21 = arith.constant 0 : index
    %42 = vector.load %arg6[%c0_18, %c0_19, %c0_20, %c0_21] : memref<1x4x8x1xf32, #tpu.memory_space<vmem>>, vector<1x1x8x1xf32>
    %43 = vector.shape_cast %42 : vector<1x1x8x1xf32> to vector<8x1xf32>
    %44 = vector.broadcast %43 : vector<8x1xf32> to vector<8x8xf32>
    %45 = arith.addf %41, %44 : vector<8x8xf32>
    %46 = vector.extract_strided_slice %34 {offsets = [0, 8], sizes = [4, 8], strides = [1, 1]} : vector<4x34xf32> to vector<4x8xf32>
    %47 = vector.extract_strided_slice %34 {offsets = [0, 9], sizes = [4, 8], strides = [1, 1]} : vector<4x34xf32> to vector<4x8xf32>
    %48 = vector.extract_strided_slice %34 {offsets = [0, 10], sizes = [4, 8], strides = [1, 1]} : vector<4x34xf32> to vector<4x8xf32>
    %49 = tpu.concatenate %46, %47, %48 in 0 : vector<4x8xf32>, vector<4x8xf32>, vector<4x8xf32> -> vector<12x8xf32>
    %c0_22 = arith.constant 0 : index
    %c1 = arith.constant 1 : index
    %c0_23 = arith.constant 0 : index
    %c0_24 = arith.constant 0 : index
    %50 = vector.load %arg5[%c0_22, %c1, %c0_23, %c0_24] : memref<1x4x8x12xf32, #tpu.memory_space<vmem>>, vector<1x1x8x12xf32>
    %51 = vector.shape_cast %50 : vector<1x1x8x12xf32> to vector<8x12xf32>
    %cst_25 = arith.constant dense<0.000000e+00> : vector<8x8xf32>
    %52 = tpu.matmul %51, %49, %cst_25 {dimension_numbers = #tpu.dot_dimension_numbers<[1], [0], [0], [1], [0, 0, 1, 1], [], []>} : vector<8x12xf32>, vector<12x8xf32>, vector<8x8xf32> -> vector<8x8xf32>
    %c0_26 = arith.constant 0 : index
    %c1_27 = arith.constant 1 : index
    %c0_28 = arith.constant 0 : index
    %c0_29 = arith.constant 0 : index
    %53 = vector.load %arg6[%c0_26, %c1_27, %c0_28, %c0_29] : memref<1x4x8x1xf32, #tpu.memory_space<vmem>>, vector<1x1x8x1xf32>
    %54 = vector.shape_cast %53 : vector<1x1x8x1xf32> to vector<8x1xf32>
    %55 = vector.broadcast %54 : vector<8x1xf32> to vector<8x8xf32>
    %56 = arith.addf %52, %55 : vector<8x8xf32>
    %57 = vector.extract_strided_slice %34 {offsets = [0, 16], sizes = [4, 8], strides = [1, 1]} : vector<4x34xf32> to vector<4x8xf32>
    %58 = vector.extract_strided_slice %34 {offsets = [0, 17], sizes = [4, 8], strides = [1, 1]} : vector<4x34xf32> to vector<4x8xf32>
    %59 = vector.extract_strided_slice %34 {offsets = [0, 18], sizes = [4, 8], strides = [1, 1]} : vector<4x34xf32> to vector<4x8xf32>
    %60 = tpu.concatenate %57, %58, %59 in 0 : vector<4x8xf32>, vector<4x8xf32>, vector<4x8xf32> -> vector<12x8xf32>
    %c0_30 = arith.constant 0 : index
    %c2 = arith.constant 2 : index
    %c0_31 = arith.constant 0 : index
    %c0_32 = arith.constant 0 : index
    %61 = vector.load %arg5[%c0_30, %c2, %c0_31, %c0_32] : memref<1x4x8x12xf32, #tpu.memory_space<vmem>>, vector<1x1x8x12xf32>
    %62 = vector.shape_cast %61 : vector<1x1x8x12xf32> to vector<8x12xf32>
    %cst_33 = arith.constant dense<0.000000e+00> : vector<8x8xf32>
    %63 = tpu.matmul %62, %60, %cst_33 {dimension_numbers = #tpu.dot_dimension_numbers<[1], [0], [0], [1], [0, 0, 1, 1], [], []>} : vector<8x12xf32>, vector<12x8xf32>, vector<8x8xf32> -> vector<8x8xf32>
    %c0_34 = arith.constant 0 : index
    %c2_35 = arith.constant 2 : index
    %c0_36 = arith.constant 0 : index
    %c0_37 = arith.constant 0 : index
    %64 = vector.load %arg6[%c0_34, %c2_35, %c0_36, %c0_37] : memref<1x4x8x1xf32, #tpu.memory_space<vmem>>, vector<1x1x8x1xf32>
    %65 = vector.shape_cast %64 : vector<1x1x8x1xf32> to vector<8x1xf32>
    %66 = vector.broadcast %65 : vector<8x1xf32> to vector<8x8xf32>
    %67 = arith.addf %63, %66 : vector<8x8xf32>
    %68 = vector.extract_strided_slice %34 {offsets = [0, 24], sizes = [4, 8], strides = [1, 1]} : vector<4x34xf32> to vector<4x8xf32>
    %69 = vector.extract_strided_slice %34 {offsets = [0, 25], sizes = [4, 8], strides = [1, 1]} : vector<4x34xf32> to vector<4x8xf32>
    %70 = vector.extract_strided_slice %34 {offsets = [0, 26], sizes = [4, 8], strides = [1, 1]} : vector<4x34xf32> to vector<4x8xf32>
    %71 = tpu.concatenate %68, %69, %70 in 0 : vector<4x8xf32>, vector<4x8xf32>, vector<4x8xf32> -> vector<12x8xf32>
    %c0_38 = arith.constant 0 : index
    %c3 = arith.constant 3 : index
    %c0_39 = arith.constant 0 : index
    %c0_40 = arith.constant 0 : index
    %72 = vector.load %arg5[%c0_38, %c3, %c0_39, %c0_40] : memref<1x4x8x12xf32, #tpu.memory_space<vmem>>, vector<1x1x8x12xf32>
    %73 = vector.shape_cast %72 : vector<1x1x8x12xf32> to vector<8x12xf32>
    %cst_41 = arith.constant dense<0.000000e+00> : vector<8x8xf32>
    %74 = tpu.matmul %73, %71, %cst_41 {dimension_numbers = #tpu.dot_dimension_numbers<[1], [0], [0], [1], [0, 0, 1, 1], [], []>} : vector<8x12xf32>, vector<12x8xf32>, vector<8x8xf32> -> vector<8x8xf32>
    %c0_42 = arith.constant 0 : index
    %c3_43 = arith.constant 3 : index
    %c0_44 = arith.constant 0 : index
    %c0_45 = arith.constant 0 : index
    %75 = vector.load %arg6[%c0_42, %c3_43, %c0_44, %c0_45] : memref<1x4x8x1xf32, #tpu.memory_space<vmem>>, vector<1x1x8x1xf32>
    %76 = vector.shape_cast %75 : vector<1x1x8x1xf32> to vector<8x1xf32>
    %77 = vector.broadcast %76 : vector<8x1xf32> to vector<8x8xf32>
    %78 = arith.addf %74, %77 : vector<8x8xf32>
    %79 = tpu.concatenate %45, %56, %67, %78 in 1 : vector<8x8xf32>, vector<8x8xf32>, vector<8x8xf32>, vector<8x8xf32> -> vector<8x32xf32>
    %80 = vector.extract_strided_slice %79 {offsets = [0, 0], sizes = [4, 32], strides = [1, 1]} : vector<8x32xf32> to vector<4x32xf32>
    %81 = arith.negf %80 : vector<4x32xf32>
    %82 = math.exp %81 : vector<4x32xf32>
    %cst_46 = arith.constant 1.000000e+00 : f32
    %83 = vector.broadcast %cst_46 : f32 to vector<4x32xf32>
    %84 = arith.addf %83, %82 : vector<4x32xf32>
    %85 = arith.divf %83, %84 : vector<4x32xf32>
    %86 = vector.extract_strided_slice %79 {offsets = [4, 0], sizes = [4, 32], strides = [1, 1]} : vector<8x32xf32> to vector<4x32xf32>
    %87 = math.tanh %86 : vector<4x32xf32>
    %88 = arith.mulf %85, %87 : vector<4x32xf32>
    %89 = vector.extract_strided_slice %1 {offsets = [0, 2], sizes = [4, 32], strides = [1, 1]} : vector<4x36xf32> to vector<4x32xf32>
    %90 = arith.addf %89, %88 : vector<4x32xf32>
    %c0_47 = arith.constant 0 : index
    %c0_48 = arith.constant 0 : index
    %c0_49 = arith.constant 0 : index
    %91 = vector.load %arg7[%c0_47, %c0_48, %c0_49] : memref<1x4x32xf32, #tpu.memory_space<vmem>>, vector<1x4x32xf32>
    %92 = vector.shape_cast %91 : vector<1x4x32xf32> to vector<4x32xf32>
    %93 = vector.shape_cast %90 : vector<4x32xf32> to vector<1x4x32xf32>
    tpu.vector_store %arg7[%c0_47, %c0_48, %c0_49], %93 {strides = array<i32>} : memref<1x4x32xf32, #tpu.memory_space<vmem>>, vector<1x4x32xf32>,
    return
  }
  func.func @transform_0(%arg0: i32, %arg1: i32) -> (i32, i32, i32, i32) {
    %c0_i32 = arith.constant 0 : i32
    %c0_i32_0 = arith.constant 0 : i32
    %c0_i32_1 = arith.constant 0 : i32
    return %arg0, %arg1, %c0_i32, %c0_i32_0 : i32, i32, i32, i32
  }
  func.func @transform_1(%arg0: i32, %arg1: i32) -> (i32, i32) {
    %c0_i32 = arith.constant 0 : i32
    %c0_i32_0 = arith.constant 0 : i32
    %c0_i32_1 = arith.constant 0 : i32
    return %c0_i32, %c0_i32_0 : i32, i32
  }
  func.func @transform_2(%arg0: i32, %arg1: i32) -> (i32, i32) {
    %c0_i32 = arith.constant 0 : i32
    %c0_i32_0 = arith.constant 0 : i32
    %c0_i32_1 = arith.constant 0 : i32
    return %c0_i32, %c0_i32_0 : i32, i32
  }
  func.func @transform_3(%arg0: i32, %arg1: i32) -> (i32, i32, i32, i32) {
    %c0_i32 = arith.constant 0 : i32
    %c0_i32_0 = arith.constant 0 : i32
    %c0_i32_1 = arith.constant 0 : i32
    return %arg0, %arg1, %c0_i32, %c0_i32_0 : i32, i32, i32, i32
  }
  func.func @transform_4(%arg0: i32, %arg1: i32) -> (i32, i32, i32, i32) {
    %c0_i32 = arith.constant 0 : i32
    %c0_i32_0 = arith.constant 0 : i32
    %c0_i32_1 = arith.constant 0 : i32
    return %arg0, %arg1, %c0_i32, %c0_i32_0 : i32, i32, i32, i32
  }
  func.func @transform_5(%arg0: i32, %arg1: i32) -> (i32, i32, i32) {
    %c0_i32 = arith.constant 0 : i32
    %c0_i32_0 = arith.constant 0 : i32
    return %arg0, %c0_i32, %arg1 : i32, i32, i32
  }
}

module attributes {stable_mosaic.version = 11 : i64} {
  func.func @_conv_lvc_gate_kernel(%arg0: i32, %arg1: i32, %arg2: memref<1x1x4x40xf32, #tpu.memory_space<vmem>>, %arg3: memref<4x12xf32, #tpu.memory_space<vmem>>, %arg4: memref<4x1xf32, #tpu.memory_space<vmem>>, %arg5: memref<1x4x8x12xf32, #tpu.memory_space<vmem>>, %arg6: memref<1x4x8x1xf32, #tpu.memory_space<vmem>>, %arg7: memref<1x4x32xf32, #tpu.memory_space<vmem>>) attributes {dimension_semantics = [#tpu.dimension_semantics<parallel>, #tpu.dimension_semantics<parallel>], iteration_bounds = array<i64: 2, 1>, scalar_prefetch = 0 : i64, scratch_operands = 0 : i64, tpu.core_type = #tpu.core_type<tc>, window_params = [{transform_indices = @transform_0, window_bounds = array<i64: 1, 1, 4, 40>}, {pipeline_mode = #tpu.pipeline_mode<synchronous>, transform_indices = @transform_1, window_bounds = array<i64: 4, 12>}, {pipeline_mode = #tpu.pipeline_mode<synchronous>, transform_indices = @transform_2, window_bounds = array<i64: 4, 1>}, {transform_indices = @transform_3, window_bounds = array<i64: 1, 4, 8, 12>}, {transform_indices = @transform_4, window_bounds = array<i64: 1, 4, 8, 1>}, {transform_indices = @transform_5, window_bounds = array<i64: 1, 4, 32>}]} {
    %c0 = arith.constant 0 : index
    %c0_0 = arith.constant 0 : index
    %c0_1 = arith.constant 0 : index
    %c0_2 = arith.constant 0 : index
    %0 = vector.load %arg2[%c0, %c0_0, %c0_1, %c0_2] : memref<1x1x4x40xf32, #tpu.memory_space<vmem>>, vector<1x1x4x40xf32>
    %1 = vector.shape_cast %0 : vector<1x1x4x40xf32> to vector<4x40xf32>
    %cst = arith.constant 0.000000e+00 : f32
    %2 = vector.broadcast %cst : f32 to vector<4x40xf32>
    %3 = arith.cmpf oge, %1, %2 : vector<4x40xf32>
    %cst_3 = arith.constant 2.000000e-01 : f32
    %4 = vector.broadcast %cst_3 : f32 to vector<4x40xf32>
    %5 = arith.mulf %4, %1 : vector<4x40xf32>
    %6 = arith.select %3, %1, %5 : vector<4x40xi1>, vector<4x40xf32>
    %7 = vector.extract_strided_slice %6 {offsets = [0, 0], sizes = [4, 34], strides = [1, 1]} : vector<4x40xf32> to vector<4x34xf32>
    %8 = vector.extract_strided_slice %6 {offsets = [0, 3], sizes = [4, 34], strides = [1, 1]} : vector<4x40xf32> to vector<4x34xf32>
    %9 = vector.extract_strided_slice %6 {offsets = [0, 6], sizes = [4, 34], strides = [1, 1]} : vector<4x40xf32> to vector<4x34xf32>
    %10 = tpu.concatenate %7, %8, %9 in 0 : vector<4x34xf32>, vector<4x34xf32>, vector<4x34xf32> -> vector<12x34xf32>
    %c0_4 = arith.constant 0 : index
    %c0_5 = arith.constant 0 : index
    %11 = vector.load %arg3[%c0_4, %c0_5] : memref<4x12xf32, #tpu.memory_space<vmem>>, vector<4x12xf32>
    %cst_6 = arith.constant dense<0.000000e+00> : vector<4x34xf32>
    %12 = tpu.matmul %11, %10, %cst_6 {dimension_numbers = #tpu.dot_dimension_numbers<[1], [0], [0], [1], [0, 0, 1, 1], [], []>} : vector<4x12xf32>, vector<12x34xf32>, vector<4x34xf32> -> vector<4x34xf32>
    %c0_7 = arith.constant 0 : index
    %c0_8 = arith.constant 0 : index
    %13 = vector.load %arg4[%c0_7, %c0_8] : memref<4x1xf32, #tpu.memory_space<vmem>>, vector<4x1xf32>
    %14 = vector.broadcast %13 : vector<4x1xf32> to vector<4x34xf32>
    %15 = arith.addf %12, %14 : vector<4x34xf32>
    %cst_9 = arith.constant 0.000000e+00 : f32
    %16 = vector.broadcast %cst_9 : f32 to vector<4x34xf32>
    %17 = arith.cmpf oge, %15, %16 : vector<4x34xf32>
    %cst_10 = arith.constant 2.000000e-01 : f32
    %18 = vector.broadcast %cst_10 : f32 to vector<4x34xf32>
    %19 = arith.mulf %18, %15 : vector<4x34xf32>
    %20 = arith.select %17, %15, %19 : vector<4x34xi1>, vector<4x34xf32>
    %c32_i32 = arith.constant 32 : i32
    %21 = arith.muli %arg1, %c32_i32 : i32
    %c1_i32 = arith.constant 1 : i32
    %22 = arith.subi %21, %c1_i32 : i32
    %23 = tpu.iota {dimensions = array<i32: 1>} : vector<1x34xi32>
    %24 = vector.broadcast %22 : i32 to vector<1x34xi32>
    %25 = arith.addi %24, %23 : vector<1x34xi32>
    %c0_i32 = arith.constant 0 : i32
    %26 = vector.broadcast %c0_i32 : i32 to vector<1x34xi32>
    %27 = arith.cmpi sge, %25, %26 : vector<1x34xi32>
    %c32_i32_11 = arith.constant 32 : i32
    %28 = vector.broadcast %c32_i32_11 : i32 to vector<1x34xi32>
    %29 = arith.cmpi slt, %25, %28 : vector<1x34xi32>
    %30 = arith.andi %27, %29 : vector<1x34xi1>
    %cst_12 = arith.constant 0.000000e+00 : f32
    %31 = vector.shape_cast %30 : vector<1x34xi1> to vector<1x34xi1>
    %32 = vector.broadcast %31 : vector<1x34xi1> to vector<4x34xi1>
    %33 = vector.broadcast %cst_12 : f32 to vector<4x34xf32>
    %34 = arith.select %32, %20, %33 : vector<4x34xi1>, vector<4x34xf32>
    %35 = vector.extract_strided_slice %34 {offsets = [0, 0], sizes = [4, 8], strides = [1, 1]} : vector<4x34xf32> to vector<4x8xf32>
    %36 = vector.extract_strided_slice %34 {offsets = [0, 1], sizes = [4, 8], strides = [1, 1]} : vector<4x34xf32> to vector<4x8xf32>
    %37 = vector.extract_strided_slice %34 {offsets = [0, 2], sizes = [4, 8], strides = [1, 1]} : vector<4x34xf32> to vector<4x8xf32>
    %38 = tpu.concatenate %35, %36, %37 in 0 : vector<4x8xf32>, vector<4x8xf32>, vector<4x8xf32> -> vector<12x8xf32>
    %c0_13 = arith.constant 0 : index
    %c0_14 = arith.constant 0 : index
    %c0_15 = arith.constant 0 : index
    %c0_16 = arith.constant 0 : index
    %39 = vector.load %arg5[%c0_13, %c0_14, %c0_15, %c0_16] : memref<1x4x8x12xf32, #tpu.memory_space<vmem>>, vector<1x1x8x12xf32>
    %40 = vector.shape_cast %39 : vector<1x1x8x12xf32> to vector<8x12xf32>
    %cst_17 = arith.constant dense<0.000000e+00> : vector<8x8xf32>
    %41 = tpu.matmul %40, %38, %cst_17 {dimension_numbers = #tpu.dot_dimension_numbers<[1], [0], [0], [1], [0, 0, 1, 1], [], []>} : vector<8x12xf32>, vector<12x8xf32>, vector<8x8xf32> -> vector<8x8xf32>
    %c0_18 = arith.constant 0 : index
    %c0_19 = arith.constant 0 : index
    %c0_20 = arith.constant 0 : index
    %c0_21 = arith.constant 0 : index
    %42 = vector.load %arg6[%c0_18, %c0_19, %c0_20, %c0_21] : memref<1x4x8x1xf32, #tpu.memory_space<vmem>>, vector<1x1x8x1xf32>
    %43 = vector.shape_cast %42 : vector<1x1x8x1xf32> to vector<8x1xf32>
    %44 = vector.broadcast %43 : vector<8x1xf32> to vector<8x8xf32>
    %45 = arith.addf %41, %44 : vector<8x8xf32>
    %46 = vector.extract_strided_slice %34 {offsets = [0, 8], sizes = [4, 8], strides = [1, 1]} : vector<4x34xf32> to vector<4x8xf32>
    %47 = vector.extract_strided_slice %34 {offsets = [0, 9], sizes = [4, 8], strides = [1, 1]} : vector<4x34xf32> to vector<4x8xf32>
    %48 = vector.extract_strided_slice %34 {offsets = [0, 10], sizes = [4, 8], strides = [1, 1]} : vector<4x34xf32> to vector<4x8xf32>
    %49 = tpu.concatenate %46, %47, %48 in 0 : vector<4x8xf32>, vector<4x8xf32>, vector<4x8xf32> -> vector<12x8xf32>
    %c0_22 = arith.constant 0 : index
    %c1 = arith.constant 1 : index
    %c0_23 = arith.constant 0 : index
    %c0_24 = arith.constant 0 : index
    %50 = vector.load %arg5[%c0_22, %c1, %c0_23, %c0_24] : memref<1x4x8x12xf32, #tpu.memory_space<vmem>>, vector<1x1x8x12xf32>
    %51 = vector.shape_cast %50 : vector<1x1x8x12xf32> to vector<8x12xf32>
    %cst_25 = arith.constant dense<0.000000e+00> : vector<8x8xf32>
    %52 = tpu.matmul %51, %49, %cst_25 {dimension_numbers = #tpu.dot_dimension_numbers<[1], [0], [0], [1], [0, 0, 1, 1], [], []>} : vector<8x12xf32>, vector<12x8xf32>, vector<8x8xf32> -> vector<8x8xf32>
    %c0_26 = arith.constant 0 : index
    %c1_27 = arith.constant 1 : index
    %c0_28 = arith.constant 0 : index
    %c0_29 = arith.constant 0 : index
    %53 = vector.load %arg6[%c0_26, %c1_27, %c0_28, %c0_29] : memref<1x4x8x1xf32, #tpu.memory_space<vmem>>, vector<1x1x8x1xf32>
    %54 = vector.shape_cast %53 : vector<1x1x8x1xf32> to vector<8x1xf32>
    %55 = vector.broadcast %54 : vector<8x1xf32> to vector<8x8xf32>
    %56 = arith.addf %52, %55 : vector<8x8xf32>
    %57 = vector.extract_strided_slice %34 {offsets = [0, 16], sizes = [4, 8], strides = [1, 1]} : vector<4x34xf32> to vector<4x8xf32>
    %58 = vector.extract_strided_slice %34 {offsets = [0, 17], sizes = [4, 8], strides = [1, 1]} : vector<4x34xf32> to vector<4x8xf32>
    %59 = vector.extract_strided_slice %34 {offsets = [0, 18], sizes = [4, 8], strides = [1, 1]} : vector<4x34xf32> to vector<4x8xf32>
    %60 = tpu.concatenate %57, %58, %59 in 0 : vector<4x8xf32>, vector<4x8xf32>, vector<4x8xf32> -> vector<12x8xf32>
    %c0_30 = arith.constant 0 : index
    %c2 = arith.constant 2 : index
    %c0_31 = arith.constant 0 : index
    %c0_32 = arith.constant 0 : index
    %61 = vector.load %arg5[%c0_30, %c2, %c0_31, %c0_32] : memref<1x4x8x12xf32, #tpu.memory_space<vmem>>, vector<1x1x8x12xf32>
    %62 = vector.shape_cast %61 : vector<1x1x8x12xf32> to vector<8x12xf32>
    %cst_33 = arith.constant dense<0.000000e+00> : vector<8x8xf32>
    %63 = tpu.matmul %62, %60, %cst_33 {dimension_numbers = #tpu.dot_dimension_numbers<[1], [0], [0], [1], [0, 0, 1, 1], [], []>} : vector<8x12xf32>, vector<12x8xf32>, vector<8x8xf32> -> vector<8x8xf32>
    %c0_34 = arith.constant 0 : index
    %c2_35 = arith.constant 2 : index
    %c0_36 = arith.constant 0 : index
    %c0_37 = arith.constant 0 : index
    %64 = vector.load %arg6[%c0_34, %c2_35, %c0_36, %c0_37] : memref<1x4x8x1xf32, #tpu.memory_space<vmem>>, vector<1x1x8x1xf32>
    %65 = vector.shape_cast %64 : vector<1x1x8x1xf32> to vector<8x1xf32>
    %66 = vector.broadcast %65 : vector<8x1xf32> to vector<8x8xf32>
    %67 = arith.addf %63, %66 : vector<8x8xf32>
    %68 = vector.extract_strided_slice %34 {offsets = [0, 24], sizes = [4, 8], strides = [1, 1]} : vector<4x34xf32> to vector<4x8xf32>
    %69 = vector.extract_strided_slice %34 {offsets = [0, 25], sizes = [4, 8], strides = [1, 1]} : vector<4x34xf32> to vector<4x8xf32>
    %70 = vector.extract_strided_slice %34 {offsets = [0, 26], sizes = [4, 8], strides = [1, 1]} : vector<4x34xf32> to vector<4x8xf32>
    %71 = tpu.concatenate %68, %69, %70 in 0 : vector<4x8xf32>, vector<4x8xf32>, vector<4x8xf32> -> vector<12x8xf32>
    %c0_38 = arith.constant 0 : index
    %c3 = arith.constant 3 : index
    %c0_39 = arith.constant 0 : index
    %c0_40 = arith.constant 0 : index
    %72 = vector.load %arg5[%c0_38, %c3, %c0_39, %c0_40] : memref<1x4x8x12xf32, #tpu.memory_space<vmem>>, vector<1x1x8x12xf32>
    %73 = vector.shape_cast %72 : vector<1x1x8x12xf32> to vector<8x12xf32>
    %cst_41 = arith.constant dense<0.000000e+00> : vector<8x8xf32>
    %74 = tpu.matmul %73, %71, %cst_41 {dimension_numbers = #tpu.dot_dimension_numbers<[1], [0], [0], [1], [0, 0, 1, 1], [], []>} : vector<8x12xf32>, vector<12x8xf32>, vector<8x8xf32> -> vector<8x8xf32>
    %c0_42 = arith.constant 0 : index
    %c3_43 = arith.constant 3 : index
    %c0_44 = arith.constant 0 : index
    %c0_45 = arith.constant 0 : index
    %75 = vector.load %arg6[%c0_42, %c3_43, %c0_44, %c0_45] : memref<1x4x8x1xf32, #tpu.memory_space<vmem>>, vector<1x1x8x1xf32>
    %76 = vector.shape_cast %75 : vector<1x1x8x1xf32> to vector<8x1xf32>
    %77 = vector.broadcast %76 : vector<8x1xf32> to vector<8x8xf32>
    %78 = arith.addf %74, %77 : vector<8x8xf32>
    %79 = tpu.concatenate %45, %56, %67, %78 in 1 : vector<8x8xf32>, vector<8x8xf32>, vector<8x8xf32>, vector<8x8xf32> -> vector<8x32xf32>
    %80 = vector.extract_strided_slice %79 {offsets = [0, 0], sizes = [4, 32], strides = [1, 1]} : vector<8x32xf32> to vector<4x32xf32>
    %81 = arith.negf %80 : vector<4x32xf32>
    %82 = math.exp %81 : vector<4x32xf32>
    %cst_46 = arith.constant 1.000000e+00 : f32
    %83 = vector.broadcast %cst_46 : f32 to vector<4x32xf32>
    %84 = arith.addf %83, %82 : vector<4x32xf32>
    %85 = arith.divf %83, %84 : vector<4x32xf32>
    %86 = vector.extract_strided_slice %79 {offsets = [4, 0], sizes = [4, 32], strides = [1, 1]} : vector<8x32xf32> to vector<4x32xf32>
    %87 = math.tanh %86 : vector<4x32xf32>
    %88 = arith.mulf %85, %87 : vector<4x32xf32>
    %89 = vector.extract_strided_slice %1 {offsets = [0, 4], sizes = [4, 32], strides = [1, 1]} : vector<4x40xf32> to vector<4x32xf32>
    %90 = arith.addf %89, %88 : vector<4x32xf32>
    %c0_47 = arith.constant 0 : index
    %c0_48 = arith.constant 0 : index
    %c0_49 = arith.constant 0 : index
    %91 = vector.load %arg7[%c0_47, %c0_48, %c0_49] : memref<1x4x32xf32, #tpu.memory_space<vmem>>, vector<1x4x32xf32>
    %92 = vector.shape_cast %91 : vector<1x4x32xf32> to vector<4x32xf32>
    %93 = vector.shape_cast %90 : vector<4x32xf32> to vector<1x4x32xf32>
    tpu.vector_store %arg7[%c0_47, %c0_48, %c0_49], %93 {strides = array<i32>} : memref<1x4x32xf32, #tpu.memory_space<vmem>>, vector<1x4x32xf32>,
    return
  }
  func.func @transform_0(%arg0: i32, %arg1: i32) -> (i32, i32, i32, i32) {
    %c0_i32 = arith.constant 0 : i32
    %c0_i32_0 = arith.constant 0 : i32
    %c0_i32_1 = arith.constant 0 : i32
    return %arg0, %arg1, %c0_i32, %c0_i32_0 : i32, i32, i32, i32
  }
  func.func @transform_1(%arg0: i32, %arg1: i32) -> (i32, i32) {
    %c0_i32 = arith.constant 0 : i32
    %c0_i32_0 = arith.constant 0 : i32
    %c0_i32_1 = arith.constant 0 : i32
    return %c0_i32, %c0_i32_0 : i32, i32
  }
  func.func @transform_2(%arg0: i32, %arg1: i32) -> (i32, i32) {
    %c0_i32 = arith.constant 0 : i32
    %c0_i32_0 = arith.constant 0 : i32
    %c0_i32_1 = arith.constant 0 : i32
    return %c0_i32, %c0_i32_0 : i32, i32
  }
  func.func @transform_3(%arg0: i32, %arg1: i32) -> (i32, i32, i32, i32) {
    %c1_i32 = arith.constant 1 : i32
    %c0_i32 = arith.constant 0 : i32
    %c0_i32_0 = arith.constant 0 : i32
    return %arg0, %arg1, %c1_i32, %c0_i32 : i32, i32, i32, i32
  }
  func.func @transform_4(%arg0: i32, %arg1: i32) -> (i32, i32, i32, i32) {
    %c1_i32 = arith.constant 1 : i32
    %c0_i32 = arith.constant 0 : i32
    %c0_i32_0 = arith.constant 0 : i32
    return %arg0, %arg1, %c1_i32, %c0_i32 : i32, i32, i32, i32
  }
  func.func @transform_5(%arg0: i32, %arg1: i32) -> (i32, i32, i32) {
    %c0_i32 = arith.constant 0 : i32
    %c0_i32_0 = arith.constant 0 : i32
    return %arg0, %c0_i32, %arg1 : i32, i32, i32
  }
}

</mosaic_0001>

<llo_original>
// kernel: _lambda_.8
$region0: #{_lambda_.8}
  #allocation0 [shape = 'u32[]', space=smem, size = 0x4, offset = 0x4, fixed_abs, tag = 'smem constant byte address 0x4 - core index']
  #allocation1 [shape = 'u32[144,128]{1,0:T(1,128)}', space=vmem, size = 0x12000, scoped, tag = 'internal scratch']
  %s0 = inlined_call_operand.hbm [shape: f32[2,1,4,17], index: 0, kind: input, shape index: {}]
  %s1 = inlined_call_operand.hbm [shape: f32[8,4], index: 1, kind: input, shape index: {}]
  %s2 = inlined_call_operand.hbm [shape: f32[8,4], index: 2, kind: input, shape index: {}]
  %s3 = inlined_call_operand.hbm [shape: f32[8,1], index: 3, kind: input, shape index: {}]
  %s4 = inlined_call_operand.hbm [shape: f32[2,8,16], index: 4, kind: output, shape index: {}]
  %s5 = sld [smem:[#allocation0]]
  $region65: #{_lambda_.8} parent=0
    _
  %s7 = ssub.s32 1, %s5
  %s8 = scalar_select 0, %s7, %s5
  $region1: #{_lambda_.8} parent=0
    #allocation2 [shape = 'u8[4096]{0}', space=vmem, size = 0x1000, scoped, tag = 'input window, operand 0']
    #allocation3 [shape = 's32[2]{0}', space=sflag, size = 0x8, scoped, tag = 'scoped memory for _lambda_.8']
    #allocation4 [shape = 's32[2]{0}', space=sflag, size = 0x8, scoped, tag = 'scoped memory for _lambda_.8']
    #allocation5 [shape = 'u8[4096]{0}', space=vmem, size = 0x1000, scoped, tag = 'input window, operand 1, single buffered']
    #allocation6 [shape = 's32[1]{0}', space=sflag, size = 0x4, scoped, tag = 'scoped memory for _lambda_.8']
    #allocation7 [shape = 'u8[4096]{0}', space=vmem, size = 0x1000, scoped, tag = 'input window, operand 2, single buffered']
    #allocation8 [shape = 'u8[4096]{0}', space=vmem, size = 0x1000, scoped, tag = 'input window, operand 3, single buffered']
    #allocation9 [shape = 's32[1]{0}', space=sflag, size = 0x4, scoped, tag = 'scoped memory for _lambda_.8']
    #allocation10 [shape = 'u8[8192]{0}', space=vmem, size = 0x2000, scoped, tag = 'output window, operand 0']
    %9 = vsyncpa [#allocation3], 0
    %s10 = scalar_lea.sflag [#allocation3], 1
    %11 = vsyncpa %s10, 0
    %12 = vsyncpa [#allocation6], 0
    %13 = vsyncpa [#allocation9], 0
    %14 = vsyncpa [#allocation4], 0
    %s15 = scalar_lea.sflag [#allocation4], 1
    %16 = vsyncpa %s15, 0
    loop: start=0, step=1, limit=4
    $region2: #{_lambda_.8} parent=1 // loop_pre_header
      _
    $region3: #{_lambda_.8} parent=1 // loop_header
      %s18 = sphi 0, %s22
      %p19 = scmp.ge.s32.totalorder %s18, 4
      %s25 = sphi 0, %s37
      %s26 = sphi 0, %s33
      %s27 = sphi 0, %s25
      %s28 = sphi 0, %s26
      %s29 = sphi 0, %s27
      %s30 = sphi 0, %s28
      %s42 = sphi 0, %s44
      %s45 = sphi 0, %s42
      %s46 = sphi 0, %s45
      %s62 = sphi 0, %s46
      %s66 = sphi 0, %s66
      %s68 = sphi 0, %s66
      %s69 = sphi 0, %s68
      %s83 = sphi 0, %s69
      %s87 = sphi 0, %s87
      %s89 = sphi 0, %s87
      %s90 = sphi 0, %s89
      %s104 = sphi 0, %s90
      %s108 = sphi 0, %s108
      %s110 = sphi 0, %s108
      %s111 = sphi 0, %s110
      %s125 = sphi 0, %s111
      %s133 = sphi 0, %s135
      %s136 = sphi 0, %s133
      %s137 = sphi 0, %s136
      %s153 = sphi 0, %s137
    $region4: #{_lambda_.8} parent=1 // loop_header_branch
      %21 = sbr.rel (%p19) target = $region8
    $region5: #{_lambda_.8} parent=1 // loop_body
      %s23 = ssub.s32 %s18, 1
      %s24 = ssub.s32 %s18, 2
      %s31 = sadd.s32 1, %s26
      %p32 = scmp.ge.s32.totalorder %s31, 1
      %s33 = scalar_select %p32, 0, %s31
      %s34 = sadd.s32 1, %s25
      %s35 = scalar_select %p32, %s34, %s25
      %p36 = scmp.ge.s32.totalorder %s35, 2
      %s37 = scalar_select %p36, 0, %s35
      %s38 = ssub.s32 %s25, %s37
      %s39 = ssub.s32 %s26, %s33
      %s40 = sor.u32 %s38, %s39
      %p41 = scmp.eq.s32.totalorder %s40, 0
      %s43 = sadd.s32 %s42, 1
      %s44 = scalar_select %p41, %s42, %s43
      %p47 = pneg %p41
      %p48 = scmp.eq.s32.totalorder %s18, 1
      %p49 = por %p47, %p48
      %p50 = scmp.ne.s32.totalorder %s42, %s45
      %p51 = scmp.eq.s32.totalorder %s18, 0
      %p52 = por %p50, %p51
      %p53 = scmp.ne.s32.totalorder %s42, %s45
      %p54 = scmp.eq.s32.totalorder %s23, 1
      %p55 = por %p53, %p54
      %p56 = scmp.ne.s32.totalorder %s45, %s46
      %p57 = scmp.eq.s32.totalorder %s23, 0
      %p58 = por %p56, %p57
      %p59 = scmp.ne.s32.totalorder %s45, %s46
      %p60 = scmp.eq.s32.totalorder %s24, 1
      %p61 = por %p59, %p60
      %p63 = scmp.ne.s32.totalorder %s46, %s62
      %p64 = scmp.eq.s32.totalorder %s24, 0
      %p65 = por %p63, %p64
      %s67 = sadd.s32 %s66, 1
      %p70 = scmp.eq.s32.totalorder %s18, 1
      %p71 = scmp.ne.s32.totalorder %s66, %s68
      %p72 = scmp.eq.s32.totalorder %s18, 0
      %p73 = por %p71, %p72
      %p74 = scmp.ne.s32.totalorder %s66, %s68
      %p75 = scmp.eq.s32.totalorder %s23, 1
      %p76 = por %p74, %p75
      %p77 = scmp.ne.s32.totalorder %s68, %s69
      %p78 = scmp.eq.s32.totalorder %s23, 0
      %p79 = por %p77, %p78
      %p80 = scmp.ne.s32.totalorder %s68, %s69
      %p81 = scmp.eq.s32.totalorder %s24, 1
      %p82 = por %p80, %p81
      %p84 = scmp.ne.s32.totalorder %s69, %s83
      %p85 = scmp.eq.s32.totalorder %s24, 0
      %p86 = por %p84, %p85
      %s88 = sadd.s32 %s87, 1
      %p91 = scmp.eq.s32.totalorder %s18, 1
      %p92 = scmp.ne.s32.totalorder %s87, %s89
      %p93 = scmp.eq.s32.totalorder %s18, 0
      %p94 = por %p92, %p93
      %p95 = scmp.ne.s32.totalorder %s87, %s89
      %p96 = scmp.eq.s32.totalorder %s23, 1
      %p97 = por %p95, %p96
      %p98 = scmp.ne.s32.totalorder %s89, %s90
      %p99 = scmp.eq.s32.totalorder %s23, 0
      %p100 = por %p98, %p99
      %p101 = scmp.ne.s32.totalorder %s89, %s90
      %p102 = scmp.eq.s32.totalorder %s24, 1
      %p103 = por %p101, %p102
      %p105 = scmp.ne.s32.totalorder %s90, %s104
      %p106 = scmp.eq.s32.totalorder %s24, 0
      %p107 = por %p105, %p106
      %s109 = sadd.s32 %s108, 1
      %p112 = scmp.eq.s32.totalorder %s18, 1
      %p113 = scmp.ne.s32.totalorder %s108, %s110
      %p114 = scmp.eq.s32.totalorder %s18, 0
      %p115 = por %p113, %p114
      %p116 = scmp.ne.s32.totalorder %s108, %s110
      %p117 = scmp.eq.s32.totalorder %s23, 1
      %p118 = por %p116, %p117
      %p119 = scmp.ne.s32.totalorder %s110, %s111
      %p120 = scmp.eq.s32.totalorder %s23, 0
      %p121 = por %p119, %p120
      %p122 = scmp.ne.s32.totalorder %s110, %s111
      %p123 = scmp.eq.s32.totalorder %s24, 1
      %p124 = por %p122, %p123
      %p126 = scmp.ne.s32.totalorder %s111, %s125
      %p127 = scmp.eq.s32.totalorder %s24, 0
      %p128 = por %p126, %p127
      %s129 = ssub.s32 %s25, %s37
      %s130 = ssub.s32 %s26, %s33
      %s131 = sor.u32 %s129, %s130
      %p132 = scmp.eq.s32.totalorder %s131, 0
      %s134 = sadd.s32 %s133, 1
      %s135 = scalar_select %p132, %s133, %s134
      %p138 = pneg %p132
      %p139 = scmp.eq.s32.totalorder %s18, 1
      %p140 = por %p138, %p139
      %p141 = scmp.ne.s32.totalorder %s133, %s136
      %p142 = scmp.eq.s32.totalorder %s18, 0
      %p143 = por %p141, %p142
      %p144 = scmp.ne.s32.totalorder %s133, %s136
      %p145 = scmp.eq.s32.totalorder %s23, 1
      %p146 = por %p144, %p145
      %p147 = scmp.ne.s32.totalorder %s136, %s137
      %p148 = scmp.eq.s32.totalorder %s23, 0
      %p149 = por %p147, %p148
      %p150 = scmp.ne.s32.totalorder %s136, %s137
      %p151 = scmp.eq.s32.totalorder %s24, 1
      %p152 = por %p150, %p151
      %p154 = scmp.ne.s32.totalorder %s137, %s153
      %p155 = scmp.eq.s32.totalorder %s24, 0
      %p156 = por %p154, %p155
      %p157 = scmp.le.s32.totalorder 1, %s18
      %p158 = scmp.lt.s32.totalorder %s18, 3
      %p159 = pnand %p157, %p158
      %p160 = pneg %p159
      // Predicated region
      $region9: #{_lambda_.8} parent=5 // pred_check
        _
      $region10: #{_lambda_.8} parent=5 // pred_check_branch
        %162 = sbr.rel (%p159) target = $region12
      $region11: #{_lambda_.8} parent=5 // pred_region
        %s163 = ssub.s32 %s18, 1
        // Predicated region
        $region13: #{_lambda_.8} parent=11 // pred_check
          %p164 = pneg %p79
        $region14: #{_lambda_.8} parent=11 // pred_check_branch
          %166 = sbr.rel (%p164) target = $region16
        $region15: #{_lambda_.8} parent=11 // pred_region
          %s168 = ssub.s32 128, 128
          %169 = vsyncadd [#allocation6], %s168
          %s171 = sshll.u32 [#allocation5], 4
          %s172 = int_to_ptr.vmem [resolvable:$true] %s171
          %174 = dma.hbm_to_vmem [thread:$0]  %s1, 128, %s172, [#allocation6]
        $region16: #{_lambda_.8} parent=11 // pred_fallthru
          _
        // Predicated region
        $region17: #{_lambda_.8} parent=11 // pred_check
          %p175 = pneg %p100
        $region18: #{_lambda_.8} parent=11 // pred_check_branch
          %177 = sbr.rel (%p175) target = $region20
        $region19: #{_lambda_.8} parent=11 // pred_region
          %s179 = ssub.s32 128, 128
          %180 = vsyncadd [#allocation6], %s179
          %s182 = sshll.u32 [#allocation7], 4
          %s183 = int_to_ptr.vmem [resolvable:$true] %s182
          %185 = dma.hbm_to_vmem [thread:$0]  %s2, 128, %s183, [#allocation6]
        $region20: #{_lambda_.8} parent=11 // pred_fallthru
          _
        // Predicated region
        $region21: #{_lambda_.8} parent=11 // pred_check
          %p186 = pneg %p121
        $region22: #{_lambda_.8} parent=11 // pred_check_branch
          %188 = sbr.rel (%p186) target = $region24
        $region23: #{_lambda_.8} parent=11 // pred_region
          %s190 = ssub.s32 128, 128
          %191 = vsyncadd [#allocation9], %s190
          %s193 = sshll.u32 [#allocation8], 4
          %s194 = int_to_ptr.vmem [resolvable:$true] %s193
          %196 = dma.hbm_to_vmem [thread:$0]  %s3, 128, %s194, [#allocation9]
        $region24: #{_lambda_.8} parent=11 // pred_fallthru
          _
      $region12: #{_lambda_.8} parent=5 // pred_fallthru
        _
      %p197 = scmp.lt.s32.totalorder %s18, 2
      // Predicated region
      $region25: #{_lambda_.8} parent=5 // pred_check
        %p198 = pneg %p197
      $region26: #{_lambda_.8} parent=5 // pred_check_branch
        %200 = sbr.rel (%p198) target = $region28
      $region27: #{_lambda_.8} parent=5 // pred_region
        // Predicated region
        $region29: #{_lambda_.8} parent=27 // pred_check
          %p201 = pneg %p52
        $region30: #{_lambda_.8} parent=27 // pred_check_branch
          %203 = sbr.rel (%p201) target = $region32
        $region31: #{_lambda_.8} parent=27 // pred_region
          %s204 = sand.u32 %s42, 1
          %s205 = scalar_lea.sflag [#allocation3], %s204
          %s206 = sand.u32 %s42, 1
          %s207 = smul.addr %s206, 4
          %s208 = scalar_lea.vmem [#allocation2], %s207
          %s210 = ssub.s32 64, 64
          %211 = vsyncadd %s205, %s210
          %s212 = sadd.s32 %s26, %s25
          %s213 = smul.addr %s212, 64
          %s214 = scalar_lea.hbm %s0, %s213
          %s216 = sshll.u32 %s208, 4
          %s217 = int_to_ptr.vmem [resolvable:$true] %s216
          %219 = dma.hbm_to_vmem [thread:$0]  %s214, 64, %s217, %s205
        $region32: #{_lambda_.8} parent=27 // pred_fallthru
          _
      $region28: #{_lambda_.8} parent=5 // pred_fallthru
        _
      %p220 = scmp.le.s32.totalorder 1, %s18
      %p221 = scmp.lt.s32.totalorder %s18, 3
      %p222 = pnand %p220, %p221
      %p223 = pneg %p222
      // Predicated region
      $region33: #{_lambda_.8} parent=5 // pred_check
        _
      $region34: #{_lambda_.8} parent=5 // pred_check_branch
        %225 = sbr.rel (%p222) target = $region36
      $region35: #{_lambda_.8} parent=5 // pred_region
        %s226 = ssub.s32 %s18, 1
        %s227 = sand.u32 %s45, 1
        %s228 = scalar_lea.sflag [#allocation3], %s227
        %s229 = sand.u32 %s45, 1
        %s230 = smul.addr %s229, 4
        %s231 = scalar_lea.vmem [#allocation2], %s230
        // Predicated region
        $region37: #{_lambda_.8} parent=35 // pred_check
          %p232 = pneg %p58
        $region38: #{_lambda_.8} parent=35 // pred_check_branch
          %234 = sbr.rel (%p232) target = $region40
        $region39: #{_lambda_.8} parent=35 // pred_region
          %235 = dma.done %s228, 64
        $region40: #{_lambda_.8} parent=35 // pred_fallthru
          _
        // Predicated region
        $region41: #{_lambda_.8} parent=35 // pred_check
          %p236 = pneg %p79
        $region42: #{_lambda_.8} parent=35 // pred_check_branch
          %238 = sbr.rel (%p236) target = $region44
        $region43: #{_lambda_.8} parent=35 // pred_region
          %239 = dma.done [#allocation6], 128
        $region44: #{_lambda_.8} parent=35 // pred_fallthru
          _
        // Predicated region
        $region45: #{_lambda_.8} parent=35 // pred_check
          %p240 = pneg %p100
        $region46: #{_lambda_.8} parent=35 // pred_check_branch
          %242 = sbr.rel (%p240) target = $region48
        $region47: #{_lambda_.8} parent=35 // pred_region
          %243 = dma.done [#allocation6], 128
        $region48: #{_lambda_.8} parent=35 // pred_fallthru
          _
        // Predicated region
        $region49: #{_lambda_.8} parent=35 // pred_check
          %p244 = pneg %p121
        $region50: #{_lambda_.8} parent=35 // pred_check_branch
          %246 = sbr.rel (%p244) target = $region52
        $region51: #{_lambda_.8} parent=35 // pred_region
          %247 = dma.done [#allocation9], 128
        $region52: #{_lambda_.8} parent=35 // pred_fallthru
          _
        %s248 = sand.u32 %s45, 1
        %s249 = scalar_lea.sflag [#allocation3], %s248
        %s250 = sand.u32 %s45, 1
        %s251 = smul.addr %s250, 4
        %s252 = scalar_lea.vmem [#allocation2], %s251
        %p253 = pneg %p58
        %p254 = pneg %p55
        %p255 = pneg %p79
        %p256 = pneg %p76
        %p257 = pneg %p100
        %p258 = pneg %p97
        %p259 = pneg %p121
        %p260 = pneg %p118
        %p261 = pneg %p149
        %p262 = pneg %p146
        %s263 = sand.u32 %s136, 1
        %s264 = scalar_lea.sflag [#allocation4], %s263
        %s265 = sand.u32 %s136, 1
        %s266 = smul.addr %s265, 8
        %s267 = scalar_lea.vmem [#allocation10], %s266
        %v268 = vld [vmem:[%s231] sm:$0xf]
        %vm269 = vcmp.ge.f32.partialorder %v268, 0.0
        %v270 = vmul.f32 %v268, 0.2
        %v271 = vsel %vm269, %v268, %v270
        %v272 = vld [vmem:[#allocation5] sm:$0xff]
        %v273 = vld [vmem:[#allocation7] sm:$0xff]
        %vm274 = vcmask 31744
        %v276 = vsel %vm274, %v273, 0
        %vm278 = vcmask 1043456
        %v280 = vsel %vm278, %v271, 0
        %282 = vmatprep.subr.mxu0 0.0
        %283 = vmatpush1.msra.mxu0 %v280
        %284 = vmatprep.subr.mxu0 0.0
        %285 = vmatpush1.msra.mxu0 0.0
        %286 = vmatprep.subr.mxu0 0.0
        %287 = vmatpush1.msra.mxu0 0.0
        %288 = vmatprep.subr.mxu0 0.0
        %289 = vmatpush1.msra.mxu0 0.0
        %290 = vmatprep.subr.mxu0 0.0
        %291 = vmatpush1.msra.mxu0 0.0
        %292 = vmatprep.subr.mxu0 0.0
        %293 = vmatpush1.msra.mxu0 0.0
        %294 = vmatprep.subr.mxu0 0.0
        %295 = vmatpush1.msra.mxu0 0.0
        %296 = vmatprep.subr.mxu0 0.0
        %297 = vmatpush1.msra.mxu0 0.0
        %298 = vmatprep.subr.mxu0 0.0
        %299 = vmatpush1.msra.mxu0 0.0
        %300 = vmatprep.subr.mxu0 0.0
        %301 = vmatpush1.msra.mxu0 0.0
        %302 = vmatprep.subr.mxu0 0.0
        %303 = vmatpush1.msra.mxu0 0.0
        %304 = vmatprep.subr.mxu0 0.0
        %305 = vmatpush1.msra.mxu0 0.0
        %306 = vmatprep.subr.mxu0 0.0
        %307 = vmatpush1.msra.mxu0 0.0
        %308 = vmatprep.subr.mxu0 0.0
        %309 = vmatpush1.msra.mxu0 0.0
        %310 = vmatprep.subr.mxu0 0.0
        %311 = vmatpush1.msra.mxu0 0.0
        %312 = vmatprep.subr.mxu0 0.0
        %313 = vmatpush1.msra.mxu0 0.0
        %314 = vmatprep.subr.mxu0 0.0
        %315 = vmatpush1.msra.mxu0 0.0
        %316 = vmatprep.subr.mxu0 0.0
        %317 = vmatpush1.msra.mxu0 0.0
        %318 = vmatprep.subr.mxu0 0.0
        %319 = vmatpush1.msra.mxu0 0.0
        %320 = vmatprep.subr.mxu0 0.0
        %321 = vmatpush1.msra.mxu0 0.0
        %322 = vmatprep.subr.mxu0 0.0
        %323 = vmatpush1.msra.mxu0 0.0
        %324 = vmatprep.subr.mxu0 0.0
        %325 = vmatpush1.msra.mxu0 0.0
        %326 = vmatprep.subr.mxu0 0.0
        %327 = vmatpush1.msra.mxu0 0.0
        %328 = vmatprep.subr.mxu0 0.0
        %329 = vmatpush1.msra.mxu0 0.0
        %330 = vmatprep.subr.mxu0 0.0
        %331 = vmatpush1.msra.mxu0 0.0
        %332 = vmatprep.subr.mxu0 0.0
        %333 = vmatpush1.msra.mxu0 0.0
        %334 = vmatprep.subr.mxu0 0.0
        %335 = vmatpush1.msra.mxu0 0.0
        %336 = vmatprep.subr.mxu0 0.0
        %337 = vmatpush1.msra.mxu0 0.0
        %338 = vmatprep.subr.mxu0 0.0
        %339 = vmatpush1.msra.mxu0 0.0
        %340 = vmatprep.subr.mxu0 0.0
        %341 = vmatpush1.msra.mxu0 0.0
        %342 = vmatprep.subr.mxu0 0.0
        %343 = vmatpush1.msra.mxu0 0.0
        %344 = vmatprep.subr.mxu0 0.0
        %345 = vmatpush1.msra.mxu0 0.0
        %346 = vmatprep.mubr.f32.mxu0 0.0
        %347 = vmatmul.mubr.f32.gmra.mrb[0].mxu0 %v276
        %v348 = vpop.f32.mrb[0].mxu0
        %v349 = vadd.f32 0.0, %v348
        %v350 = vpop.f32.mrb[0].mxu0
        %351 = vdwg.mxu0
        %352 = vrot.lane.b32.xlu0 %v271, 127
        %v353 = vpop.permute.xlu0 %352
        %v355 = vsel %vm274, %v272, 0
        %v357 = vsel %vm278, %v353, 0
        %359 = vmatprep.subr.mxu0 0.0
        %360 = vmatpush1.msra.mxu0 %v357
        %361 = vmatprep.subr.mxu0 0.0
        %362 = vmatpush1.msra.mxu0 0.0
        %363 = vmatprep.subr.mxu0 0.0
        %364 = vmatpush1.msra.mxu0 0.0
        %365 = vmatprep.subr.mxu0 0.0
        %366 = vmatpush1.msra.mxu0 0.0
        %367 = vmatprep.subr.mxu0 0.0
        %368 = vmatpush1.msra.mxu0 0.0
        %369 = vmatprep.subr.mxu0 0.0
        %370 = vmatpush1.msra.mxu0 0.0
        %371 = vmatprep.subr.mxu0 0.0
        %372 = vmatpush1.msra.mxu0 0.0
        %373 = vmatprep.subr.mxu0 0.0
        %374 = vmatpush1.msra.mxu0 0.0
        %375 = vmatprep.subr.mxu0 0.0
        %376 = vmatpush1.msra.mxu0 0.0
        %377 = vmatprep.subr.mxu0 0.0
        %378 = vmatpush1.msra.mxu0 0.0
        %379 = vmatprep.subr.mxu0 0.0
        %380 = vmatpush1.msra.mxu0 0.0
        %381 = vmatprep.subr.mxu0 0.0
        %382 = vmatpush1.msra.mxu0 0.0
        %383 = vmatprep.subr.mxu0 0.0
        %384 = vmatpush1.msra.mxu0 0.0
        %385 = vmatprep.subr.mxu0 0.0
        %386 = vmatpush1.msra.mxu0 0.0
        %387 = vmatprep.subr.mxu0 0.0
        %388 = vmatpush1.msra.mxu0 0.0
        %389 = vmatprep.subr.mxu0 0.0
        %390 = vmatpush1.msra.mxu0 0.0
        %391 = vmatprep.subr.mxu0 0.0
        %392 = vmatpush1.msra.mxu0 0.0
        %393 = vmatprep.subr.mxu0 0.0
        %394 = vmatpush1.msra.mxu0 0.0
        %395 = vmatprep.subr.mxu0 0.0
        %396 = vmatpush1.msra.mxu0 0.0
        %397 = vmatprep.subr.mxu0 0.0
        %398 = vmatpush1.msra.mxu0 0.0
        %399 = vmatprep.subr.mxu0 0.0
        %400 = vmatpush1.msra.mxu0 0.0
        %401 = vmatprep.subr.mxu0 0.0
        %402 = vmatpush1.msra.mxu0 0.0
        %403 = vmatprep.subr.mxu0 0.0
        %404 = vmatpush1.msra.mxu0 0.0
        %405 = vmatprep.subr.mxu0 0.0
        %406 = vmatpush1.msra.mxu0 0.0
        %407 = vmatprep.subr.mxu0 0.0
        %408 = vmatpush1.msra.mxu0 0.0
        %409 = vmatprep.subr.mxu0 0.0
        %410 = vmatpush1.msra.mxu0 0.0
        %411 = vmatprep.subr.mxu0 0.0
        %412 = vmatpush1.msra.mxu0 0.0
        %413 = vmatprep.subr.mxu0 0.0
        %414 = vmatpush1.msra.mxu0 0.0
        %415 = vmatprep.subr.mxu0 0.0
        %416 = vmatpush1.msra.mxu0 0.0
        %417 = vmatprep.subr.mxu0 0.0
        %418 = vmatpush1.msra.mxu0 0.0
        %419 = vmatprep.subr.mxu0 0.0
        %420 = vmatpush1.msra.mxu0 0.0
        %421 = vmatprep.subr.mxu0 0.0
        %422 = vmatpush1.msra.mxu0 0.0
        %423 = vmatprep.mubr.f32.mxu0 0.0
        %424 = vmatmul.mubr.f32.gmra.mrb[0].mxu0 %v355
        %v425 = vpop.f32.mrb[0].mxu0
        %v426 = vadd.f32 %v349, %v425
        %v427 = vpop.f32.mrb[0].mxu0
        %428 = vdwg.mxu0
        %v429 = vld [vmem:[#allocation8] sm:$0xff]
        %431 = vset.pattern.permute.xlu0 0
        %432 = vperm.xlu0 %431, %v429
        %v433 = vpop.permute.xlu0 %432
        %v435 = vadd.f32 %v426, %v433
        %vm436 = vcmask 130048
        %437 = vst.msk [vmem:[%s267] sm:$0xff] %vm436, %v435
        %s438 = sand.u32 %s136, 1
        %s439 = scalar_lea.sflag [#allocation4], %s438
        %s440 = sand.u32 %s136, 1
        %s441 = smul.addr %s440, 8
        %s442 = scalar_lea.vmem [#allocation10], %s441
        // Predicated region
        $region53: #{_lambda_.8} parent=35 // pred_check
          %p443 = pneg %p146
        $region54: #{_lambda_.8} parent=35 // pred_check_branch
          %445 = sbr.rel (%p443) target = $region56
        $region55: #{_lambda_.8} parent=35 // pred_region
          %s447 = ssub.s32 128, 128
          %448 = vsyncadd %s439, %s447
          %s449 = sadd.s32 %s28, %s27
          %s450 = smul.addr %s449, 128
          %s451 = scalar_lea.hbm %s4, %s450
          %s453 = sshll.u32 %s442, 4
          %s454 = int_to_ptr.vmem [resolvable:$true] %s453
          %456 = dma.vmem_to_hbm [thread:$0]  %s454, 128, %s451, %s439
        $region56: #{_lambda_.8} parent=35 // pred_fallthru
          _
      $region36: #{_lambda_.8} parent=5 // pred_fallthru
        _
      %p457 = scmp.le.s32.totalorder 2, %s18
      // Predicated region
      $region57: #{_lambda_.8} parent=5 // pred_check
        %p458 = pneg %p457
      $region58: #{_lambda_.8} parent=5 // pred_check_branch
        %460 = sbr.rel (%p458) target = $region60
      $region59: #{_lambda_.8} parent=5 // pred_region
        %s461 = ssub.s32 %s18, 2
        // Predicated region
        $region61: #{_lambda_.8} parent=59 // pred_check
          %p462 = pneg %p152
        $region62: #{_lambda_.8} parent=59 // pred_check_branch
          %464 = sbr.rel (%p462) target = $region64
        $region63: #{_lambda_.8} parent=59 // pred_region
          %s465 = sand.u32 %s137, 1
          %s466 = scalar_lea.sflag [#allocation4], %s465
          %s467 = sand.u32 %s137, 1
          %s468 = smul.addr %s467, 8
          %s469 = scalar_lea.vmem [#allocation10], %s468
          %470 = dma.done %s466, 128
        $region64: #{_lambda_.8} parent=59 // pred_fallthru
          _
      $region60: #{_lambda_.8} parent=5 // pred_fallthru
        _
    $region6: #{_lambda_.8} parent=1 // loop_footer
      %s22 = sadd.s32 1, %s18
    $region7: #{_lambda_.8} parent=1 // loop_footer_branch
      %17 = sbr.rel target = $region3
    $region8: #{_lambda_.8} parent=1 // loop_exit
      _
    %471 = vsyncpa [#allocation3], 1
    %s472 = scalar_lea.sflag [#allocation3], 1
    %473 = vsyncpa %s472, 1
    %474 = vsyncpa [#allocation6], 1
    %475 = vsyncpa [#allocation9], 1
    %476 = vsyncpa [#allocation4], 1
    %s477 = scalar_lea.sflag [#allocation4], 1
    %478 = vsyncpa %s477, 1

// kernel: _lambda_.10
$region0: #{_lambda_.10}
  #allocation0 [shape = 'u32[]', space=smem, size = 0x4, offset = 0x4, fixed_abs, tag = 'smem constant byte address 0x4 - core index']
  #allocation1 [shape = 'u32[144,128]{1,0:T(1,128)}', space=vmem, size = 0x12000, scoped, tag = 'internal scratch']
  %s0 = inlined_call_operand.hbm [shape: f32[2,1,16,8], index: 0, kind: input, shape index: {}]
  %s1 = inlined_call_operand.hbm [shape: f32[16,48], index: 1, kind: input, shape index: {}]
  %s2 = inlined_call_operand.hbm [shape: f32[16,1], index: 2, kind: input, shape index: {}]
  %s3 = inlined_call_operand.hbm [shape: f32[16,48], index: 3, kind: input, shape index: {}]
  %s4 = inlined_call_operand.hbm [shape: f32[16,1], index: 4, kind: input, shape index: {}]
  %s5 = inlined_call_operand.hbm [shape: f32[2,16,4], index: 5, kind: output, shape index: {}]
  %s6 = sld [smem:[#allocation0]]
  $region73: #{_lambda_.10} parent=0
    _
  %s8 = ssub.s32 1, %s6
  %s9 = scalar_select 0, %s8, %s6
  $region1: #{_lambda_.10} parent=0
    #allocation2 [shape = 'u8[16384]{0}', space=vmem, size = 0x4000, scoped, tag = 'input window, operand 0']
    #allocation3 [shape = 's32[2]{0}', space=sflag, size = 0x8, scoped, tag = 'scoped memory for _lambda_.10']
    #allocation4 [shape = 's32[2]{0}', space=sflag, size = 0x8, scoped, tag = 'scoped memory for _lambda_.10']
    #allocation5 [shape = 'u8[8192]{0}', space=vmem, size = 0x2000, scoped, tag = 'input window, operand 1, single buffered']
    #allocation6 [shape = 's32[1]{0}', space=sflag, size = 0x4, scoped, tag = 'scoped memory for _lambda_.10']
    #allocation7 [shape = 'u8[8192]{0}', space=vmem, size = 0x2000, scoped, tag = 'input window, operand 2, single buffered']
    #allocation8 [shape = 'u8[8192]{0}', space=vmem, size = 0x2000, scoped, tag = 'input window, operand 3, single buffered']
    #allocation9 [shape = 's32[1]{0}', space=sflag, size = 0x4, scoped, tag = 'scoped memory for _lambda_.10']
    #allocation10 [shape = 'u8[8192]{0}', space=vmem, size = 0x2000, scoped, tag = 'input window, operand 4, single buffered']
    #allocation11 [shape = 'u8[16384]{0}', space=vmem, size = 0x4000, scoped, tag = 'output window, operand 0']
    %10 = vsyncpa [#allocation3], 0
    %s11 = scalar_lea.sflag [#allocation3], 1
    %12 = vsyncpa %s11, 0
    %13 = vsyncpa [#allocation6], 0
    %14 = vsyncpa [#allocation9], 0
    %15 = vsyncpa [#allocation4], 0
    %s16 = scalar_lea.sflag [#allocation4], 1
    %17 = vsyncpa %s16, 0
    loop: start=0, step=1, limit=4
    $region2: #{_lambda_.10} parent=1 // loop_pre_header
      _
    $region3: #{_lambda_.10} parent=1 // loop_header
      %s19 = sphi 0, %s23
      %p20 = scmp.ge.s32.totalorder %s19, 4
      %s26 = sphi 0, %s38
      %s27 = sphi 0, %s34
      %s28 = sphi 0, %s26
      %s29 = sphi 0, %s27
      %s30 = sphi 0, %s28
      %s31 = sphi 0, %s29
      %s43 = sphi 0, %s45
      %s46 = sphi 0, %s43
      %s47 = sphi 0, %s46
      %s63 = sphi 0, %s47
      %s67 = sphi 0, %s67
      %s69 = sphi 0, %s67
      %s70 = sphi 0, %s69
      %s84 = sphi 0, %s70
      %s88 = sphi 0, %s88
      %s90 = sphi 0, %s88
      %s91 = sphi 0, %s90
      %s105 = sphi 0, %s91
      %s109 = sphi 0, %s109
      %s111 = sphi 0, %s109
      %s112 = sphi 0, %s111
      %s126 = sphi 0, %s112
      %s130 = sphi 0, %s130
      %s132 = sphi 0, %s130
      %s133 = sphi 0, %s132
      %s147 = sphi 0, %s133
      %s155 = sphi 0, %s157
      %s158 = sphi 0, %s155
      %s159 = sphi 0, %s158
      %s175 = sphi 0, %s159
    $region4: #{_lambda_.10} parent=1 // loop_header_branch
      %22 = sbr.rel (%p20) target = $region8
    $region5: #{_lambda_.10} parent=1 // loop_body
      %s24 = ssub.s32 %s19, 1
      %s25 = ssub.s32 %s19, 2
      %s32 = sadd.s32 1, %s27
      %p33 = scmp.ge.s32.totalorder %s32, 1
      %s34 = scalar_select %p33, 0, %s32
      %s35 = sadd.s32 1, %s26
      %s36 = scalar_select %p33, %s35, %s26
      %p37 = scmp.ge.s32.totalorder %s36, 2
      %s38 = scalar_select %p37, 0, %s36
      %s39 = ssub.s32 %s26, %s38
      %s40 = ssub.s32 %s27, %s34
      %s41 = sor.u32 %s39, %s40
      %p42 = scmp.eq.s32.totalorder %s41, 0
      %s44 = sadd.s32 %s43, 1
      %s45 = scalar_select %p42, %s43, %s44
      %p48 = pneg %p42
      %p49 = scmp.eq.s32.totalorder %s19, 1
      %p50 = por %p48, %p49
      %p51 = scmp.ne.s32.totalorder %s43, %s46
      %p52 = scmp.eq.s32.totalorder %s19, 0
      %p53 = por %p51, %p52
      %p54 = scmp.ne.s32.totalorder %s43, %s46
      %p55 = scmp.eq.s32.totalorder %s24, 1
      %p56 = por %p54, %p55
      %p57 = scmp.ne.s32.totalorder %s46, %s47
      %p58 = scmp.eq.s32.totalorder %s24, 0
      %p59 = por %p57, %p58
      %p60 = scmp.ne.s32.totalorder %s46, %s47
      %p61 = scmp.eq.s32.totalorder %s25, 1
      %p62 = por %p60, %p61
      %p64 = scmp.ne.s32.totalorder %s47, %s63
      %p65 = scmp.eq.s32.totalorder %s25, 0
      %p66 = por %p64, %p65
      %s68 = sadd.s32 %s67, 1
      %p71 = scmp.eq.s32.totalorder %s19, 1
      %p72 = scmp.ne.s32.totalorder %s67, %s69
      %p73 = scmp.eq.s32.totalorder %s19, 0
      %p74 = por %p72, %p73
      %p75 = scmp.ne.s32.totalorder %s67, %s69
      %p76 = scmp.eq.s32.totalorder %s24, 1
      %p77 = por %p75, %p76
      %p78 = scmp.ne.s32.totalorder %s69, %s70
      %p79 = scmp.eq.s32.totalorder %s24, 0
      %p80 = por %p78, %p79
      %p81 = scmp.ne.s32.totalorder %s69, %s70
      %p82 = scmp.eq.s32.totalorder %s25, 1
      %p83 = por %p81, %p82
      %p85 = scmp.ne.s32.totalorder %s70, %s84
      %p86 = scmp.eq.s32.totalorder %s25, 0
      %p87 = por %p85, %p86
      %s89 = sadd.s32 %s88, 1
      %p92 = scmp.eq.s32.totalorder %s19, 1
      %p93 = scmp.ne.s32.totalorder %s88, %s90
      %p94 = scmp.eq.s32.totalorder %s19, 0
      %p95 = por %p93, %p94
      %p96 = scmp.ne.s32.totalorder %s88, %s90
      %p97 = scmp.eq.s32.totalorder %s24, 1
      %p98 = por %p96, %p97
      %p99 = scmp.ne.s32.totalorder %s90, %s91
      %p100 = scmp.eq.s32.totalorder %s24, 0
      %p101 = por %p99, %p100
      %p102 = scmp.ne.s32.totalorder %s90, %s91
      %p103 = scmp.eq.s32.totalorder %s25, 1
      %p104 = por %p102, %p103
      %p106 = scmp.ne.s32.totalorder %s91, %s105
      %p107 = scmp.eq.s32.totalorder %s25, 0
      %p108 = por %p106, %p107
      %s110 = sadd.s32 %s109, 1
      %p113 = scmp.eq.s32.totalorder %s19, 1
      %p114 = scmp.ne.s32.totalorder %s109, %s111
      %p115 = scmp.eq.s32.totalorder %s19, 0
      %p116 = por %p114, %p115
      %p117 = scmp.ne.s32.totalorder %s109, %s111
      %p118 = scmp.eq.s32.totalorder %s24, 1
      %p119 = por %p117, %p118
      %p120 = scmp.ne.s32.totalorder %s111, %s112
      %p121 = scmp.eq.s32.totalorder %s24, 0
      %p122 = por %p120, %p121
      %p123 = scmp.ne.s32.totalorder %s111, %s112
      %p124 = scmp.eq.s32.totalorder %s25, 1
      %p125 = por %p123, %p124
      %p127 = scmp.ne.s32.totalorder %s112, %s126
      %p128 = scmp.eq.s32.totalorder %s25, 0
      %p129 = por %p127, %p128
      %s131 = sadd.s32 %s130, 1
      %p134 = scmp.eq.s32.totalorder %s19, 1
      %p135 = scmp.ne.s32.totalorder %s130, %s132
      %p136 = scmp.eq.s32.totalorder %s19, 0
      %p137 = por %p135, %p136
      %p138 = scmp.ne.s32.totalorder %s130, %s132
      %p139 = scmp.eq.s32.totalorder %s24, 1
      %p140 = por %p138, %p139
      %p141 = scmp.ne.s32.totalorder %s132, %s133
      %p142 = scmp.eq.s32.totalorder %s24, 0
      %p143 = por %p141, %p142
      %p144 = scmp.ne.s32.totalorder %s132, %s133
      %p145 = scmp.eq.s32.totalorder %s25, 1
      %p146 = por %p144, %p145
      %p148 = scmp.ne.s32.totalorder %s133, %s147
      %p149 = scmp.eq.s32.totalorder %s25, 0
      %p150 = por %p148, %p149
      %s151 = ssub.s32 %s26, %s38
      %s152 = ssub.s32 %s27, %s34
      %s153 = sor.u32 %s151, %s152
      %p154 = scmp.eq.s32.totalorder %s153, 0
      %s156 = sadd.s32 %s155, 1
      %s157 = scalar_select %p154, %s155, %s156
      %p160 = pneg %p154
      %p161 = scmp.eq.s32.totalorder %s19, 1
      %p162 = por %p160, %p161
      %p163 = scmp.ne.s32.totalorder %s155, %s158
      %p164 = scmp.eq.s32.totalorder %s19, 0
      %p165 = por %p163, %p164
      %p166 = scmp.ne.s32.totalorder %s155, %s158
      %p167 = scmp.eq.s32.totalorder %s24, 1
      %p168 = por %p166, %p167
      %p169 = scmp.ne.s32.totalorder %s158, %s159
      %p170 = scmp.eq.s32.totalorder %s24, 0
      %p171 = por %p169, %p170
      %p172 = scmp.ne.s32.totalorder %s158, %s159
      %p173 = scmp.eq.s32.totalorder %s25, 1
      %p174 = por %p172, %p173
      %p176 = scmp.ne.s32.totalorder %s159, %s175
      %p177 = scmp.eq.s32.totalorder %s25, 0
      %p178 = por %p176, %p177
      %p179 = scmp.le.s32.totalorder 1, %s19
      %p180 = scmp.lt.s32.totalorder %s19, 3
      %p181 = pnand %p179, %p180
      %p182 = pneg %p181
      // Predicated region
      $region9: #{_lambda_.10} parent=5 // pred_check
        _
      $region10: #{_lambda_.10} parent=5 // pred_check_branch
        %184 = sbr.rel (%p181) target = $region12
      $region11: #{_lambda_.10} parent=5 // pred_region
        %s185 = ssub.s32 %s19, 1
        // Predicated region
        $region13: #{_lambda_.10} parent=11 // pred_check
          %p186 = pneg %p80
        $region14: #{_lambda_.10} parent=11 // pred_check_branch
          %188 = sbr.rel (%p186) target = $region16
        $region15: #{_lambda_.10} parent=11 // pred_region
          %s190 = ssub.s32 256, 256
          %191 = vsyncadd [#allocation6], %s190
          %s192 = sshll.u32 [#allocation5], 4
          %s193 = int_to_ptr.vmem [resolvable:$true] %s192
          %198 = dma.hbm_to_vmem [thread:$0]  %s1, 256, %s193, [#allocation6], 128, 128, 8
        $region16: #{_lambda_.10} parent=11 // pred_fallthru
          _
        // Predicated region
        $region17: #{_lambda_.10} parent=11 // pred_check
          %p199 = pneg %p101
        $region18: #{_lambda_.10} parent=11 // pred_check_branch
          %201 = sbr.rel (%p199) target = $region20
        $region19: #{_lambda_.10} parent=11 // pred_region
          %s203 = ssub.s32 256, 256
          %204 = vsyncadd [#allocation6], %s203
          %s205 = sshll.u32 [#allocation7], 4
          %s206 = int_to_ptr.vmem [resolvable:$true] %s205
          %211 = dma.hbm_to_vmem [thread:$0]  %s2, 256, %s206, [#allocation6], 128, 128, 8
        $region20: #{_lambda_.10} parent=11 // pred_fallthru
          _
        // Predicated region
        $region21: #{_lambda_.10} parent=11 // pred_check
          %p212 = pneg %p122
        $region22: #{_lambda_.10} parent=11 // pred_check_branch
          %214 = sbr.rel (%p212) target = $region24
        $region23: #{_lambda_.10} parent=11 // pred_region
          %s216 = ssub.s32 256, 256
          %217 = vsyncadd [#allocation9], %s216
          %s218 = sshll.u32 [#allocation8], 4
          %s219 = int_to_ptr.vmem [resolvable:$true] %s218
          %224 = dma.hbm_to_vmem [thread:$0]  %s3, 256, %s219, [#allocation9], 128, 128, 8
        $region24: #{_lambda_.10} parent=11 // pred_fallthru
          _
        // Predicated region
        $region25: #{_lambda_.10} parent=11 // pred_check
          %p225 = pneg %p143
        $region26: #{_lambda_.10} parent=11 // pred_check_branch
          %227 = sbr.rel (%p225) target = $region28
        $region27: #{_lambda_.10} parent=11 // pred_region
          %s229 = ssub.s32 256, 256
          %230 = vsyncadd [#allocation9], %s229
          %s231 = sshll.u32 [#allocation10], 4
          %s232 = int_to_ptr.vmem [resolvable:$true] %s231
          %237 = dma.hbm_to_vmem [thread:$0]  %s4, 256, %s232, [#allocation9], 128, 128, 8
        $region28: #{_lambda_.10} parent=11 // pred_fallthru
          _
      $region12: #{_lambda_.10} parent=5 // pred_fallthru
        _
      %p238 = scmp.lt.s32.totalorder %s19, 2
      // Predicated region
      $region29: #{_lambda_.10} parent=5 // pred_check
        %p239 = pneg %p238
      $region30: #{_lambda_.10} parent=5 // pred_check_branch
        %241 = sbr.rel (%p239) target = $region32
      $region31: #{_lambda_.10} parent=5 // pred_region
        // Predicated region
        $region33: #{_lambda_.10} parent=31 // pred_check
          %p242 = pneg %p53
        $region34: #{_lambda_.10} parent=31 // pred_check_branch
          %244 = sbr.rel (%p242) target = $region36
        $region35: #{_lambda_.10} parent=31 // pred_region
          %s245 = sand.u32 %s43, 1
          %s246 = scalar_lea.sflag [#allocation3], %s245
          %s247 = sand.u32 %s43, 1
          %s248 = smul.addr %s247, 16
          %s249 = scalar_lea.vmem [#allocation2], %s248
          %s251 = ssub.s32 256, 256
          %252 = vsyncadd %s246, %s251
          %s253 = smul.addr %s27, 2
          %s254 = smul.addr %s26, 2
          %s255 = sadd.s32 %s253, %s254
          %s256 = smul.addr %s255, 128
          %s257 = scalar_lea.hbm %s0, %s256
          %s258 = sshll.u32 %s249, 4
          %s259 = int_to_ptr.vmem [resolvable:$true] %s258
          %264 = dma.hbm_to_vmem [thread:$0]  %s257, 256, %s259, %s246, 128, 128, 8
        $region36: #{_lambda_.10} parent=31 // pred_fallthru
          _
      $region32: #{_lambda_.10} parent=5 // pred_fallthru
        _
      %p265 = scmp.le.s32.totalorder 1, %s19
      %p266 = scmp.lt.s32.totalorder %s19, 3
      %p267 = pnand %p265, %p266
      %p268 = pneg %p267
      // Predicated region
      $region37: #{_lambda_.10} parent=5 // pred_check
        _
      $region38: #{_lambda_.10} parent=5 // pred_check_branch
        %270 = sbr.rel (%p267) target = $region40
      $region39: #{_lambda_.10} parent=5 // pred_region
        %s271 = ssub.s32 %s19, 1
        %s272 = sand.u32 %s46, 1
        %s273 = scalar_lea.sflag [#allocation3], %s272
        %s274 = sand.u32 %s46, 1
        %s275 = smul.addr %s274, 16
        %s276 = scalar_lea.vmem [#allocation2], %s275
        // Predicated region
        $region41: #{_lambda_.10} parent=39 // pred_check
          %p277 = pneg %p59
        $region42: #{_lambda_.10} parent=39 // pred_check_branch
          %279 = sbr.rel (%p277) target = $region44
        $region43: #{_lambda_.10} parent=39 // pred_region
          %280 = dma.done %s273, 256
        $region44: #{_lambda_.10} parent=39 // pred_fallthru
          _
        // Predicated region
        $region45: #{_lambda_.10} parent=39 // pred_check
          %p281 = pneg %p80
        $region46: #{_lambda_.10} parent=39 // pred_check_branch
          %283 = sbr.rel (%p281) target = $region48
        $region47: #{_lambda_.10} parent=39 // pred_region
          %284 = dma.done [#allocation6], 256
        $region48: #{_lambda_.10} parent=39 // pred_fallthru
          _
        // Predicated region
        $region49: #{_lambda_.10} parent=39 // pred_check
          %p285 = pneg %p101
        $region50: #{_lambda_.10} parent=39 // pred_check_branch
          %287 = sbr.rel (%p285) target = $region52
        $region51: #{_lambda_.10} parent=39 // pred_region
          %288 = dma.done [#allocation6], 256
        $region52: #{_lambda_.10} parent=39 // pred_fallthru
          _
        // Predicated region
        $region53: #{_lambda_.10} parent=39 // pred_check
          %p289 = pneg %p122
        $region54: #{_lambda_.10} parent=39 // pred_check_branch
          %291 = sbr.rel (%p289) target = $region56
        $region55: #{_lambda_.10} parent=39 // pred_region
          %292 = dma.done [#allocation9], 256
        $region56: #{_lambda_.10} parent=39 // pred_fallthru
          _
        // Predicated region
        $region57: #{_lambda_.10} parent=39 // pred_check
          %p293 = pneg %p143
        $region58: #{_lambda_.10} parent=39 // pred_check_branch
          %295 = sbr.rel (%p293) target = $region60
        $region59: #{_lambda_.10} parent=39 // pred_region
          %296 = dma.done [#allocation9], 256
        $region60: #{_lambda_.10} parent=39 // pred_fallthru
          _
        %s297 = sand.u32 %s46, 1
        %s298 = scalar_lea.sflag [#allocation3], %s297
        %s299 = sand.u32 %s46, 1
        %s300 = smul.addr %s299, 16
        %s301 = scalar_lea.vmem [#allocation2], %s300
        %p302 = pneg %p59
        %p303 = pneg %p56
        %p304 = pneg %p80
        %p305 = pneg %p77
        %p306 = pneg %p101
        %p307 = pneg %p98
        %p308 = pneg %p122
        %p309 = pneg %p119
        %p310 = pneg %p143
        %p311 = pneg %p140
        %p312 = pneg %p171
        %p313 = pneg %p168
        %s314 = sand.u32 %s158, 1
        %s315 = scalar_lea.sflag [#allocation4], %s314
        %s316 = sand.u32 %s158, 1
        %s317 = smul.addr %s316, 16
        %s318 = scalar_lea.vmem [#allocation11], %s317
        %v319 = vld [vmem:[%s276] sm:$0xff]
        %v320 = vld [vmem:[%s276 + $0x8] sm:$0xff]
        %323 = vrot.lane.b32.xlu0 %v319, 127
        %v324 = vpop.permute.xlu0 %323
        %325 = vrot.lane.b32.xlu0 %v320, 127
        %v326 = vpop.permute.xlu0 %325
        %329 = vrot.lane.b32.xlu0 %v319, 126
        %v330 = vpop.permute.xlu0 %329
        %331 = vrot.lane.b32.xlu0 %v320, 126
        %v332 = vpop.permute.xlu0 %331
        %v335 = vld [vmem:[#allocation5] sm:$0xff]
        %v336 = vld [vmem:[#allocation5 + $0x8] sm:$0xff]
        %v337 = vld [vmem:[#allocation7] sm:$0xff]
        %v338 = vld [vmem:[#allocation7 + $0x8] sm:$0xff]
        %340 = vset.pattern.permute.xlu0 0
        %341 = vperm.xlu0 %340, %v337
        %v342 = vpop.permute.xlu0 %341
        %345 = vset.pattern.permute.xlu0 0
        %346 = vperm.xlu0 %345, %v338
        %v347 = vpop.permute.xlu0 %346
        %vm349 = vcmask 392192
        %v351 = vsel %vm349, %v335, 0
        %v354 = vsel %vm349, %v336, 0
        %356 = vmatprep.subr.mxu0 0.0
        %357 = vmatpush1.msra.mxu0 %v319
        %358 = vmatprep.subr.mxu0 0.0
        %359 = vmatpush1.msra.mxu0 %v320
        %360 = vmatprep.subr.mxu0 0.0
        %361 = vmatpush1.msra.mxu0 %v324
        %362 = vmatprep.subr.mxu0 0.0
        %363 = vmatpush1.msra.mxu0 %v326
        %364 = vmatprep.subr.mxu0 0.0
        %365 = vmatpush1.msra.mxu0 %v330
        %366 = vmatprep.subr.mxu0 0.0
        %367 = vmatpush1.msra.mxu0 %v332
        %368 = vmatprep.subr.mxu0 0.0
        %369 = vmatpush1.msra.mxu0 0.0
        %370 = vmatprep.subr.mxu0 0.0
        %371 = vmatpush1.msra.mxu0 0.0
        %372 = vmatprep.subr.mxu0 0.0
        %373 = vmatpush1.msra.mxu0 0.0
        %374 = vmatprep.subr.mxu0 0.0
        %375 = vmatpush1.msra.mxu0 0.0
        %376 = vmatprep.subr.mxu0 0.0
        %377 = vmatpush1.msra.mxu0 0.0
        %378 = vmatprep.subr.mxu0 0.0
        %379 = vmatpush1.msra.mxu0 0.0
        %380 = vmatprep.subr.mxu0 0.0
        %381 = vmatpush1.msra.mxu0 0.0
        %382 = vmatprep.subr.mxu0 0.0
        %383 = vmatpush1.msra.mxu0 0.0
        %384 = vmatprep.subr.mxu0 0.0
        %385 = vmatpush1.msra.mxu0 0.0
        %386 = vmatprep.subr.mxu0 0.0
        %387 = vmatpush1.msra.mxu0 0.0
        %388 = vmatprep.subr.mxu0 0.0
        %389 = vmatpush1.msra.mxu0 0.0
        %390 = vmatprep.subr.mxu0 0.0
        %391 = vmatpush1.msra.mxu0 0.0
        %392 = vmatprep.subr.mxu0 0.0
        %393 = vmatpush1.msra.mxu0 0.0
        %394 = vmatprep.subr.mxu0 0.0
        %395 = vmatpush1.msra.mxu0 0.0
        %396 = vmatprep.subr.mxu0 0.0
        %397 = vmatpush1.msra.mxu0 0.0
        %398 = vmatprep.subr.mxu0 0.0
        %399 = vmatpush1.msra.mxu0 0.0
        %400 = vmatprep.subr.mxu0 0.0
        %401 = vmatpush1.msra.mxu0 0.0
        %402 = vmatprep.subr.mxu0 0.0
        %403 = vmatpush1.msra.mxu0 0.0
        %404 = vmatprep.subr.mxu0 0.0
        %405 = vmatpush1.msra.mxu0 0.0
        %406 = vmatprep.subr.mxu0 0.0
        %407 = vmatpush1.msra.mxu0 0.0
        %408 = vmatprep.subr.mxu0 0.0
        %409 = vmatpush1.msra.mxu0 0.0
        %410 = vmatprep.subr.mxu0 0.0
        %411 = vmatpush1.msra.mxu0 0.0
        %412 = vmatprep.subr.mxu0 0.0
        %413 = vmatpush1.msra.mxu0 0.0
        %414 = vmatprep.subr.mxu0 0.0
        %415 = vmatpush1.msra.mxu0 0.0
        %416 = vmatprep.subr.mxu0 0.0
        %417 = vmatpush1.msra.mxu0 0.0
        %418 = vmatprep.subr.mxu0 0.0
        %419 = vmatpush1.msra.mxu0 0.0
        %420 = vmatprep.mubr.f32.mxu0 0.0
        %421 = vmatmul.mubr.f32.gmra.mrb[0].mxu0 %v351
        %v422 = vpop.f32.mrb[0].mxu0
        %v423 = vadd.f32 %v342, %v422
        %v424 = vpop.f32.mrb[0].mxu0
        %425 = vmatprep.mubr.f32.mxu0 0.0
        %426 = vmatmul.mubr.f32.gmra.mrb[0].mxu0 %v354
        %v427 = vpop.f32.mrb[0].mxu0
        %v428 = vadd.f32 %v347, %v427
        %v429 = vpop.f32.mrb[0].mxu0
        %430 = vdwg.mxu0
        %vm431 = vcmp.ge.f32.partialorder %v423, 0.0
        %vm432 = vcmp.ge.f32.partialorder %v428, 0.0
        %v433 = vmul.f32 %v423, 0.2
        %v434 = vmul.f32 %v428, 0.2
        %v435 = vsel %vm431, %v423, %v433
        %v436 = vsel %vm432, %v428, %v434
        %s437 = smul.u32 %s29, 4
        %s438 = ssub.s32 %s437, 1
        %v439 = vlaneseq
        %v440 = vand.u32 %v439, 127
        %v441 = vstv %s438
        %v442 = vadd.s32 %v441, %v440
        %vm443 = vcmp.ge.s32.totalorder %v442, 0
        %vm444 = vcmp.lt.s32.totalorder %v442, 4
        %vm445 = vmand %vm443, %vm444
        %v446 = vsel %vm445, 1, 0
        %vm447 = vcmp.eq.s32.totalorder %v446, 1
        %v448 = vsel %vm447, %v435, 0.0
        %v449 = vsel %vm447, %v436, 0.0
        %452 = vrot.lane.b32.xlu0 %v448, 127
        %v453 = vpop.permute.xlu0 %452
        %454 = vrot.lane.b32.xlu0 %v449, 127
        %v455 = vpop.permute.xlu0 %454
        %458 = vrot.lane.b32.xlu0 %v448, 126
        %v459 = vpop.permute.xlu0 %458
        %460 = vrot.lane.b32.xlu0 %v449, 126
        %v461 = vpop.permute.xlu0 %460
        %v464 = vld [vmem:[#allocation8] sm:$0xff]
        %v465 = vld [vmem:[#allocation8 + $0x8] sm:$0xff]
        %v466 = vld [vmem:[#allocation10] sm:$0xff]
        %v467 = vld [vmem:[#allocation10 + $0x8] sm:$0xff]
        %469 = vset.pattern.permute.xlu0 0
        %470 = vperm.xlu0 %469, %v466
        %v471 = vpop.permute.xlu0 %470
        %474 = vset.pattern.permute.xlu0 0
        %475 = vperm.xlu0 %474, %v467
        %v476 = vpop.permute.xlu0 %475
        %v479 = vsel %vm349, %v464, 0
        %v482 = vsel %vm349, %v465, 0
        %484 = vmatprep.subr.mxu0 0.0
        %485 = vmatpush1.msra.mxu0 %v448
        %486 = vmatprep.subr.mxu0 0.0
        %487 = vmatpush1.msra.mxu0 %v449
        %488 = vmatprep.subr.mxu0 0.0
        %489 = vmatpush1.msra.mxu0 %v453
        %490 = vmatprep.subr.mxu0 0.0
        %491 = vmatpush1.msra.mxu0 %v455
        %492 = vmatprep.subr.mxu0 0.0
        %493 = vmatpush1.msra.mxu0 %v459
        %494 = vmatprep.subr.mxu0 0.0
        %495 = vmatpush1.msra.mxu0 %v461
        %496 = vmatprep.subr.mxu0 0.0
        %497 = vmatpush1.msra.mxu0 0.0
        %498 = vmatprep.subr.mxu0 0.0
        %499 = vmatpush1.msra.mxu0 0.0
        %500 = vmatprep.subr.mxu0 0.0
        %501 = vmatpush1.msra.mxu0 0.0
        %502 = vmatprep.subr.mxu0 0.0
        %503 = vmatpush1.msra.mxu0 0.0
        %504 = vmatprep.subr.mxu0 0.0
        %505 = vmatpush1.msra.mxu0 0.0
        %506 = vmatprep.subr.mxu0 0.0
        %507 = vmatpush1.msra.mxu0 0.0
        %508 = vmatprep.subr.mxu0 0.0
        %509 = vmatpush1.msra.mxu0 0.0
        %510 = vmatprep.subr.mxu0 0.0
        %511 = vmatpush1.msra.mxu0 0.0
        %512 = vmatprep.subr.mxu0 0.0
        %513 = vmatpush1.msra.mxu0 0.0
        %514 = vmatprep.subr.mxu0 0.0
        %515 = vmatpush1.msra.mxu0 0.0
        %516 = vmatprep.subr.mxu0 0.0
        %517 = vmatpush1.msra.mxu0 0.0
        %518 = vmatprep.subr.mxu0 0.0
        %519 = vmatpush1.msra.mxu0 0.0
        %520 = vmatprep.subr.mxu0 0.0
        %521 = vmatpush1.msra.mxu0 0.0
        %522 = vmatprep.subr.mxu0 0.0
        %523 = vmatpush1.msra.mxu0 0.0
        %524 = vmatprep.subr.mxu0 0.0
        %525 = vmatpush1.msra.mxu0 0.0
        %526 = vmatprep.subr.mxu0 0.0
        %527 = vmatpush1.msra.mxu0 0.0
        %528 = vmatprep.subr.mxu0 0.0
        %529 = vmatpush1.msra.mxu0 0.0
        %530 = vmatprep.subr.mxu0 0.0
        %531 = vmatpush1.msra.mxu0 0.0
        %532 = vmatprep.subr.mxu0 0.0
        %533 = vmatpush1.msra.mxu0 0.0
        %534 = vmatprep.subr.mxu0 0.0
        %535 = vmatpush1.msra.mxu0 0.0
        %536 = vmatprep.subr.mxu0 0.0
        %537 = vmatpush1.msra.mxu0 0.0
        %538 = vmatprep.subr.mxu0 0.0
        %539 = vmatpush1.msra.mxu0 0.0
        %540 = vmatprep.subr.mxu0 0.0
        %541 = vmatpush1.msra.mxu0 0.0
        %542 = vmatprep.subr.mxu0 0.0
        %543 = vmatpush1.msra.mxu0 0.0
        %544 = vmatprep.subr.mxu0 0.0
        %545 = vmatpush1.msra.mxu0 0.0
        %546 = vmatprep.subr.mxu0 0.0
        %547 = vmatpush1.msra.mxu0 0.0
        %548 = vmatprep.mubr.f32.mxu0 0.0
        %549 = vmatmul.mubr.f32.gmra.mrb[0].mxu0 %v479
        %v550 = vpop.f32.mrb[0].mxu0
        %v551 = vadd.f32 %v471, %v550
        %v552 = vpop.f32.mrb[0].mxu0
        %553 = vmatprep.mubr.f32.mxu0 0.0
        %554 = vmatmul.mubr.f32.gmra.mrb[0].mxu0 %v482
        %v555 = vpop.f32.mrb[0].mxu0
        %v556 = vadd.f32 %v476, %v555
        %v557 = vpop.f32.mrb[0].mxu0
        %558 = vdwg.mxu0
        %vm559 = vcmp.ge.f32.partialorder %v551, 0.0
        %vm560 = vcmp.ge.f32.partialorder %v556, 0.0
        %v561 = vmul.f32 %v551, 0.2
        %v562 = vmul.f32 %v556, 0.2
        %v563 = vsel %vm559, %v551, %v561
        %v564 = vsel %vm560, %v556, %v562
        %567 = vrot.lane.b32.xlu0 %v563, 2
        %v568 = vpop.permute.xlu0 %567
        %569 = vrot.lane.b32.xlu0 %v564, 2
        %v570 = vpop.permute.xlu0 %569
        %v573 = vadd.f32 %v319, %v568
        %v574 = vadd.f32 %v320, %v570
        %577 = vrot.lane.b32.xlu0 %v573, 126
        %v578 = vpop.permute.xlu0 %577
        %579 = vrot.lane.b32.xlu0 %v574, 126
        %v580 = vpop.permute.xlu0 %579
        %vm583 = vcmask 31744
        %584 = vst.msk [vmem:[%s318] sm:$0xff] %vm583, %v578
        %585 = vst.msk [vmem:[%s318 + $0x8] sm:$0xff] %vm583, %v580
        %s586 = sand.u32 %s158, 1
        %s587 = scalar_lea.sflag [#allocation4], %s586
        %s588 = sand.u32 %s158, 1
        %s589 = smul.addr %s588, 16
        %s590 = scalar_lea.vmem [#allocation11], %s589
        // Predicated region
        $region61: #{_lambda_.10} parent=39 // pred_check
          %p591 = pneg %p168
        $region62: #{_lambda_.10} parent=39 // pred_check_branch
          %593 = sbr.rel (%p591) target = $region64
        $region63: #{_lambda_.10} parent=39 // pred_region
          %s595 = ssub.s32 256, 256
          %596 = vsyncadd %s587, %s595
          %s597 = smul.addr %s28, 2
          %s598 = sadd.s32 %s29, %s597
          %s599 = smul.addr %s598, 128
          %s600 = scalar_lea.hbm %s5, %s599
          %s601 = sshll.u32 %s590, 4
          %s602 = int_to_ptr.vmem [resolvable:$true] %s601
          %607 = dma.vmem_to_hbm [thread:$0]  %s602, 256, %s600, %s587, 128, 128, 8
        $region64: #{_lambda_.10} parent=39 // pred_fallthru
          _
      $region40: #{_lambda_.10} parent=5 // pred_fallthru
        _
      %p608 = scmp.le.s32.totalorder 2, %s19
      // Predicated region
      $region65: #{_lambda_.10} parent=5 // pred_check
        %p609 = pneg %p608
      $region66: #{_lambda_.10} parent=5 // pred_check_branch
        %611 = sbr.rel (%p609) target = $region68
      $region67: #{_lambda_.10} parent=5 // pred_region
        %s612 = ssub.s32 %s19, 2
        // Predicated region
        $region69: #{_lambda_.10} parent=67 // pred_check
          %p613 = pneg %p174
        $region70: #{_lambda_.10} parent=67 // pred_check_branch
          %615 = sbr.rel (%p613) target = $region72
        $region71: #{_lambda_.10} parent=67 // pred_region
          %s616 = sand.u32 %s159, 1
          %s617 = scalar_lea.sflag [#allocation4], %s616
          %s618 = sand.u32 %s159, 1
          %s619 = smul.addr %s618, 16
          %s620 = scalar_lea.vmem [#allocation11], %s619
          %621 = dma.done %s617, 256
        $region72: #{_lambda_.10} parent=67 // pred_fallthru
          _
      $region68: #{_lambda_.10} parent=5 // pred_fallthru
        _
    $region6: #{_lambda_.10} parent=1 // loop_footer
      %s23 = sadd.s32 1, %s19
    $region7: #{_lambda_.10} parent=1 // loop_footer_branch
      %18 = sbr.rel target = $region3
    $region8: #{_lambda_.10} parent=1 // loop_exit
      _
    %622 = vsyncpa [#allocation3], 1
    %s623 = scalar_lea.sflag [#allocation3], 1
    %624 = vsyncpa %s623, 1
    %625 = vsyncpa [#allocation6], 1
    %626 = vsyncpa [#allocation9], 1
    %627 = vsyncpa [#allocation4], 1
    %s628 = scalar_lea.sflag [#allocation4], 1
    %629 = vsyncpa %s628, 1

// kernel: _lambda_.9
$region0: #{_lambda_.9}
  #allocation0 [shape = 'u32[]', space=smem, size = 0x4, offset = 0x4, fixed_abs, tag = 'smem constant byte address 0x4 - core index']
  #allocation1 [shape = 'u32[144,128]{1,0:T(1,128)}', space=vmem, size = 0x12000, scoped, tag = 'internal scratch']
  %s0 = inlined_call_operand.hbm [shape: f32[2,1,8,8], index: 0, kind: input, shape index: {}]
  %s1 = inlined_call_operand.hbm [shape: f32[16,40], index: 1, kind: input, shape index: {}]
  %s2 = inlined_call_operand.hbm [shape: f32[16,1], index: 2, kind: input, shape index: {}]
  %s3 = inlined_call_operand.hbm [shape: f32[2,16,4], index: 3, kind: output, shape index: {}]
  %s4 = sld [smem:[#allocation0]]
  $region57: #{_lambda_.9} parent=0
    _
  %s6 = ssub.s32 1, %s4
  %s7 = scalar_select 0, %s6, %s4
  $region1: #{_lambda_.9} parent=0
    #allocation2 [shape = 'u8[8192]{0}', space=vmem, size = 0x2000, scoped, tag = 'input window, operand 0']
    #allocation3 [shape = 's32[2]{0}', space=sflag, size = 0x8, scoped, tag = 'scoped memory for _lambda_.9']
    #allocation4 [shape = 's32[2]{0}', space=sflag, size = 0x8, scoped, tag = 'scoped memory for _lambda_.9']
    #allocation5 [shape = 'u8[8192]{0}', space=vmem, size = 0x2000, scoped, tag = 'input window, operand 1, single buffered']
    #allocation6 [shape = 's32[1]{0}', space=sflag, size = 0x4, scoped, tag = 'scoped memory for _lambda_.9']
    #allocation7 [shape = 'u8[8192]{0}', space=vmem, size = 0x2000, scoped, tag = 'input window, operand 2, single buffered']
    #allocation8 [shape = 'u8[16384]{0}', space=vmem, size = 0x4000, scoped, tag = 'output window, operand 0']
    %8 = vsyncpa [#allocation3], 0
    %s9 = scalar_lea.sflag [#allocation3], 1
    %10 = vsyncpa %s9, 0
    %11 = vsyncpa [#allocation6], 0
    %12 = vsyncpa [#allocation4], 0
    %s13 = scalar_lea.sflag [#allocation4], 1
    %14 = vsyncpa %s13, 0
    loop: start=0, step=1, limit=4
    $region2: #{_lambda_.9} parent=1 // loop_pre_header
      _
    $region3: #{_lambda_.9} parent=1 // loop_header
      %s16 = sphi 0, %s20
      %p17 = scmp.ge.s32.totalorder %s16, 4
      %s23 = sphi 0, %s35
      %s24 = sphi 0, %s31
      %s25 = sphi 0, %s23
      %s26 = sphi 0, %s24
      %s27 = sphi 0, %s25
      %s28 = sphi 0, %s26
      %s40 = sphi 0, %s42
      %s43 = sphi 0, %s40
      %s44 = sphi 0, %s43
      %s60 = sphi 0, %s44
      %s64 = sphi 0, %s64
      %s66 = sphi 0, %s64
      %s67 = sphi 0, %s66
      %s81 = sphi 0, %s67
      %s85 = sphi 0, %s85
      %s87 = sphi 0, %s85
      %s88 = sphi 0, %s87
      %s102 = sphi 0, %s88
      %s110 = sphi 0, %s112
      %s113 = sphi 0, %s110
      %s114 = sphi 0, %s113
      %s130 = sphi 0, %s114
    $region4: #{_lambda_.9} parent=1 // loop_header_branch
      %19 = sbr.rel (%p17) target = $region8
    $region5: #{_lambda_.9} parent=1 // loop_body
      %s21 = ssub.s32 %s16, 1
      %s22 = ssub.s32 %s16, 2
      %s29 = sadd.s32 1, %s24
      %p30 = scmp.ge.s32.totalorder %s29, 1
      %s31 = scalar_select %p30, 0, %s29
      %s32 = sadd.s32 1, %s23
      %s33 = scalar_select %p30, %s32, %s23
      %p34 = scmp.ge.s32.totalorder %s33, 2
      %s35 = scalar_select %p34, 0, %s33
      %s36 = ssub.s32 %s23, %s35
      %s37 = ssub.s32 %s24, %s31
      %s38 = sor.u32 %s36, %s37
      %p39 = scmp.eq.s32.totalorder %s38, 0
      %s41 = sadd.s32 %s40, 1
      %s42 = scalar_select %p39, %s40, %s41
      %p45 = pneg %p39
      %p46 = scmp.eq.s32.totalorder %s16, 1
      %p47 = por %p45, %p46
      %p48 = scmp.ne.s32.totalorder %s40, %s43
      %p49 = scmp.eq.s32.totalorder %s16, 0
      %p50 = por %p48, %p49
      %p51 = scmp.ne.s32.totalorder %s40, %s43
      %p52 = scmp.eq.s32.totalorder %s21, 1
      %p53 = por %p51, %p52
      %p54 = scmp.ne.s32.totalorder %s43, %s44
      %p55 = scmp.eq.s32.totalorder %s21, 0
      %p56 = por %p54, %p55
      %p57 = scmp.ne.s32.totalorder %s43, %s44
      %p58 = scmp.eq.s32.totalorder %s22, 1
      %p59 = por %p57, %p58
      %p61 = scmp.ne.s32.totalorder %s44, %s60
      %p62 = scmp.eq.s32.totalorder %s22, 0
      %p63 = por %p61, %p62
      %s65 = sadd.s32 %s64, 1
      %p68 = scmp.eq.s32.totalorder %s16, 1
      %p69 = scmp.ne.s32.totalorder %s64, %s66
      %p70 = scmp.eq.s32.totalorder %s16, 0
      %p71 = por %p69, %p70
      %p72 = scmp.ne.s32.totalorder %s64, %s66
      %p73 = scmp.eq.s32.totalorder %s21, 1
      %p74 = por %p72, %p73
      %p75 = scmp.ne.s32.totalorder %s66, %s67
      %p76 = scmp.eq.s32.totalorder %s21, 0
      %p77 = por %p75, %p76
      %p78 = scmp.ne.s32.totalorder %s66, %s67
      %p79 = scmp.eq.s32.totalorder %s22, 1
      %p80 = por %p78, %p79
      %p82 = scmp.ne.s32.totalorder %s67, %s81
      %p83 = scmp.eq.s32.totalorder %s22, 0
      %p84 = por %p82, %p83
      %s86 = sadd.s32 %s85, 1
      %p89 = scmp.eq.s32.totalorder %s16, 1
      %p90 = scmp.ne.s32.totalorder %s85, %s87
      %p91 = scmp.eq.s32.totalorder %s16, 0
      %p92 = por %p90, %p91
      %p93 = scmp.ne.s32.totalorder %s85, %s87
      %p94 = scmp.eq.s32.totalorder %s21, 1
      %p95 = por %p93, %p94
      %p96 = scmp.ne.s32.totalorder %s87, %s88
      %p97 = scmp.eq.s32.totalorder %s21, 0
      %p98 = por %p96, %p97
      %p99 = scmp.ne.s32.totalorder %s87, %s88
      %p100 = scmp.eq.s32.totalorder %s22, 1
      %p101 = por %p99, %p100
      %p103 = scmp.ne.s32.totalorder %s88, %s102
      %p104 = scmp.eq.s32.totalorder %s22, 0
      %p105 = por %p103, %p104
      %s106 = ssub.s32 %s23, %s35
      %s107 = ssub.s32 %s24, %s31
      %s108 = sor.u32 %s106, %s107
      %p109 = scmp.eq.s32.totalorder %s108, 0
      %s111 = sadd.s32 %s110, 1
      %s112 = scalar_select %p109, %s110, %s111
      %p115 = pneg %p109
      %p116 = scmp.eq.s32.totalorder %s16, 1
      %p117 = por %p115, %p116
      %p118 = scmp.ne.s32.totalorder %s110, %s113
      %p119 = scmp.eq.s32.totalorder %s16, 0
      %p120 = por %p118, %p119
      %p121 = scmp.ne.s32.totalorder %s110, %s113
      %p122 = scmp.eq.s32.totalorder %s21, 1
      %p123 = por %p121, %p122
      %p124 = scmp.ne.s32.totalorder %s113, %s114
      %p125 = scmp.eq.s32.totalorder %s21, 0
      %p126 = por %p124, %p125
      %p127 = scmp.ne.s32.totalorder %s113, %s114
      %p128 = scmp.eq.s32.totalorder %s22, 1
      %p129 = por %p127, %p128
      %p131 = scmp.ne.s32.totalorder %s114, %s130
      %p132 = scmp.eq.s32.totalorder %s22, 0
      %p133 = por %p131, %p132
      %p134 = scmp.le.s32.totalorder 1, %s16
      %p135 = scmp.lt.s32.totalorder %s16, 3
      %p136 = pnand %p134, %p135
      %p137 = pneg %p136
      // Predicated region
      $region9: #{_lambda_.9} parent=5 // pred_check
        _
      $region10: #{_lambda_.9} parent=5 // pred_check_branch
        %139 = sbr.rel (%p136) target = $region12
      $region11: #{_lambda_.9} parent=5 // pred_region
        %s140 = ssub.s32 %s16, 1
        // Predicated region
        $region13: #{_lambda_.9} parent=11 // pred_check
          %p141 = pneg %p77
        $region14: #{_lambda_.9} parent=11 // pred_check_branch
          %143 = sbr.rel (%p141) target = $region16
        $region15: #{_lambda_.9} parent=11 // pred_region
          %s145 = ssub.s32 256, 256
          %146 = vsyncadd [#allocation6], %s145
          %s147 = sshll.u32 [#allocation5], 4
          %s148 = int_to_ptr.vmem [resolvable:$true] %s147
          %153 = dma.hbm_to_vmem [thread:$0]  %s1, 256, %s148, [#allocation6], 128, 128, 8
        $region16: #{_lambda_.9} parent=11 // pred_fallthru
          _
        // Predicated region
        $region17: #{_lambda_.9} parent=11 // pred_check
          %p154 = pneg %p98
        $region18: #{_lambda_.9} parent=11 // pred_check_branch
          %156 = sbr.rel (%p154) target = $region20
        $region19: #{_lambda_.9} parent=11 // pred_region
          %s158 = ssub.s32 256, 256
          %159 = vsyncadd [#allocation6], %s158
          %s160 = sshll.u32 [#allocation7], 4
          %s161 = int_to_ptr.vmem [resolvable:$true] %s160
          %166 = dma.hbm_to_vmem [thread:$0]  %s2, 256, %s161, [#allocation6], 128, 128, 8
        $region20: #{_lambda_.9} parent=11 // pred_fallthru
          _
      $region12: #{_lambda_.9} parent=5 // pred_fallthru
        _
      %p167 = scmp.lt.s32.totalorder %s16, 2
      // Predicated region
      $region21: #{_lambda_.9} parent=5 // pred_check
        %p168 = pneg %p167
      $region22: #{_lambda_.9} parent=5 // pred_check_branch
        %170 = sbr.rel (%p168) target = $region24
      $region23: #{_lambda_.9} parent=5 // pred_region
        // Predicated region
        $region25: #{_lambda_.9} parent=23 // pred_check
          %p171 = pneg %p50
        $region26: #{_lambda_.9} parent=23 // pred_check_branch
          %173 = sbr.rel (%p171) target = $region28
        $region27: #{_lambda_.9} parent=23 // pred_region
          %s174 = sand.u32 %s40, 1
          %s175 = scalar_lea.sflag [#allocation3], %s174
          %s176 = sand.u32 %s40, 1
          %s177 = smul.addr %s176, 8
          %s178 = scalar_lea.vmem [#allocation2], %s177
          %s180 = ssub.s32 128, 128
          %181 = vsyncadd %s175, %s180
          %s182 = sadd.s32 %s24, %s23
          %s183 = smul.addr %s182, 128
          %s184 = scalar_lea.hbm %s0, %s183
          %s186 = sshll.u32 %s178, 4
          %s187 = int_to_ptr.vmem [resolvable:$true] %s186
          %189 = dma.hbm_to_vmem [thread:$0]  %s184, 128, %s187, %s175
        $region28: #{_lambda_.9} parent=23 // pred_fallthru
          _
      $region24: #{_lambda_.9} parent=5 // pred_fallthru
        _
      %p190 = scmp.le.s32.totalorder 1, %s16
      %p191 = scmp.lt.s32.totalorder %s16, 3
      %p192 = pnand %p190, %p191
      %p193 = pneg %p192
      // Predicated region
      $region29: #{_lambda_.9} parent=5 // pred_check
        _
      $region30: #{_lambda_.9} parent=5 // pred_check_branch
        %195 = sbr.rel (%p192) target = $region32
      $region31: #{_lambda_.9} parent=5 // pred_region
        %s196 = ssub.s32 %s16, 1
        %s197 = sand.u32 %s43, 1
        %s198 = scalar_lea.sflag [#allocation3], %s197
        %s199 = sand.u32 %s43, 1
        %s200 = smul.addr %s199, 8
        %s201 = scalar_lea.vmem [#allocation2], %s200
        // Predicated region
        $region33: #{_lambda_.9} parent=31 // pred_check
          %p202 = pneg %p56
        $region34: #{_lambda_.9} parent=31 // pred_check_branch
          %204 = sbr.rel (%p202) target = $region36
        $region35: #{_lambda_.9} parent=31 // pred_region
          %205 = dma.done %s198, 128
        $region36: #{_lambda_.9} parent=31 // pred_fallthru
          _
        // Predicated region
        $region37: #{_lambda_.9} parent=31 // pred_check
          %p206 = pneg %p77
        $region38: #{_lambda_.9} parent=31 // pred_check_branch
          %208 = sbr.rel (%p206) target = $region40
        $region39: #{_lambda_.9} parent=31 // pred_region
          %209 = dma.done [#allocation6], 256
        $region40: #{_lambda_.9} parent=31 // pred_fallthru
          _
        // Predicated region
        $region41: #{_lambda_.9} parent=31 // pred_check
          %p210 = pneg %p98
        $region42: #{_lambda_.9} parent=31 // pred_check_branch
          %212 = sbr.rel (%p210) target = $region44
        $region43: #{_lambda_.9} parent=31 // pred_region
          %213 = dma.done [#allocation6], 256
        $region44: #{_lambda_.9} parent=31 // pred_fallthru
          _
        %s214 = sand.u32 %s43, 1
        %s215 = scalar_lea.sflag [#allocation3], %s214
        %s216 = sand.u32 %s43, 1
        %s217 = smul.addr %s216, 8
        %s218 = scalar_lea.vmem [#allocation2], %s217
        %p219 = pneg %p56
        %p220 = pneg %p53
        %p221 = pneg %p77
        %p222 = pneg %p74
        %p223 = pneg %p98
        %p224 = pneg %p95
        %p225 = pneg %p126
        %p226 = pneg %p123
        %s227 = sand.u32 %s113, 1
        %s228 = scalar_lea.sflag [#allocation4], %s227
        %s229 = sand.u32 %s113, 1
        %s230 = smul.addr %s229, 16
        %s231 = scalar_lea.vmem [#allocation8], %s230
        %v232 = vld [vmem:[%s201] sm:$0xff]
        %234 = vrot.lane.b32.xlu0 %v232, 127
        %v235 = vpop.permute.xlu0 %234
        %237 = vrot.lane.b32.xlu0 %v232, 126
        %v238 = vpop.permute.xlu0 %237
        %240 = vrot.lane.b32.xlu0 %v232, 125
        %v241 = vpop.permute.xlu0 %240
        %243 = vrot.lane.b32.xlu0 %v232, 124
        %v244 = vpop.permute.xlu0 %243
        %v246 = vld [vmem:[#allocation5] sm:$0xff]
        %v247 = vld [vmem:[#allocation5 + $0x8] sm:$0xff]
        %v248 = vld [vmem:[#allocation7] sm:$0xff]
        %v249 = vld [vmem:[#allocation7 + $0x8] sm:$0xff]
        %251 = vset.pattern.permute.xlu0 0
        %252 = vperm.xlu0 %251, %v248
        %v253 = vpop.permute.xlu0 %252
        %256 = vset.pattern.permute.xlu0 0
        %257 = vperm.xlu0 %256, %v249
        %v258 = vpop.permute.xlu0 %257
        %vm260 = vcmask 326656
        %v262 = vsel %vm260, %v246, 0
        %v265 = vsel %vm260, %v247, 0
        %267 = vmatprep.subr.mxu0 0.0
        %268 = vmatpush1.msra.mxu0 %v232
        %269 = vmatprep.subr.mxu0 0.0
        %270 = vmatpush1.msra.mxu0 %v235
        %271 = vmatprep.subr.mxu0 0.0
        %272 = vmatpush1.msra.mxu0 %v238
        %273 = vmatprep.subr.mxu0 0.0
        %274 = vmatpush1.msra.mxu0 %v241
        %275 = vmatprep.subr.mxu0 0.0
        %276 = vmatpush1.msra.mxu0 %v244
        %277 = vmatprep.subr.mxu0 0.0
        %278 = vmatpush1.msra.mxu0 0.0
        %279 = vmatprep.subr.mxu0 0.0
        %280 = vmatpush1.msra.mxu0 0.0
        %281 = vmatprep.subr.mxu0 0.0
        %282 = vmatpush1.msra.mxu0 0.0
        %283 = vmatprep.subr.mxu0 0.0
        %284 = vmatpush1.msra.mxu0 0.0
        %285 = vmatprep.subr.mxu0 0.0
        %286 = vmatpush1.msra.mxu0 0.0
        %287 = vmatprep.subr.mxu0 0.0
        %288 = vmatpush1.msra.mxu0 0.0
        %289 = vmatprep.subr.mxu0 0.0
        %290 = vmatpush1.msra.mxu0 0.0
        %291 = vmatprep.subr.mxu0 0.0
        %292 = vmatpush1.msra.mxu0 0.0
        %293 = vmatprep.subr.mxu0 0.0
        %294 = vmatpush1.msra.mxu0 0.0
        %295 = vmatprep.subr.mxu0 0.0
        %296 = vmatpush1.msra.mxu0 0.0
        %297 = vmatprep.subr.mxu0 0.0
        %298 = vmatpush1.msra.mxu0 0.0
        %299 = vmatprep.subr.mxu0 0.0
        %300 = vmatpush1.msra.mxu0 0.0
        %301 = vmatprep.subr.mxu0 0.0
        %302 = vmatpush1.msra.mxu0 0.0
        %303 = vmatprep.subr.mxu0 0.0
        %304 = vmatpush1.msra.mxu0 0.0
        %305 = vmatprep.subr.mxu0 0.0
        %306 = vmatpush1.msra.mxu0 0.0
        %307 = vmatprep.subr.mxu0 0.0
        %308 = vmatpush1.msra.mxu0 0.0
        %309 = vmatprep.subr.mxu0 0.0
        %310 = vmatpush1.msra.mxu0 0.0
        %311 = vmatprep.subr.mxu0 0.0
        %312 = vmatpush1.msra.mxu0 0.0
        %313 = vmatprep.subr.mxu0 0.0
        %314 = vmatpush1.msra.mxu0 0.0
        %315 = vmatprep.subr.mxu0 0.0
        %316 = vmatpush1.msra.mxu0 0.0
        %317 = vmatprep.subr.mxu0 0.0
        %318 = vmatpush1.msra.mxu0 0.0
        %319 = vmatprep.subr.mxu0 0.0
        %320 = vmatpush1.msra.mxu0 0.0
        %321 = vmatprep.subr.mxu0 0.0
        %322 = vmatpush1.msra.mxu0 0.0
        %323 = vmatprep.subr.mxu0 0.0
        %324 = vmatpush1.msra.mxu0 0.0
        %325 = vmatprep.subr.mxu0 0.0
        %326 = vmatpush1.msra.mxu0 0.0
        %327 = vmatprep.subr.mxu0 0.0
        %328 = vmatpush1.msra.mxu0 0.0
        %329 = vmatprep.subr.mxu0 0.0
        %330 = vmatpush1.msra.mxu0 0.0
        %331 = vmatprep.mubr.f32.mxu0 0.0
        %332 = vmatmul.mubr.f32.gmra.mrb[0].mxu0 %v262
        %v333 = vpop.f32.mrb[0].mxu0
        %v334 = vadd.f32 %v253, %v333
        %v335 = vpop.f32.mrb[0].mxu0
        %336 = vmatprep.mubr.f32.mxu0 0.0
        %337 = vmatmul.mubr.f32.gmra.mrb[0].mxu0 %v265
        %v338 = vpop.f32.mrb[0].mxu0
        %v339 = vadd.f32 %v258, %v338
        %v340 = vpop.f32.mrb[0].mxu0
        %341 = vdwg.mxu0
        %vm342 = vcmp.ge.f32.partialorder %v334, 0.0
        %vm343 = vcmp.ge.f32.partialorder %v339, 0.0
        %v344 = vmul.f32 %v334, 0.2
        %v345 = vmul.f32 %v339, 0.2
        %v346 = vsel %vm342, %v334, %v344
        %v347 = vsel %vm343, %v339, %v345
        %vm348 = vcmask 31744
        %349 = vst.msk [vmem:[%s231] sm:$0xff] %vm348, %v346
        %350 = vst.msk [vmem:[%s231 + $0x8] sm:$0xff] %vm348, %v347
        %s351 = sand.u32 %s113, 1
        %s352 = scalar_lea.sflag [#allocation4], %s351
        %s353 = sand.u32 %s113, 1
        %s354 = smul.addr %s353, 16
        %s355 = scalar_lea.vmem [#allocation8], %s354
        // Predicated region
        $region45: #{_lambda_.9} parent=31 // pred_check
          %p356 = pneg %p123
        $region46: #{_lambda_.9} parent=31 // pred_check_branch
          %358 = sbr.rel (%p356) target = $region48
        $region47: #{_lambda_.9} parent=31 // pred_region
          %s360 = ssub.s32 256, 256
          %361 = vsyncadd %s352, %s360
          %s362 = smul.addr %s25, 2
          %s363 = sadd.s32 %s26, %s362
          %s364 = smul.addr %s363, 128
          %s365 = scalar_lea.hbm %s3, %s364
          %s366 = sshll.u32 %s355, 4
          %s367 = int_to_ptr.vmem [resolvable:$true] %s366
          %372 = dma.vmem_to_hbm [thread:$0]  %s367, 256, %s365, %s352, 128, 128, 8
        $region48: #{_lambda_.9} parent=31 // pred_fallthru
          _
      $region32: #{_lambda_.9} parent=5 // pred_fallthru
        _
      %p373 = scmp.le.s32.totalorder 2, %s16
      // Predicated region
      $region49: #{_lambda_.9} parent=5 // pred_check
        %p374 = pneg %p373
      $region50: #{_lambda_.9} parent=5 // pred_check_branch
        %376 = sbr.rel (%p374) target = $region52
      $region51: #{_lambda_.9} parent=5 // pred_region
        %s377 = ssub.s32 %s16, 2
        // Predicated region
        $region53: #{_lambda_.9} parent=51 // pred_check
          %p378 = pneg %p129
        $region54: #{_lambda_.9} parent=51 // pred_check_branch
          %380 = sbr.rel (%p378) target = $region56
        $region55: #{_lambda_.9} parent=51 // pred_region
          %s381 = sand.u32 %s114, 1
          %s382 = scalar_lea.sflag [#allocation4], %s381
          %s383 = sand.u32 %s114, 1
          %s384 = smul.addr %s383, 16
          %s385 = scalar_lea.vmem [#allocation8], %s384
          %386 = dma.done %s382, 256
        $region56: #{_lambda_.9} parent=51 // pred_fallthru
          _
      $region52: #{_lambda_.9} parent=5 // pred_fallthru
        _
    $region6: #{_lambda_.9} parent=1 // loop_footer
      %s20 = sadd.s32 1, %s16
    $region7: #{_lambda_.9} parent=1 // loop_footer_branch
      %15 = sbr.rel target = $region3
    $region8: #{_lambda_.9} parent=1 // loop_exit
      _
    %387 = vsyncpa [#allocation3], 1
    %s388 = scalar_lea.sflag [#allocation3], 1
    %389 = vsyncpa %s388, 1
    %390 = vsyncpa [#allocation6], 1
    %391 = vsyncpa [#allocation4], 1
    %s392 = scalar_lea.sflag [#allocation4], 1
    %393 = vsyncpa %s392, 1

// kernel: _lambda_.13
$region0: #{_lambda_.13}
  #allocation0 [shape = 'u32[]', space=smem, size = 0x4, offset = 0x4, fixed_abs, tag = 'smem constant byte address 0x4 - core index']
  #allocation1 [shape = 'u32[144,128]{1,0:T(1,128)}', space=vmem, size = 0x12000, scoped, tag = 'internal scratch']
  %s0 = inlined_call_operand.hbm [shape: f32[2,6,16], index: 0, kind: input, shape index: {}]
  %s1 = inlined_call_operand.hbm [shape: f32[48,208], index: 1, kind: input, shape index: {}]
  %s2 = inlined_call_operand.hbm [shape: f32[1,208], index: 2, kind: input, shape index: {}]
  %s3 = inlined_call_operand.hbm [shape: f32[2,4,208], index: 3, kind: output, shape index: {}]
  %s4 = sld [smem:[#allocation0]]
  $region57: #{_lambda_.13} parent=0
    _
  %s6 = ssub.s32 1, %s4
  %s7 = scalar_select 0, %s6, %s4
  $region1: #{_lambda_.13} parent=0
    #allocation2 [shape = 'u8[8192]{0}', space=vmem, size = 0x2000, scoped, tag = 'input window, operand 0']
    #allocation3 [shape = 's32[2]{0}', space=sflag, size = 0x8, scoped, tag = 'scoped memory for _lambda_.13']
    #allocation4 [shape = 's32[2]{0}', space=sflag, size = 0x8, scoped, tag = 'scoped memory for _lambda_.13']
    #allocation5 [shape = 'u8[49152]{0}', space=vmem, size = 0xc000, scoped, tag = 'input window, operand 1, single buffered']
    #allocation6 [shape = 's32[1]{0}', space=sflag, size = 0x4, scoped, tag = 'scoped memory for _lambda_.13']
    #allocation7 [shape = 'u8[1024]{0}', space=vmem, size = 0x400, scoped, tag = 'input window, operand 2, single buffered']
    #allocation8 [shape = 'u8[8192]{0}', space=vmem, size = 0x2000, scoped, tag = 'output window, operand 0']
    %8 = vsyncpa [#allocation3], 0
    %s9 = scalar_lea.sflag [#allocation3], 1
    %10 = vsyncpa %s9, 0
    %11 = vsyncpa [#allocation6], 0
    %12 = vsyncpa [#allocation4], 0
    %s13 = scalar_lea.sflag [#allocation4], 1
    %14 = vsyncpa %s13, 0
    loop: start=0, step=1, limit=4
    $region2: #{_lambda_.13} parent=1 // loop_pre_header
      _
    $region3: #{_lambda_.13} parent=1 // loop_header
      %s16 = sphi 0, %s20
      %p17 = scmp.ge.s32.totalorder %s16, 4
      %s23 = sphi 0, %s35
      %s24 = sphi 0, %s31
      %s25 = sphi 0, %s23
      %s26 = sphi 0, %s24
      %s27 = sphi 0, %s25
      %s28 = sphi 0, %s26
      %s38 = sphi 0, %s40
      %s41 = sphi 0, %s38
      %s42 = sphi 0, %s41
      %s58 = sphi 0, %s42
      %s64 = sphi 0, %s66
      %s67 = sphi 0, %s64
      %s68 = sphi 0, %s67
      %s84 = sphi 0, %s68
      %s90 = sphi 0, %s92
      %s93 = sphi 0, %s90
      %s94 = sphi 0, %s93
      %s110 = sphi 0, %s94
      %s118 = sphi 0, %s120
      %s121 = sphi 0, %s118
      %s122 = sphi 0, %s121
      %s138 = sphi 0, %s122
    $region4: #{_lambda_.13} parent=1 // loop_header_branch
      %19 = sbr.rel (%p17) target = $region8
    $region5: #{_lambda_.13} parent=1 // loop_body
      %s21 = ssub.s32 %s16, 1
      %s22 = ssub.s32 %s16, 2
      %s29 = sadd.s32 1, %s24
      %p30 = scmp.ge.s32.totalorder %s29, 2
      %s31 = scalar_select %p30, 0, %s29
      %s32 = sadd.s32 1, %s23
      %s33 = scalar_select %p30, %s32, %s23
      %p34 = scmp.ge.s32.totalorder %s33, 1
      %s35 = scalar_select %p34, 0, %s33
      %s36 = ssub.s32 %s24, %s31
      %p37 = scmp.eq.s32.totalorder %s36, 0
      %s39 = sadd.s32 %s38, 1
      %s40 = scalar_select %p37, %s38, %s39
      %p43 = pneg %p37
      %p44 = scmp.eq.s32.totalorder %s16, 1
      %p45 = por %p43, %p44
      %p46 = scmp.ne.s32.totalorder %s38, %s41
      %p47 = scmp.eq.s32.totalorder %s16, 0
      %p48 = por %p46, %p47
      %p49 = scmp.ne.s32.totalorder %s38, %s41
      %p50 = scmp.eq.s32.totalorder %s21, 1
      %p51 = por %p49, %p50
      %p52 = scmp.ne.s32.totalorder %s41, %s42
      %p53 = scmp.eq.s32.totalorder %s21, 0
      %p54 = por %p52, %p53
      %p55 = scmp.ne.s32.totalorder %s41, %s42
      %p56 = scmp.eq.s32.totalorder %s22, 1
      %p57 = por %p55, %p56
      %p59 = scmp.ne.s32.totalorder %s42, %s58
      %p60 = scmp.eq.s32.totalorder %s22, 0
      %p61 = por %p59, %p60
      %s62 = ssub.s32 %s23, %s35
      %p63 = scmp.eq.s32.totalorder %s62, 0
      %s65 = sadd.s32 %s64, 1
      %s66 = scalar_select %p63, %s64, %s65
      %p69 = pneg %p63
      %p70 = scmp.eq.s32.totalorder %s16, 1
      %p71 = por %p69, %p70
      %p72 = scmp.ne.s32.totalorder %s64, %s67
      %p73 = scmp.eq.s32.totalorder %s16, 0
      %p74 = por %p72, %p73
      %p75 = scmp.ne.s32.totalorder %s64, %s67
      %p76 = scmp.eq.s32.totalorder %s21, 1
      %p77 = por %p75, %p76
      %p78 = scmp.ne.s32.totalorder %s67, %s68
      %p79 = scmp.eq.s32.totalorder %s21, 0
      %p80 = por %p78, %p79
      %p81 = scmp.ne.s32.totalorder %s67, %s68
      %p82 = scmp.eq.s32.totalorder %s22, 1
      %p83 = por %p81, %p82
      %p85 = scmp.ne.s32.totalorder %s68, %s84
      %p86 = scmp.eq.s32.totalorder %s22, 0
      %p87 = por %p85, %p86
      %s88 = ssub.s32 %s23, %s35
      %p89 = scmp.eq.s32.totalorder %s88, 0
      %s91 = sadd.s32 %s90, 1
      %s92 = scalar_select %p89, %s90, %s91
      %p95 = pneg %p89
      %p96 = scmp.eq.s32.totalorder %s16, 1
      %p97 = por %p95, %p96
      %p98 = scmp.ne.s32.totalorder %s90, %s93
      %p99 = scmp.eq.s32.totalorder %s16, 0
      %p100 = por %p98, %p99
      %p101 = scmp.ne.s32.totalorder %s90, %s93
      %p102 = scmp.eq.s32.totalorder %s21, 1
      %p103 = por %p101, %p102
      %p104 = scmp.ne.s32.totalorder %s93, %s94
      %p105 = scmp.eq.s32.totalorder %s21, 0
      %p106 = por %p104, %p105
      %p107 = scmp.ne.s32.totalorder %s93, %s94
      %p108 = scmp.eq.s32.totalorder %s22, 1
      %p109 = por %p107, %p108
      %p111 = scmp.ne.s32.totalorder %s94, %s110
      %p112 = scmp.eq.s32.totalorder %s22, 0
      %p113 = por %p111, %p112
      %s114 = ssub.s32 %s24, %s31
      %s115 = ssub.s32 %s23, %s35
      %s116 = sor.u32 %s114, %s115
      %p117 = scmp.eq.s32.totalorder %s116, 0
      %s119 = sadd.s32 %s118, 1
      %s120 = scalar_select %p117, %s118, %s119
      %p123 = pneg %p117
      %p124 = scmp.eq.s32.totalorder %s16, 1
      %p125 = por %p123, %p124
      %p126 = scmp.ne.s32.totalorder %s118, %s121
      %p127 = scmp.eq.s32.totalorder %s16, 0
      %p128 = por %p126, %p127
      %p129 = scmp.ne.s32.totalorder %s118, %s121
      %p130 = scmp.eq.s32.totalorder %s21, 1
      %p131 = por %p129, %p130
      %p132 = scmp.ne.s32.totalorder %s121, %s122
      %p133 = scmp.eq.s32.totalorder %s21, 0
      %p134 = por %p132, %p133
      %p135 = scmp.ne.s32.totalorder %s121, %s122
      %p136 = scmp.eq.s32.totalorder %s22, 1
      %p137 = por %p135, %p136
      %p139 = scmp.ne.s32.totalorder %s122, %s138
      %p140 = scmp.eq.s32.totalorder %s22, 0
      %p141 = por %p139, %p140
      %p142 = scmp.le.s32.totalorder 1, %s16
      %p143 = scmp.lt.s32.totalorder %s16, 3
      %p144 = pnand %p142, %p143
      %p145 = pneg %p144
      // Predicated region
      $region9: #{_lambda_.13} parent=5 // pred_check
        _
      $region10: #{_lambda_.13} parent=5 // pred_check_branch
        %147 = sbr.rel (%p144) target = $region12
      $region11: #{_lambda_.13} parent=5 // pred_region
        %s148 = ssub.s32 %s16, 1
        // Predicated region
        $region13: #{_lambda_.13} parent=11 // pred_check
          %p149 = pneg %p80
        $region14: #{_lambda_.13} parent=11 // pred_check_branch
          %151 = sbr.rel (%p149) target = $region16
        $region15: #{_lambda_.13} parent=11 // pred_region
          %s152 = smul.u32 2, %s25
          %s154 = ssub.s32 1536, 1536
          %155 = vsyncadd [#allocation6], %s154
          %s156 = smul.addr %s152, 128
          %s157 = scalar_lea.hbm %s1, %s156
          %s158 = sshll.u32 [#allocation5], 4
          %s159 = int_to_ptr.vmem [resolvable:$true] %s158
          %164 = dma.hbm_to_vmem [thread:$0]  %s157, 1536, %s159, [#allocation6], 256, 256, 16
        $region16: #{_lambda_.13} parent=11 // pred_fallthru
          _
        // Predicated region
        $region17: #{_lambda_.13} parent=11 // pred_check
          %p165 = pneg %p106
        $region18: #{_lambda_.13} parent=11 // pred_check_branch
          %167 = sbr.rel (%p165) target = $region20
        $region19: #{_lambda_.13} parent=11 // pred_region
          %s168 = smul.u32 2, %s25
          %s170 = ssub.s32 32, 32
          %171 = vsyncadd [#allocation6], %s170
          %s172 = smul.addr %s168, 16
          %s173 = scalar_lea.hbm %s2, %s172
          %s175 = sshll.u32 [#allocation7], 4
          %s176 = int_to_ptr.vmem [resolvable:$true] %s175
          %178 = dma.hbm_to_vmem [thread:$0]  %s173, 32, %s176, [#allocation6]
        $region20: #{_lambda_.13} parent=11 // pred_fallthru
          _
      $region12: #{_lambda_.13} parent=5 // pred_fallthru
        _
      %p179 = scmp.lt.s32.totalorder %s16, 2
      // Predicated region
      $region21: #{_lambda_.13} parent=5 // pred_check
        %p180 = pneg %p179
      $region22: #{_lambda_.13} parent=5 // pred_check_branch
        %182 = sbr.rel (%p180) target = $region24
      $region23: #{_lambda_.13} parent=5 // pred_region
        // Predicated region
        $region25: #{_lambda_.13} parent=23 // pred_check
          %p183 = pneg %p48
        $region26: #{_lambda_.13} parent=23 // pred_check_branch
          %185 = sbr.rel (%p183) target = $region28
        $region27: #{_lambda_.13} parent=23 // pred_region
          %s186 = sand.u32 %s38, 1
          %s187 = scalar_lea.sflag [#allocation3], %s186
          %s188 = sand.u32 %s38, 1
          %s189 = smul.addr %s188, 8
          %s190 = scalar_lea.vmem [#allocation2], %s189
          %s192 = ssub.s32 128, 128
          %193 = vsyncadd %s187, %s192
          %s194 = smul.addr %s24, 128
          %s195 = scalar_lea.hbm %s0, %s194
          %s197 = sshll.u32 %s190, 4
          %s198 = int_to_ptr.vmem [resolvable:$true] %s197
          %200 = dma.hbm_to_vmem [thread:$0]  %s195, 128, %s198, %s187
        $region28: #{_lambda_.13} parent=23 // pred_fallthru
          _
      $region24: #{_lambda_.13} parent=5 // pred_fallthru
        _
      %p201 = scmp.le.s32.totalorder 1, %s16
      %p202 = scmp.lt.s32.totalorder %s16, 3
      %p203 = pnand %p201, %p202
      %p204 = pneg %p203
      // Predicated region
      $region29: #{_lambda_.13} parent=5 // pred_check
        _
      $region30: #{_lambda_.13} parent=5 // pred_check_branch
        %206 = sbr.rel (%p203) target = $region32
      $region31: #{_lambda_.13} parent=5 // pred_region
        %s207 = ssub.s32 %s16, 1
        %s208 = sand.u32 %s41, 1
        %s209 = scalar_lea.sflag [#allocation3], %s208
        %s210 = sand.u32 %s41, 1
        %s211 = smul.addr %s210, 8
        %s212 = scalar_lea.vmem [#allocation2], %s211
        // Predicated region
        $region33: #{_lambda_.13} parent=31 // pred_check
          %p213 = pneg %p54
        $region34: #{_lambda_.13} parent=31 // pred_check_branch
          %215 = sbr.rel (%p213) target = $region36
        $region35: #{_lambda_.13} parent=31 // pred_region
          %216 = dma.done %s209, 128
        $region36: #{_lambda_.13} parent=31 // pred_fallthru
          _
        // Predicated region
        $region37: #{_lambda_.13} parent=31 // pred_check
          %p217 = pneg %p80
        $region38: #{_lambda_.13} parent=31 // pred_check_branch
          %219 = sbr.rel (%p217) target = $region40
        $region39: #{_lambda_.13} parent=31 // pred_region
          %220 = dma.done [#allocation6], 1536
        $region40: #{_lambda_.13} parent=31 // pred_fallthru
          _
        // Predicated region
        $region41: #{_lambda_.13} parent=31 // pred_check
          %p221 = pneg %p106
        $region42: #{_lambda_.13} parent=31 // pred_check_branch
          %223 = sbr.rel (%p221) target = $region44
        $region43: #{_lambda_.13} parent=31 // pred_region
          %224 = dma.done [#allocation6], 32
        $region44: #{_lambda_.13} parent=31 // pred_fallthru
          _
        %s225 = sand.u32 %s41, 1
        %s226 = scalar_lea.sflag [#allocation3], %s225
        %s227 = sand.u32 %s41, 1
        %s228 = smul.addr %s227, 8
        %s229 = scalar_lea.vmem [#allocation2], %s228
        %p230 = pneg %p54
        %p231 = pneg %p51
        %p232 = pneg %p80
        %p233 = pneg %p77
        %p234 = pneg %p106
        %p235 = pneg %p103
        %p236 = pneg %p134
        %p237 = pneg %p131
        %s238 = sand.u32 %s121, 1
        %s239 = scalar_lea.sflag [#allocation4], %s238
        %s240 = sand.u32 %s121, 1
        %s241 = smul.addr %s240, 8
        %s242 = scalar_lea.vmem [#allocation8], %s241
        %s243 = smul.u32 2, %s25
        %s244 = smul.u32 2, %s25
        %s245 = smul.u32 2, %s25
        %v246 = vld [vmem:[%s212] sm:$0x3f]
        %v248 = vrot.slane %v246, 1
        %249 = vrot.lane.b32.xlu0 %v248, 16
        %v250 = vpop.permute.xlu0 %249
        %v252 = vrot.slane %v246, 2
        %253 = vrot.lane.b32.xlu0 %v252, 32
        %v254 = vpop.permute.xlu0 %253
        %vm256 = vcmask 130048
        %v257 = vsel %vm256, %v246, %v250
        %vm258 = vcmask 261120
        %v259 = vsel %vm258, %v257, %v254
        %v260 = vld [vmem:[#allocation5] sm:$0xff]
        %v261 = vld [vmem:[#allocation5 + $0x8] sm:$0xff]
        %v262 = vld [vmem:[#allocation5 + $0x10] sm:$0xff]
        %v263 = vld [vmem:[#allocation5 + $0x18] sm:$0xff]
        %v264 = vld [vmem:[#allocation5 + $0x20] sm:$0xff]
        %v265 = vld [vmem:[#allocation5 + $0x28] sm:$0xff]
        %v266 = vld [vmem:[#allocation5 + $0x30] sm:$0xff]
        %v267 = vld [vmem:[#allocation5 + $0x38] sm:$0xff]
        %v268 = vld [vmem:[#allocation5 + $0x40] sm:$0xff]
        %v269 = vld [vmem:[#allocation5 + $0x48] sm:$0xff]
        %v270 = vld [vmem:[#allocation5 + $0x50] sm:$0xff]
        %v271 = vld [vmem:[#allocation5 + $0x58] sm:$0xff]
        %v272 = vld [vmem:[#allocation7] sm:$0x3]
        %v274 = vlaneseq
        %v275 = vshrl.u32 %v274, 7
        %v276 = vsub.s32 0, %v275
        %v277 = vrot.slane %v272, %v276
        %v278 = vlaneseq
        %v279 = vshrl.u32 %v278, 7
        %v280 = vsub.s32 1, %v279
        %v281 = vrot.slane %v272, %v280
        %vm284 = vcmask 392192
        %v286 = vsel %vm284, %v259, 0
        %288 = vmatprep.subr.mxu0 %v261
        %289 = vmatpush1.msra.mxu0 %v260
        %290 = vmatprep.subr.mxu0 %v263
        %291 = vmatpush1.msra.mxu0 %v262
        %292 = vmatprep.subr.mxu0 %v265
        %293 = vmatpush1.msra.mxu0 %v264
        %294 = vmatprep.subr.mxu0 %v267
        %295 = vmatpush1.msra.mxu0 %v266
        %296 = vmatprep.subr.mxu0 %v269
        %297 = vmatpush1.msra.mxu0 %v268
        %298 = vmatprep.subr.mxu0 %v271
        %299 = vmatpush1.msra.mxu0 %v270
        %300 = vmatprep.subr.mxu0 0.0
        %301 = vmatpush1.msra.mxu0 0.0
        %302 = vmatprep.subr.mxu0 0.0
        %303 = vmatpush1.msra.mxu0 0.0
        %304 = vmatprep.subr.mxu0 0.0
        %305 = vmatpush1.msra.mxu0 0.0
        %306 = vmatprep.subr.mxu0 0.0
        %307 = vmatpush1.msra.mxu0 0.0
        %308 = vmatprep.subr.mxu0 0.0
        %309 = vmatpush1.msra.mxu0 0.0
        %310 = vmatprep.subr.mxu0 0.0
        %311 = vmatpush1.msra.mxu0 0.0
        %312 = vmatprep.subr.mxu0 0.0
        %313 = vmatpush1.msra.mxu0 0.0
        %314 = vmatprep.subr.mxu0 0.0
        %315 = vmatpush1.msra.mxu0 0.0
        %316 = vmatprep.subr.mxu0 0.0
        %317 = vmatpush1.msra.mxu0 0.0
        %318 = vmatprep.subr.mxu0 0.0
        %319 = vmatpush1.msra.mxu0 0.0
        %320 = vmatprep.subr.mxu0 0.0
        %321 = vmatpush1.msra.mxu0 0.0
        %322 = vmatprep.subr.mxu0 0.0
        %323 = vmatpush1.msra.mxu0 0.0
        %324 = vmatprep.subr.mxu0 0.0
        %325 = vmatpush1.msra.mxu0 0.0
        %326 = vmatprep.subr.mxu0 0.0
        %327 = vmatpush1.msra.mxu0 0.0
        %328 = vmatprep.subr.mxu0 0.0
        %329 = vmatpush1.msra.mxu0 0.0
        %330 = vmatprep.subr.mxu0 0.0
        %331 = vmatpush1.msra.mxu0 0.0
        %332 = vmatprep.subr.mxu0 0.0
        %333 = vmatpush1.msra.mxu0 0.0
        %334 = vmatprep.subr.mxu0 0.0
        %335 = vmatpush1.msra.mxu0 0.0
        %336 = vmatprep.subr.mxu0 0.0
        %337 = vmatpush1.msra.mxu0 0.0
        %338 = vmatprep.subr.mxu0 0.0
        %339 = vmatpush1.msra.mxu0 0.0
        %340 = vmatprep.subr.mxu0 0.0
        %341 = vmatpush1.msra.mxu0 0.0
        %342 = vmatprep.subr.mxu0 0.0
        %343 = vmatpush1.msra.mxu0 0.0
        %344 = vmatprep.subr.mxu0 0.0
        %345 = vmatpush1.msra.mxu0 0.0
        %346 = vmatprep.subr.mxu0 0.0
        %347 = vmatpush1.msra.mxu0 0.0
        %348 = vmatprep.subr.mxu0 0.0
        %349 = vmatpush1.msra.mxu0 0.0
        %350 = vmatprep.subr.mxu0 0.0
        %351 = vmatpush1.msra.mxu0 0.0
        %352 = vmatprep.mubr.f32.mxu0 0.0
        %353 = vmatmul.mubr.f32.gmra.mrb[0].mxu0 %v286
        %v354 = vpop.f32.mrb[0].mxu0
        %v355 = vadd.f32 %v277, %v354
        %v356 = vpop.f32.mrb[0].mxu0
        %v357 = vadd.f32 %v281, %v356
        %358 = vdwg.mxu0
        %v361 = vcombine.low %v355, %v357
        %vm363 = vcmask 1043456
        %vm364 = vcmask 654340
        %vm365 = vmor %vm364, %vm363
        %366 = vst.msk [vmem:[%s242] sm:$0xff] %vm365, %v361
        %s367 = sand.u32 %s121, 1
        %s368 = scalar_lea.sflag [#allocation4], %s367
        %s369 = sand.u32 %s121, 1
        %s370 = smul.addr %s369, 8
        %s371 = scalar_lea.vmem [#allocation8], %s370
        // Predicated region
        $region45: #{_lambda_.13} parent=31 // pred_check
          %p372 = pneg %p131
        $region46: #{_lambda_.13} parent=31 // pred_check_branch
          %374 = sbr.rel (%p372) target = $region48
        $region47: #{_lambda_.13} parent=31 // pred_region
          %s375 = smul.u32 2, %s25
          %s377 = ssub.s32 128, 128
          %378 = vsyncadd %s368, %s377
          %s379 = smul.addr %s26, 2
          %s380 = sadd.s32 %s375, %s379
          %s381 = smul.addr %s380, 64
          %s382 = scalar_lea.hbm %s3, %s381
          %s384 = sshll.u32 %s371, 4
          %s385 = int_to_ptr.vmem [resolvable:$true] %s384
          %387 = dma.vmem_to_hbm [thread:$0]  %s385, 128, %s382, %s368
        $region48: #{_lambda_.13} parent=31 // pred_fallthru
          _
      $region32: #{_lambda_.13} parent=5 // pred_fallthru
        _
      %p388 = scmp.le.s32.totalorder 2, %s16
      // Predicated region
      $region49: #{_lambda_.13} parent=5 // pred_check
        %p389 = pneg %p388
      $region50: #{_lambda_.13} parent=5 // pred_check_branch
        %391 = sbr.rel (%p389) target = $region52
      $region51: #{_lambda_.13} parent=5 // pred_region
        %s392 = ssub.s32 %s16, 2
        // Predicated region
        $region53: #{_lambda_.13} parent=51 // pred_check
          %p393 = pneg %p137
        $region54: #{_lambda_.13} parent=51 // pred_check_branch
          %395 = sbr.rel (%p393) target = $region56
        $region55: #{_lambda_.13} parent=51 // pred_region
          %s396 = sand.u32 %s122, 1
          %s397 = scalar_lea.sflag [#allocation4], %s396
          %s398 = sand.u32 %s122, 1
          %s399 = smul.addr %s398, 8
          %s400 = scalar_lea.vmem [#allocation8], %s399
          %401 = dma.done %s397, 128
        $region56: #{_lambda_.13} parent=51 // pred_fallthru
          _
      $region52: #{_lambda_.13} parent=5 // pred_fallthru
        _
    $region6: #{_lambda_.13} parent=1 // loop_footer
      %s20 = sadd.s32 1, %s16
    $region7: #{_lambda_.13} parent=1 // loop_footer_branch
      %15 = sbr.rel target = $region3
    $region8: #{_lambda_.13} parent=1 // loop_exit
      _
    %402 = vsyncpa [#allocation3], 1
    %s403 = scalar_lea.sflag [#allocation3], 1
    %404 = vsyncpa %s403, 1
    %405 = vsyncpa [#allocation6], 1
    %406 = vsyncpa [#allocation4], 1
    %s407 = scalar_lea.sflag [#allocation4], 1
    %408 = vsyncpa %s407, 1

// kernel: _lambda_.14
$region0: #{_lambda_.14}
  #allocation0 [shape = 'u32[]', space=smem, size = 0x4, offset = 0x4, fixed_abs, tag = 'smem constant byte address 0x4 - core index']
  #allocation1 [shape = 'u32[144,128]{1,0:T(1,128)}', space=vmem, size = 0x12000, scoped, tag = 'internal scratch']
  %s0 = inlined_call_operand.hbm [shape: f32[2,1,4,36], index: 0, kind: input, shape index: {}]
  %s1 = inlined_call_operand.hbm [shape: f32[4,12], index: 1, kind: input, shape index: {}]
  %s2 = inlined_call_operand.hbm [shape: f32[4,1], index: 2, kind: input, shape index: {}]
  %s3 = inlined_call_operand.hbm [shape: f32[2,4,16,12], index: 3, kind: input, shape index: {}]
  %s4 = inlined_call_operand.hbm [shape: f32[2,4,16,1], index: 4, kind: input, shape index: {}]
  %s5 = inlined_call_operand.hbm [shape: f32[2,4,32], index: 5, kind: output, shape index: {}]
  %s6 = sld [smem:[#allocation0]]
  $region73: #{_lambda_.14} parent=0
    _
  %s8 = ssub.s32 1, %s6
  %s9 = scalar_select 0, %s8, %s6
  $region1: #{_lambda_.14} parent=0
    #allocation2 [shape = 'u8[4096]{0}', space=vmem, size = 0x1000, scoped, tag = 'input window, operand 0']
    #allocation3 [shape = 's32[2]{0}', space=sflag, size = 0x8, scoped, tag = 'scoped memory for _lambda_.14']
    #allocation4 [shape = 's32[2]{0}', space=sflag, size = 0x8, scoped, tag = 'scoped memory for _lambda_.14']
    #allocation5 [shape = 'u8[2048]{0}', space=vmem, size = 0x800, scoped, tag = 'input window, operand 1, single buffered']
    #allocation6 [shape = 's32[1]{0}', space=sflag, size = 0x4, scoped, tag = 'scoped memory for _lambda_.14']
    #allocation7 [shape = 'u8[2048]{0}', space=vmem, size = 0x800, scoped, tag = 'input window, operand 2, single buffered']
    #allocation8 [shape = 'u8[32768]{0}', space=vmem, size = 0x8000, scoped, tag = 'input window, operand 3']
    #allocation9 [shape = 's32[2]{0}', space=sflag, size = 0x8, scoped, tag = 'scoped memory for _lambda_.14']
    #allocation10 [shape = 'u8[32768]{0}', space=vmem, size = 0x8000, scoped, tag = 'input window, operand 4']
    #allocation11 [shape = 'u8[4096]{0}', space=vmem, size = 0x1000, scoped, tag = 'output window, operand 0']
    %10 = vsyncpa [#allocation3], 0
    %s11 = scalar_lea.sflag [#allocation3], 1
    %12 = vsyncpa %s11, 0
    %13 = vsyncpa [#allocation6], 0
    %14 = vsyncpa [#allocation9], 0
    %s15 = scalar_lea.sflag [#allocation9], 1
    %16 = vsyncpa %s15, 0
    %17 = vsyncpa [#allocation4], 0
    %s18 = scalar_lea.sflag [#allocation4], 1
    %19 = vsyncpa %s18, 0
    loop: start=0, step=1, limit=4
    $region2: #{_lambda_.14} parent=1 // loop_pre_header
      _
    $region3: #{_lambda_.14} parent=1 // loop_header
      %s21 = sphi 0, %s25
      %p22 = scmp.ge.s32.totalorder %s21, 4
      %s28 = sphi 0, %s40
      %s29 = sphi 0, %s36
      %s30 = sphi 0, %s28
      %s31 = sphi 0, %s29
      %s32 = sphi 0, %s30
      %s33 = sphi 0, %s31
      %s45 = sphi 0, %s47
      %s48 = sphi 0, %s45
      %s49 = sphi 0, %s48
      %s65 = sphi 0, %s49
      %s69 = sphi 0, %s69
      %s71 = sphi 0, %s69
      %s72 = sphi 0, %s71
      %s86 = sphi 0, %s72
      %s90 = sphi 0, %s90
      %s92 = sphi 0, %s90
      %s93 = sphi 0, %s92
      %s107 = sphi 0, %s93
      %s115 = sphi 0, %s117
      %s118 = sphi 0, %s115
      %s119 = sphi 0, %s118
      %s135 = sphi 0, %s119
      %s143 = sphi 0, %s145
      %s146 = sphi 0, %s143
      %s147 = sphi 0, %s146
      %s163 = sphi 0, %s147
      %s171 = sphi 0, %s173
      %s174 = sphi 0, %s171
      %s175 = sphi 0, %s174
      %s191 = sphi 0, %s175
    $region4: #{_lambda_.14} parent=1 // loop_header_branch
      %24 = sbr.rel (%p22) target = $region8
    $region5: #{_lambda_.14} parent=1 // loop_body
      %s26 = ssub.s32 %s21, 1
      %s27 = ssub.s32 %s21, 2
      %s34 = sadd.s32 1, %s29
      %p35 = scmp.ge.s32.totalorder %s34, 1
      %s36 = scalar_select %p35, 0, %s34
      %s37 = sadd.s32 1, %s28
      %s38 = scalar_select %p35, %s37, %s28
      %p39 = scmp.ge.s32.totalorder %s38, 2
      %s40 = scalar_select %p39, 0, %s38
      %s41 = ssub.s32 %s28, %s40
      %s42 = ssub.s32 %s29, %s36
      %s43 = sor.u32 %s41, %s42
      %p44 = scmp.eq.s32.totalorder %s43, 0
      %s46 = sadd.s32 %s45, 1
      %s47 = scalar_select %p44, %s45, %s46
      %p50 = pneg %p44
      %p51 = scmp.eq.s32.totalorder %s21, 1
      %p52 = por %p50, %p51
      %p53 = scmp.ne.s32.totalorder %s45, %s48
      %p54 = scmp.eq.s32.totalorder %s21, 0
      %p55 = por %p53, %p54
      %p56 = scmp.ne.s32.totalorder %s45, %s48
      %p57 = scmp.eq.s32.totalorder %s26, 1
      %p58 = por %p56, %p57
      %p59 = scmp.ne.s32.totalorder %s48, %s49
      %p60 = scmp.eq.s32.totalorder %s26, 0
      %p61 = por %p59, %p60
      %p62 = scmp.ne.s32.totalorder %s48, %s49
      %p63 = scmp.eq.s32.totalorder %s27, 1
      %p64 = por %p62, %p63
      %p66 = scmp.ne.s32.totalorder %s49, %s65
      %p67 = scmp.eq.s32.totalorder %s27, 0
      %p68 = por %p66, %p67
      %s70 = sadd.s32 %s69, 1
      %p73 = scmp.eq.s32.totalorder %s21, 1
      %p74 = scmp.ne.s32.totalorder %s69, %s71
      %p75 = scmp.eq.s32.totalorder %s21, 0
      %p76 = por %p74, %p75
      %p77 = scmp.ne.s32.totalorder %s69, %s71
      %p78 = scmp.eq.s32.totalorder %s26, 1
      %p79 = por %p77, %p78
      %p80 = scmp.ne.s32.totalorder %s71, %s72
      %p81 = scmp.eq.s32.totalorder %s26, 0
      %p82 = por %p80, %p81
      %p83 = scmp.ne.s32.totalorder %s71, %s72
      %p84 = scmp.eq.s32.totalorder %s27, 1
      %p85 = por %p83, %p84
      %p87 = scmp.ne.s32.totalorder %s72, %s86
      %p88 = scmp.eq.s32.totalorder %s27, 0
      %p89 = por %p87, %p88
      %s91 = sadd.s32 %s90, 1
      %p94 = scmp.eq.s32.totalorder %s21, 1
      %p95 = scmp.ne.s32.totalorder %s90, %s92
      %p96 = scmp.eq.s32.totalorder %s21, 0
      %p97 = por %p95, %p96
      %p98 = scmp.ne.s32.totalorder %s90, %s92
      %p99 = scmp.eq.s32.totalorder %s26, 1
      %p100 = por %p98, %p99
      %p101 = scmp.ne.s32.totalorder %s92, %s93
      %p102 = scmp.eq.s32.totalorder %s26, 0
      %p103 = por %p101, %p102
      %p104 = scmp.ne.s32.totalorder %s92, %s93
      %p105 = scmp.eq.s32.totalorder %s27, 1
      %p106 = por %p104, %p105
      %p108 = scmp.ne.s32.totalorder %s93, %s107
      %p109 = scmp.eq.s32.totalorder %s27, 0
      %p110 = por %p108, %p109
      %s111 = ssub.s32 %s28, %s40
      %s112 = ssub.s32 %s29, %s36
      %s113 = sor.u32 %s111, %s112
      %p114 = scmp.eq.s32.totalorder %s113, 0
      %s116 = sadd.s32 %s115, 1
      %s117 = scalar_select %p114, %s115, %s116
      %p120 = pneg %p114
      %p121 = scmp.eq.s32.totalorder %s21, 1
      %p122 = por %p120, %p121
      %p123 = scmp.ne.s32.totalorder %s115, %s118
      %p124 = scmp.eq.s32.totalorder %s21, 0
      %p125 = por %p123, %p124
      %p126 = scmp.ne.s32.totalorder %s115, %s118
      %p127 = scmp.eq.s32.totalorder %s26, 1
      %p128 = por %p126, %p127
      %p129 = scmp.ne.s32.totalorder %s118, %s119
      %p130 = scmp.eq.s32.totalorder %s26, 0
      %p131 = por %p129, %p130
      %p132 = scmp.ne.s32.totalorder %s118, %s119
      %p133 = scmp.eq.s32.totalorder %s27, 1
      %p134 = por %p132, %p133
      %p136 = scmp.ne.s32.totalorder %s119, %s135
      %p137 = scmp.eq.s32.totalorder %s27, 0
      %p138 = por %p136, %p137
      %s139 = ssub.s32 %s28, %s40
      %s140 = ssub.s32 %s29, %s36
      %s141 = sor.u32 %s139, %s140
      %p142 = scmp.eq.s32.totalorder %s141, 0
      %s144 = sadd.s32 %s143, 1
      %s145 = scalar_select %p142, %s143, %s144
      %p148 = pneg %p142
      %p149 = scmp.eq.s32.totalorder %s21, 1
      %p150 = por %p148, %p149
      %p151 = scmp.ne.s32.totalorder %s143, %s146
      %p152 = scmp.eq.s32.totalorder %s21, 0
      %p153 = por %p151, %p152
      %p154 = scmp.ne.s32.totalorder %s143, %s146
      %p155 = scmp.eq.s32.totalorder %s26, 1
      %p156 = por %p154, %p155
      %p157 = scmp.ne.s32.totalorder %s146, %s147
      %p158 = scmp.eq.s32.totalorder %s26, 0
      %p159 = por %p157, %p158
      %p160 = scmp.ne.s32.totalorder %s146, %s147
      %p161 = scmp.eq.s32.totalorder %s27, 1
      %p162 = por %p160, %p161
      %p164 = scmp.ne.s32.totalorder %s147, %s163
      %p165 = scmp.eq.s32.totalorder %s27, 0
      %p166 = por %p164, %p165
      %s167 = ssub.s32 %s28, %s40
      %s168 = ssub.s32 %s29, %s36
      %s169 = sor.u32 %s167, %s168
      %p170 = scmp.eq.s32.totalorder %s169, 0
      %s172 = sadd.s32 %s171, 1
      %s173 = scalar_select %p170, %s171, %s172
      %p176 = pneg %p170
      %p177 = scmp.eq.s32.totalorder %s21, 1
      %p178 = por %p176, %p177
      %p179 = scmp.ne.s32.totalorder %s171, %s174
      %p180 = scmp.eq.s32.totalorder %s21, 0
      %p181 = por %p179, %p180
      %p182 = scmp.ne.s32.totalorder %s171, %s174
      %p183 = scmp.eq.s32.totalorder %s26, 1
      %p184 = por %p182, %p183
      %p185 = scmp.ne.s32.totalorder %s174, %s175
      %p186 = scmp.eq.s32.totalorder %s26, 0
      %p187 = por %p185, %p186
      %p188 = scmp.ne.s32.totalorder %s174, %s175
      %p189 = scmp.eq.s32.totalorder %s27, 1
      %p190 = por %p188, %p189
      %p192 = scmp.ne.s32.totalorder %s175, %s191
      %p193 = scmp.eq.s32.totalorder %s27, 0
      %p194 = por %p192, %p193
      %p195 = scmp.le.s32.totalorder 1, %s21
      %p196 = scmp.lt.s32.totalorder %s21, 3
      %p197 = pnand %p195, %p196
      %p198 = pneg %p197
      // Predicated region
      $region9: #{_lambda_.14} parent=5 // pred_check
        _
      $region10: #{_lambda_.14} parent=5 // pred_check_branch
        %200 = sbr.rel (%p197) target = $region12
      $region11: #{_lambda_.14} parent=5 // pred_region
        %s201 = ssub.s32 %s21, 1
        // Predicated region
        $region13: #{_lambda_.14} parent=11 // pred_check
          %p202 = pneg %p82
        $region14: #{_lambda_.14} parent=11 // pred_check_branch
          %204 = sbr.rel (%p202) target = $region16
        $region15: #{_lambda_.14} parent=11 // pred_region
          %s206 = ssub.s32 64, 64
          %207 = vsyncadd [#allocation6], %s206
          %s209 = sshll.u32 [#allocation5], 4
          %s210 = int_to_ptr.vmem [resolvable:$true] %s209
          %212 = dma.hbm_to_vmem [thread:$0]  %s1, 64, %s210, [#allocation6]
        $region16: #{_lambda_.14} parent=11 // pred_fallthru
          _
        // Predicated region
        $region17: #{_lambda_.14} parent=11 // pred_check
          %p213 = pneg %p103
        $region18: #{_lambda_.14} parent=11 // pred_check_branch
          %215 = sbr.rel (%p213) target = $region20
        $region19: #{_lambda_.14} parent=11 // pred_region
          %s217 = ssub.s32 64, 64
          %218 = vsyncadd [#allocation6], %s217
          %s220 = sshll.u32 [#allocation7], 4
          %s221 = int_to_ptr.vmem [resolvable:$true] %s220
          %223 = dma.hbm_to_vmem [thread:$0]  %s2, 64, %s221, [#allocation6]
        $region20: #{_lambda_.14} parent=11 // pred_fallthru
          _
      $region12: #{_lambda_.14} parent=5 // pred_fallthru
        _
      %p224 = scmp.lt.s32.totalorder %s21, 2
      // Predicated region
      $region21: #{_lambda_.14} parent=5 // pred_check
        %p225 = pneg %p224
      $region22: #{_lambda_.14} parent=5 // pred_check_branch
        %227 = sbr.rel (%p225) target = $region24
      $region23: #{_lambda_.14} parent=5 // pred_region
        // Predicated region
        $region25: #{_lambda_.14} parent=23 // pred_check
          %p228 = pneg %p55
        $region26: #{_lambda_.14} parent=23 // pred_check_branch
          %230 = sbr.rel (%p228) target = $region28
        $region27: #{_lambda_.14} parent=23 // pred_region
          %s231 = sand.u32 %s45, 1
          %s232 = scalar_lea.sflag [#allocation3], %s231
          %s233 = sand.u32 %s45, 1
          %s234 = smul.addr %s233, 4
          %s235 = scalar_lea.vmem [#allocation2], %s234
          %s237 = ssub.s32 64, 64
          %238 = vsyncadd %s232, %s237
          %s239 = sadd.s32 %s29, %s28
          %s240 = smul.addr %s239, 64
          %s241 = scalar_lea.hbm %s0, %s240
          %s243 = sshll.u32 %s235, 4
          %s244 = int_to_ptr.vmem [resolvable:$true] %s243
          %246 = dma.hbm_to_vmem [thread:$0]  %s241, 64, %s244, %s232
        $region28: #{_lambda_.14} parent=23 // pred_fallthru
          _
        // Predicated region
        $region29: #{_lambda_.14} parent=23 // pred_check
          %p247 = pneg %p125
        $region30: #{_lambda_.14} parent=23 // pred_check_branch
          %249 = sbr.rel (%p247) target = $region32
        $region31: #{_lambda_.14} parent=23 // pred_region
          %s250 = sand.u32 %s21, 1
          %s251 = scalar_lea.sflag [#allocation9], %s250
          %s252 = sand.u32 %s115, 1
          %s253 = smul.addr %s252, 32
          %s254 = scalar_lea.vmem [#allocation8], %s253
          %s255 = smul.u32 4, %s29
          %s257 = ssub.s32 512, 512
          %258 = vsyncadd %s251, %s257
          %s259 = smul.addr %s255, 2
          %s260 = smul.addr %s28, 8
          %s261 = sadd.s32 %s259, %s260
          %s262 = smul.addr %s261, 128
          %s263 = scalar_lea.hbm %s3, %s262
          %s264 = sshll.u32 %s254, 4
          %s265 = int_to_ptr.vmem [resolvable:$true] %s264
          %270 = dma.hbm_to_vmem [thread:$0]  %s263, 512, %s265, %s251, 256, 128, 8
        $region32: #{_lambda_.14} parent=23 // pred_fallthru
          _
        // Predicated region
        $region33: #{_lambda_.14} parent=23 // pred_check
          %p271 = pneg %p153
        $region34: #{_lambda_.14} parent=23 // pred_check_branch
          %273 = sbr.rel (%p271) target = $region36
        $region35: #{_lambda_.14} parent=23 // pred_region
          %s274 = sand.u32 %s21, 1
          %s275 = scalar_lea.sflag [#allocation9], %s274
          %s276 = sand.u32 %s143, 1
          %s277 = smul.addr %s276, 32
          %s278 = scalar_lea.vmem [#allocation10], %s277
          %s279 = smul.u32 4, %s29
          %s281 = ssub.s32 512, 512
          %282 = vsyncadd %s275, %s281
          %s283 = smul.addr %s279, 2
          %s284 = smul.addr %s28, 8
          %s285 = sadd.s32 %s283, %s284
          %s286 = smul.addr %s285, 128
          %s287 = scalar_lea.hbm %s4, %s286
          %s288 = sshll.u32 %s278, 4
          %s289 = int_to_ptr.vmem [resolvable:$true] %s288
          %294 = dma.hbm_to_vmem [thread:$0]  %s287, 512, %s289, %s275, 256, 128, 8
        $region36: #{_lambda_.14} parent=23 // pred_fallthru
          _
      $region24: #{_lambda_.14} parent=5 // pred_fallthru
        _
      %p295 = scmp.le.s32.totalorder 1, %s21
      %p296 = scmp.lt.s32.totalorder %s21, 3
      %p297 = pnand %p295, %p296
      %p298 = pneg %p297
      // Predicated region
      $region37: #{_lambda_.14} parent=5 // pred_check
        _
      $region38: #{_lambda_.14} parent=5 // pred_check_branch
        %300 = sbr.rel (%p297) target = $region40
      $region39: #{_lambda_.14} parent=5 // pred_region
        %s301 = ssub.s32 %s21, 1
        %s302 = sand.u32 %s48, 1
        %s303 = scalar_lea.sflag [#allocation3], %s302
        %s304 = sand.u32 %s48, 1
        %s305 = smul.addr %s304, 4
        %s306 = scalar_lea.vmem [#allocation2], %s305
        // Predicated region
        $region41: #{_lambda_.14} parent=39 // pred_check
          %p307 = pneg %p61
        $region42: #{_lambda_.14} parent=39 // pred_check_branch
          %309 = sbr.rel (%p307) target = $region44
        $region43: #{_lambda_.14} parent=39 // pred_region
          %310 = dma.done %s303, 64
        $region44: #{_lambda_.14} parent=39 // pred_fallthru
          _
        // Predicated region
        $region45: #{_lambda_.14} parent=39 // pred_check
          %p311 = pneg %p82
        $region46: #{_lambda_.14} parent=39 // pred_check_branch
          %313 = sbr.rel (%p311) target = $region48
        $region47: #{_lambda_.14} parent=39 // pred_region
          %314 = dma.done [#allocation6], 64
        $region48: #{_lambda_.14} parent=39 // pred_fallthru
          _
        // Predicated region
        $region49: #{_lambda_.14} parent=39 // pred_check
          %p315 = pneg %p103
        $region50: #{_lambda_.14} parent=39 // pred_check_branch
          %317 = sbr.rel (%p315) target = $region52
        $region51: #{_lambda_.14} parent=39 // pred_region
          %318 = dma.done [#allocation6], 64
        $region52: #{_lambda_.14} parent=39 // pred_fallthru
          _
        %s319 = sand.u32 %s26, 1
        %s320 = scalar_lea.sflag [#allocation9], %s319
        %s321 = sand.u32 %s118, 1
        %s322 = smul.addr %s321, 32
        %s323 = scalar_lea.vmem [#allocation8], %s322
        // Predicated region
        $region53: #{_lambda_.14} parent=39 // pred_check
          %p324 = pneg %p131
        $region54: #{_lambda_.14} parent=39 // pred_check_branch
          %326 = sbr.rel (%p324) target = $region56
        $region55: #{_lambda_.14} parent=39 // pred_region
          %327 = dma.done %s320, 512
        $region56: #{_lambda_.14} parent=39 // pred_fallthru
          _
        %s328 = sand.u32 %s26, 1
        %s329 = scalar_lea.sflag [#allocation9], %s328
        %s330 = sand.u32 %s146, 1
        %s331 = smul.addr %s330, 32
        %s332 = scalar_lea.vmem [#allocation10], %s331
        // Predicated region
        $region57: #{_lambda_.14} parent=39 // pred_check
          %p333 = pneg %p159
        $region58: #{_lambda_.14} parent=39 // pred_check_branch
          %335 = sbr.rel (%p333) target = $region60
        $region59: #{_lambda_.14} parent=39 // pred_region
          %336 = dma.done %s329, 512
        $region60: #{_lambda_.14} parent=39 // pred_fallthru
          _
        %s337 = sand.u32 %s48, 1
        %s338 = scalar_lea.sflag [#allocation3], %s337
        %s339 = sand.u32 %s48, 1
        %s340 = smul.addr %s339, 4
        %s341 = scalar_lea.vmem [#allocation2], %s340
        %p342 = pneg %p61
        %p343 = pneg %p58
        %p344 = pneg %p82
        %p345 = pneg %p79
        %p346 = pneg %p103
        %p347 = pneg %p100
        %s348 = sand.u32 %s26, 1
        %s349 = scalar_lea.sflag [#allocation9], %s348
        %s350 = sand.u32 %s118, 1
        %s351 = smul.addr %s350, 32
        %s352 = scalar_lea.vmem [#allocation8], %s351
        %p353 = pneg %p131
        %p354 = pneg %p128
        %s355 = sand.u32 %s26, 1
        %s356 = scalar_lea.sflag [#allocation9], %s355
        %s357 = sand.u32 %s146, 1
        %s358 = smul.addr %s357, 32
        %s359 = scalar_lea.vmem [#allocation10], %s358
        %p360 = pneg %p159
        %p361 = pneg %p156
        %p362 = pneg %p187
        %p363 = pneg %p184
        %s364 = sand.u32 %s174, 1
        %s365 = scalar_lea.sflag [#allocation4], %s364
        %s366 = sand.u32 %s174, 1
        %s367 = smul.addr %s366, 4
        %s368 = scalar_lea.vmem [#allocation11], %s367
        %s369 = smul.u32 4, %s31
        %s370 = smul.u32 4, %s31
        %v371 = vld [vmem:[%s306] sm:$0xf]
        %vm372 = vcmp.ge.f32.partialorder %v371, 0.0
        %v373 = vmul.f32 %v371, 0.2
        %v374 = vsel %vm372, %v371, %v373
        %v376 = vrot.slane %v374, 4
        %377 = vrot.lane.b32.xlu0 %v376, 127
        %v378 = vpop.permute.xlu0 %377
        %380 = vrot.lane.b32.xlu0 %v374, 126
        %v381 = vpop.permute.xlu0 %380
        %vm382 = vcmask 1043456
        %v383 = vsel %vm382, %v374, %v378
        %v384 = vld [vmem:[#allocation5] sm:$0xf]
        %v385 = vld [vmem:[#allocation7] sm:$0xf]
        %387 = vset.pattern.permute.xlu0 0
        %388 = vperm.xlu0 %387, %v385
        %v389 = vpop.permute.xlu0 %388
        %vm391 = vcmask 97280
        %v393 = vsel %vm391, %v384, 0
        %v395 = vsel %vm382, %v381, 0
        %397 = vmatprep.subr.mxu0 0.0
        %398 = vmatpush1.msra.mxu0 %v383
        %399 = vmatprep.subr.mxu0 0.0
        %400 = vmatpush1.msra.mxu0 %v395
        %401 = vmatprep.subr.mxu0 0.0
        %402 = vmatpush1.msra.mxu0 0.0
        %403 = vmatprep.subr.mxu0 0.0
        %404 = vmatpush1.msra.mxu0 0.0
        %405 = vmatprep.subr.mxu0 0.0
        %406 = vmatpush1.msra.mxu0 0.0
        %407 = vmatprep.subr.mxu0 0.0
        %408 = vmatpush1.msra.mxu0 0.0
        %409 = vmatprep.subr.mxu0 0.0
        %410 = vmatpush1.msra.mxu0 0.0
        %411 = vmatprep.subr.mxu0 0.0
        %412 = vmatpush1.msra.mxu0 0.0
        %413 = vmatprep.subr.mxu0 0.0
        %414 = vmatpush1.msra.mxu0 0.0
        %415 = vmatprep.subr.mxu0 0.0
        %416 = vmatpush1.msra.mxu0 0.0
        %417 = vmatprep.subr.mxu0 0.0
        %418 = vmatpush1.msra.mxu0 0.0
        %419 = vmatprep.subr.mxu0 0.0
        %420 = vmatpush1.msra.mxu0 0.0
        %421 = vmatprep.subr.mxu0 0.0
        %422 = vmatpush1.msra.mxu0 0.0
        %423 = vmatprep.subr.mxu0 0.0
        %424 = vmatpush1.msra.mxu0 0.0
        %425 = vmatprep.subr.mxu0 0.0
        %426 = vmatpush1.msra.mxu0 0.0
        %427 = vmatprep.subr.mxu0 0.0
        %428 = vmatpush1.msra.mxu0 0.0
        %429 = vmatprep.subr.mxu0 0.0
        %430 = vmatpush1.msra.mxu0 0.0
        %431 = vmatprep.subr.mxu0 0.0
        %432 = vmatpush1.msra.mxu0 0.0
        %433 = vmatprep.subr.mxu0 0.0
        %434 = vmatpush1.msra.mxu0 0.0
        %435 = vmatprep.subr.mxu0 0.0
        %436 = vmatpush1.msra.mxu0 0.0
        %437 = vmatprep.subr.mxu0 0.0
        %438 = vmatpush1.msra.mxu0 0.0
        %439 = vmatprep.subr.mxu0 0.0
        %440 = vmatpush1.msra.mxu0 0.0
        %441 = vmatprep.subr.mxu0 0.0
        %442 = vmatpush1.msra.mxu0 0.0
        %443 = vmatprep.subr.mxu0 0.0
        %444 = vmatpush1.msra.mxu0 0.0
        %445 = vmatprep.subr.mxu0 0.0
        %446 = vmatpush1.msra.mxu0 0.0
        %447 = vmatprep.subr.mxu0 0.0
        %448 = vmatpush1.msra.mxu0 0.0
        %449 = vmatprep.subr.mxu0 0.0
        %450 = vmatpush1.msra.mxu0 0.0
        %451 = vmatprep.subr.mxu0 0.0
        %452 = vmatpush1.msra.mxu0 0.0
        %453 = vmatprep.subr.mxu0 0.0
        %454 = vmatpush1.msra.mxu0 0.0
        %455 = vmatprep.subr.mxu0 0.0
        %456 = vmatpush1.msra.mxu0 0.0
        %457 = vmatprep.subr.mxu0 0.0
        %458 = vmatpush1.msra.mxu0 0.0
        %459 = vmatprep.subr.mxu0 0.0
        %460 = vmatpush1.msra.mxu0 0.0
        %461 = vmatprep.mubr.f32.mxu0 0.0
        %462 = vmatmul.mubr.f32.gmra.mrb[0].mxu0 %v393
        %v463 = vpop.f32.mrb[0].mxu0
        %v464 = vadd.f32 %v389, %v463
        %v465 = vpop.f32.mrb[0].mxu0
        %466 = vdwg.mxu0
        %vm467 = vcmp.ge.f32.partialorder %v464, 0.0
        %v468 = vmul.f32 %v464, 0.2
        %v469 = vsel %vm467, %v464, %v468
        %s470 = smul.u32 %s31, 32
        %s471 = ssub.s32 %s470, 1
        %v472 = vlaneseq
        %v473 = vand.u32 %v472, 127
        %v474 = vstv %s471
        %v475 = vadd.s32 %v474, %v473
        %vm476 = vcmp.ge.s32.totalorder %v475, 0
        %vm477 = vcmp.lt.s32.totalorder %v475, 32
        %vm478 = vmand %vm476, %vm477
        %v479 = vsel %vm478, 1, 0
        %vm480 = vcmp.eq.s32.totalorder %v479, 1
        %v481 = vsel %vm480, %v469, 0.0
        %v483 = vrot.slane %v481, 4
        %484 = vrot.lane.b32.xlu0 %v483, 127
        %v485 = vpop.permute.xlu0 %484
        %487 = vrot.lane.b32.xlu0 %v481, 126
        %v488 = vpop.permute.xlu0 %487
        %v489 = vsel %vm382, %v481, %v485
        %v490 = vld [vmem:[%s323] sm:$0xff]
        %v491 = vld [vmem:[%s332] sm:$0xff]
        %493 = vset.pattern.permute.xlu0 0
        %494 = vperm.xlu0 %493, %v491
        %v495 = vpop.permute.xlu0 %494
        %v498 = vsel %vm391, %v490, 0
        %v500 = vsel %vm382, %v488, 0
        %502 = vmatprep.subr.mxu0 0.0
        %503 = vmatpush1.msra.mxu0 %v489
        %504 = vmatprep.subr.mxu0 0.0
        %505 = vmatpush1.msra.mxu0 %v500
        %506 = vmatprep.subr.mxu0 0.0
        %507 = vmatpush1.msra.mxu0 0.0
        %508 = vmatprep.subr.mxu0 0.0
        %509 = vmatpush1.msra.mxu0 0.0
        %510 = vmatprep.subr.mxu0 0.0
        %511 = vmatpush1.msra.mxu0 0.0
        %512 = vmatprep.subr.mxu0 0.0
        %513 = vmatpush1.msra.mxu0 0.0
        %514 = vmatprep.subr.mxu0 0.0
        %515 = vmatpush1.msra.mxu0 0.0
        %516 = vmatprep.subr.mxu0 0.0
        %517 = vmatpush1.msra.mxu0 0.0
        %518 = vmatprep.subr.mxu0 0.0
        %519 = vmatpush1.msra.mxu0 0.0
        %520 = vmatprep.subr.mxu0 0.0
        %521 = vmatpush1.msra.mxu0 0.0
        %522 = vmatprep.subr.mxu0 0.0
        %523 = vmatpush1.msra.mxu0 0.0
        %524 = vmatprep.subr.mxu0 0.0
        %525 = vmatpush1.msra.mxu0 0.0
        %526 = vmatprep.subr.mxu0 0.0
        %527 = vmatpush1.msra.mxu0 0.0
        %528 = vmatprep.subr.mxu0 0.0
        %529 = vmatpush1.msra.mxu0 0.0
        %530 = vmatprep.subr.mxu0 0.0
        %531 = vmatpush1.msra.mxu0 0.0
        %532 = vmatprep.subr.mxu0 0.0
        %533 = vmatpush1.msra.mxu0 0.0
        %534 = vmatprep.subr.mxu0 0.0
        %535 = vmatpush1.msra.mxu0 0.0
        %536 = vmatprep.subr.mxu0 0.0
        %537 = vmatpush1.msra.mxu0 0.0
        %538 = vmatprep.subr.mxu0 0.0
        %539 = vmatpush1.msra.mxu0 0.0
        %540 = vmatprep.subr.mxu0 0.0
        %541 = vmatpush1.msra.mxu0 0.0
        %542 = vmatprep.subr.mxu0 0.0
        %543 = vmatpush1.msra.mxu0 0.0
        %544 = vmatprep.subr.mxu0 0.0
        %545 = vmatpush1.msra.mxu0 0.0
        %546 = vmatprep.subr.mxu0 0.0
        %547 = vmatpush1.msra.mxu0 0.0
        %548 = vmatprep.subr.mxu0 0.0
        %549 = vmatpush1.msra.mxu0 0.0
        %550 = vmatprep.subr.mxu0 0.0
        %551 = vmatpush1.msra.mxu0 0.0
        %552 = vmatprep.subr.mxu0 0.0
        %553 = vmatpush1.msra.mxu0 0.0
        %554 = vmatprep.subr.mxu0 0.0
        %555 = vmatpush1.msra.mxu0 0.0
        %556 = vmatprep.subr.mxu0 0.0
        %557 = vmatpush1.msra.mxu0 0.0
        %558 = vmatprep.subr.mxu0 0.0
        %559 = vmatpush1.msra.mxu0 0.0
        %560 = vmatprep.subr.mxu0 0.0
        %561 = vmatpush1.msra.mxu0 0.0
        %562 = vmatprep.subr.mxu0 0.0
        %563 = vmatpush1.msra.mxu0 0.0
        %564 = vmatprep.subr.mxu0 0.0
        %565 = vmatpush1.msra.mxu0 0.0
        %566 = vmatprep.mubr.f32.mxu0 0.0
        %567 = vmatmul.mubr.f32.gmra.mrb[0].mxu0 %v498
        %v568 = vpop.f32.mrb[0].mxu0
        %v569 = vadd.f32 %v495, %v568
        %v570 = vpop.f32.mrb[0].mxu0
        %571 = vdwg.mxu0
        %s572 = scalar_lea.vmem %s323, 8 [#allocation8]
        %v573 = vld [vmem:[%s572] sm:$0xff]
        %s574 = scalar_lea.vmem %s332, 8 [#allocation10]
        %v575 = vld [vmem:[%s574] sm:$0xff]
        %577 = vset.pattern.permute.xlu0 0
        %578 = vperm.xlu0 %577, %v575
        %v579 = vpop.permute.xlu0 %578
        %582 = vrot.lane.b32.xlu0 %v489, 120
        %v583 = vpop.permute.xlu0 %582
        %584 = vrot.lane.b32.xlu0 %v488, 120
        %v585 = vpop.permute.xlu0 %584
        %v588 = vsel %vm391, %v573, 0
        %v590 = vsel %vm382, %v585, 0
        %592 = vmatprep.subr.mxu0 0.0
        %593 = vmatpush1.msra.mxu0 %v583
        %594 = vmatprep.subr.mxu0 0.0
        %595 = vmatpush1.msra.mxu0 %v590
        %596 = vmatprep.subr.mxu0 0.0
        %597 = vmatpush1.msra.mxu0 0.0
        %598 = vmatprep.subr.mxu0 0.0
        %599 = vmatpush1.msra.mxu0 0.0
        %600 = vmatprep.subr.mxu0 0.0
        %601 = vmatpush1.msra.mxu0 0.0
        %602 = vmatprep.subr.mxu0 0.0
        %603 = vmatpush1.msra.mxu0 0.0
        %604 = vmatprep.subr.mxu0 0.0
        %605 = vmatpush1.msra.mxu0 0.0
        %606 = vmatprep.subr.mxu0 0.0
        %607 = vmatpush1.msra.mxu0 0.0
        %608 = vmatprep.subr.mxu0 0.0
        %609 = vmatpush1.msra.mxu0 0.0
        %610 = vmatprep.subr.mxu0 0.0
        %611 = vmatpush1.msra.mxu0 0.0
        %612 = vmatprep.subr.mxu0 0.0
        %613 = vmatpush1.msra.mxu0 0.0
        %614 = vmatprep.subr.mxu0 0.0
        %615 = vmatpush1.msra.mxu0 0.0
        %616 = vmatprep.subr.mxu0 0.0
        %617 = vmatpush1.msra.mxu0 0.0
        %618 = vmatprep.subr.mxu0 0.0
        %619 = vmatpush1.msra.mxu0 0.0
        %620 = vmatprep.subr.mxu0 0.0
        %621 = vmatpush1.msra.mxu0 0.0
        %622 = vmatprep.subr.mxu0 0.0
        %623 = vmatpush1.msra.mxu0 0.0
        %624 = vmatprep.subr.mxu0 0.0
        %625 = vmatpush1.msra.mxu0 0.0
        %626 = vmatprep.subr.mxu0 0.0
        %627 = vmatpush1.msra.mxu0 0.0
        %628 = vmatprep.subr.mxu0 0.0
        %629 = vmatpush1.msra.mxu0 0.0
        %630 = vmatprep.subr.mxu0 0.0
        %631 = vmatpush1.msra.mxu0 0.0
        %632 = vmatprep.subr.mxu0 0.0
        %633 = vmatpush1.msra.mxu0 0.0
        %634 = vmatprep.subr.mxu0 0.0
        %635 = vmatpush1.msra.mxu0 0.0
        %636 = vmatprep.subr.mxu0 0.0
        %637 = vmatpush1.msra.mxu0 0.0
        %638 = vmatprep.subr.mxu0 0.0
        %639 = vmatpush1.msra.mxu0 0.0
        %640 = vmatprep.subr.mxu0 0.0
        %641 = vmatpush1.msra.mxu0 0.0
        %642 = vmatprep.subr.mxu0 0.0
        %643 = vmatpush1.msra.mxu0 0.0
        %644 = vmatprep.subr.mxu0 0.0
        %645 = vmatpush1.msra.mxu0 0.0
        %646 = vmatprep.subr.mxu0 0.0
        %647 = vmatpush1.msra.mxu0 0.0
        %648 = vmatprep.subr.mxu0 0.0
        %649 = vmatpush1.msra.mxu0 0.0
        %650 = vmatprep.subr.mxu0 0.0
        %651 = vmatpush1.msra.mxu0 0.0
        %652 = vmatprep.subr.mxu0 0.0
        %653 = vmatpush1.msra.mxu0 0.0
        %654 = vmatprep.subr.mxu0 0.0
        %655 = vmatpush1.msra.mxu0 0.0
        %656 = vmatprep.mubr.f32.mxu0 0.0
        %657 = vmatmul.mubr.f32.gmra.mrb[0].mxu0 %v588
        %v658 = vpop.f32.mrb[0].mxu0
        %v659 = vadd.f32 %v579, %v658
        %v660 = vpop.f32.mrb[0].mxu0
        %661 = vdwg.mxu0
        %s662 = scalar_lea.vmem %s323, 16 [#allocation8]
        %v663 = vld [vmem:[%s662] sm:$0xff]
        %s664 = scalar_lea.vmem %s332, 16 [#allocation10]
        %v665 = vld [vmem:[%s664] sm:$0xff]
        %667 = vset.pattern.permute.xlu0 0
        %668 = vperm.xlu0 %667, %v665
        %v669 = vpop.permute.xlu0 %668
        %671 = vrot.lane.b32.xlu0 %v489, 112
        %v672 = vpop.permute.xlu0 %671
        %673 = vrot.lane.b32.xlu0 %v488, 112
        %v674 = vpop.permute.xlu0 %673
        %v677 = vsel %vm391, %v663, 0
        %v679 = vsel %vm382, %v674, 0
        %681 = vmatprep.subr.mxu0 0.0
        %682 = vmatpush1.msra.mxu0 %v672
        %683 = vmatprep.subr.mxu0 0.0
        %684 = vmatpush1.msra.mxu0 %v679
        %685 = vmatprep.subr.mxu0 0.0
        %686 = vmatpush1.msra.mxu0 0.0
        %687 = vmatprep.subr.mxu0 0.0
        %688 = vmatpush1.msra.mxu0 0.0
        %689 = vmatprep.subr.mxu0 0.0
        %690 = vmatpush1.msra.mxu0 0.0
        %691 = vmatprep.subr.mxu0 0.0
        %692 = vmatpush1.msra.mxu0 0.0
        %693 = vmatprep.subr.mxu0 0.0
        %694 = vmatpush1.msra.mxu0 0.0
        %695 = vmatprep.subr.mxu0 0.0
        %696 = vmatpush1.msra.mxu0 0.0
        %697 = vmatprep.subr.mxu0 0.0
        %698 = vmatpush1.msra.mxu0 0.0
        %699 = vmatprep.subr.mxu0 0.0
        %700 = vmatpush1.msra.mxu0 0.0
        %701 = vmatprep.subr.mxu0 0.0
        %702 = vmatpush1.msra.mxu0 0.0
        %703 = vmatprep.subr.mxu0 0.0
        %704 = vmatpush1.msra.mxu0 0.0
        %705 = vmatprep.subr.mxu0 0.0
        %706 = vmatpush1.msra.mxu0 0.0
        %707 = vmatprep.subr.mxu0 0.0
        %708 = vmatpush1.msra.mxu0 0.0
        %709 = vmatprep.subr.mxu0 0.0
        %710 = vmatpush1.msra.mxu0 0.0
        %711 = vmatprep.subr.mxu0 0.0
        %712 = vmatpush1.msra.mxu0 0.0
        %713 = vmatprep.subr.mxu0 0.0
        %714 = vmatpush1.msra.mxu0 0.0
        %715 = vmatprep.subr.mxu0 0.0
        %716 = vmatpush1.msra.mxu0 0.0
        %717 = vmatprep.subr.mxu0 0.0
        %718 = vmatpush1.msra.mxu0 0.0
        %719 = vmatprep.subr.mxu0 0.0
        %720 = vmatpush1.msra.mxu0 0.0
        %721 = vmatprep.subr.mxu0 0.0
        %722 = vmatpush1.msra.mxu0 0.0
        %723 = vmatprep.subr.mxu0 0.0
        %724 = vmatpush1.msra.mxu0 0.0
        %725 = vmatprep.subr.mxu0 0.0
        %726 = vmatpush1.msra.mxu0 0.0
        %727 = vmatprep.subr.mxu0 0.0
        %728 = vmatpush1.msra.mxu0 0.0
        %729 = vmatprep.subr.mxu0 0.0
        %730 = vmatpush1.msra.mxu0 0.0
        %731 = vmatprep.subr.mxu0 0.0
        %732 = vmatpush1.msra.mxu0 0.0
        %733 = vmatprep.subr.mxu0 0.0
        %734 = vmatpush1.msra.mxu0 0.0
        %735 = vmatprep.subr.mxu0 0.0
        %736 = vmatpush1.msra.mxu0 0.0
        %737 = vmatprep.subr.mxu0 0.0
        %738 = vmatpush1.msra.mxu0 0.0
        %739 = vmatprep.subr.mxu0 0.0
        %740 = vmatpush1.msra.mxu0 0.0
        %741 = vmatprep.subr.mxu0 0.0
        %742 = vmatpush1.msra.mxu0 0.0
        %743 = vmatprep.subr.mxu0 0.0
        %744 = vmatpush1.msra.mxu0 0.0
        %745 = vmatprep.mubr.f32.mxu0 0.0
        %746 = vmatmul.mubr.f32.gmra.mrb[0].mxu0 %v677
        %v747 = vpop.f32.mrb[0].mxu0
        %v748 = vadd.f32 %v669, %v747
        %v749 = vpop.f32.mrb[0].mxu0
        %750 = vdwg.mxu0
        %s751 = scalar_lea.vmem %s323, 24 [#allocation8]
        %v752 = vld [vmem:[%s751] sm:$0xff]
        %s753 = scalar_lea.vmem %s332, 24 [#allocation10]
        %v754 = vld [vmem:[%s753] sm:$0xff]
        %756 = vset.pattern.permute.xlu0 0
        %757 = vperm.xlu0 %756, %v754
        %v758 = vpop.permute.xlu0 %757
        %760 = vrot.lane.b32.xlu0 %v489, 104
        %v761 = vpop.permute.xlu0 %760
        %762 = vrot.lane.b32.xlu0 %v488, 104
        %v763 = vpop.permute.xlu0 %762
        %v766 = vsel %vm391, %v752, 0
        %v768 = vsel %vm382, %v763, 0
        %770 = vmatprep.subr.mxu0 0.0
        %771 = vmatpush1.msra.mxu0 %v761
        %772 = vmatprep.subr.mxu0 0.0
        %773 = vmatpush1.msra.mxu0 %v768
        %774 = vmatprep.subr.mxu0 0.0
        %775 = vmatpush1.msra.mxu0 0.0
        %776 = vmatprep.subr.mxu0 0.0
        %777 = vmatpush1.msra.mxu0 0.0
        %778 = vmatprep.subr.mxu0 0.0
        %779 = vmatpush1.msra.mxu0 0.0
        %780 = vmatprep.subr.mxu0 0.0
        %781 = vmatpush1.msra.mxu0 0.0
        %782 = vmatprep.subr.mxu0 0.0
        %783 = vmatpush1.msra.mxu0 0.0
        %784 = vmatprep.subr.mxu0 0.0
        %785 = vmatpush1.msra.mxu0 0.0
        %786 = vmatprep.subr.mxu0 0.0
        %787 = vmatpush1.msra.mxu0 0.0
        %788 = vmatprep.subr.mxu0 0.0
        %789 = vmatpush1.msra.mxu0 0.0
        %790 = vmatprep.subr.mxu0 0.0
        %791 = vmatpush1.msra.mxu0 0.0
        %792 = vmatprep.subr.mxu0 0.0
        %793 = vmatpush1.msra.mxu0 0.0
        %794 = vmatprep.subr.mxu0 0.0
        %795 = vmatpush1.msra.mxu0 0.0
        %796 = vmatprep.subr.mxu0 0.0
        %797 = vmatpush1.msra.mxu0 0.0
        %798 = vmatprep.subr.mxu0 0.0
        %799 = vmatpush1.msra.mxu0 0.0
        %800 = vmatprep.subr.mxu0 0.0
        %801 = vmatpush1.msra.mxu0 0.0
        %802 = vmatprep.subr.mxu0 0.0
        %803 = vmatpush1.msra.mxu0 0.0
        %804 = vmatprep.subr.mxu0 0.0
        %805 = vmatpush1.msra.mxu0 0.0
        %806 = vmatprep.subr.mxu0 0.0
        %807 = vmatpush1.msra.mxu0 0.0
        %808 = vmatprep.subr.mxu0 0.0
        %809 = vmatpush1.msra.mxu0 0.0
        %810 = vmatprep.subr.mxu0 0.0
        %811 = vmatpush1.msra.mxu0 0.0
        %812 = vmatprep.subr.mxu0 0.0
        %813 = vmatpush1.msra.mxu0 0.0
        %814 = vmatprep.subr.mxu0 0.0
        %815 = vmatpush1.msra.mxu0 0.0
        %816 = vmatprep.subr.mxu0 0.0
        %817 = vmatpush1.msra.mxu0 0.0
        %818 = vmatprep.subr.mxu0 0.0
        %819 = vmatpush1.msra.mxu0 0.0
        %820 = vmatprep.subr.mxu0 0.0
        %821 = vmatpush1.msra.mxu0 0.0
        %822 = vmatprep.subr.mxu0 0.0
        %823 = vmatpush1.msra.mxu0 0.0
        %824 = vmatprep.subr.mxu0 0.0
        %825 = vmatpush1.msra.mxu0 0.0
        %826 = vmatprep.subr.mxu0 0.0
        %827 = vmatpush1.msra.mxu0 0.0
        %828 = vmatprep.subr.mxu0 0.0
        %829 = vmatpush1.msra.mxu0 0.0
        %830 = vmatprep.subr.mxu0 0.0
        %831 = vmatpush1.msra.mxu0 0.0
        %832 = vmatprep.subr.mxu0 0.0
        %833 = vmatpush1.msra.mxu0 0.0
        %834 = vmatprep.mubr.f32.mxu0 0.0
        %835 = vmatmul.mubr.f32.gmra.mrb[0].mxu0 %v766
        %v836 = vpop.f32.mrb[0].mxu0
        %v837 = vadd.f32 %v758, %v836
        %v838 = vpop.f32.mrb[0].mxu0
        %839 = vdwg.mxu0
        %841 = vrot.lane.b32.xlu0 %v659, 8
        %v842 = vpop.permute.xlu0 %841
        %845 = vrot.lane.b32.xlu0 %v748, 16
        %v846 = vpop.permute.xlu0 %845
        %849 = vrot.lane.b32.xlu0 %v837, 24
        %v850 = vpop.permute.xlu0 %849
        %vm852 = vcmask 64512
        %v853 = vsel %vm852, %v569, %v842
        %vm854 = vcmask 130048
        %v855 = vsel %vm854, %v853, %v846
        %vm856 = vcmask 195584
        %v857 = vsel %vm856, %v855, %v850
        %v858 = vxor.u32 %v857, 2147483648
        %v859 = vmul.f32 %v858, 1.442695
        %v860 = vpow.pop %v859
        %v861 = vadd.f32 %v860, 1.0
        %v862 = vrcp.pop %v861
        %v863 = vmul.f32 1.0, %v862
        %v864 = vtanh.pop %v857
        %v866 = vrot.slane %v864, 4
        %v868 = vmul.f32 %v863, %v866
        %870 = vrot.lane.b32.xlu0 %v868, 2
        %v871 = vpop.permute.xlu0 %870
        %v873 = vadd.f32 %v371, %v871
        %875 = vrot.lane.b32.xlu0 %v873, 126
        %v876 = vpop.permute.xlu0 %875
        %vm878 = vcmask 257024
        %879 = vst.msk [vmem:[%s368] sm:$0xf] %vm878, %v876
        %s880 = sand.u32 %s174, 1
        %s881 = scalar_lea.sflag [#allocation4], %s880
        %s882 = sand.u32 %s174, 1
        %s883 = smul.addr %s882, 4
        %s884 = scalar_lea.vmem [#allocation11], %s883
        // Predicated region
        $region61: #{_lambda_.14} parent=39 // pred_check
          %p885 = pneg %p184
        $region62: #{_lambda_.14} parent=39 // pred_check_branch
          %887 = sbr.rel (%p885) target = $region64
        $region63: #{_lambda_.14} parent=39 // pred_region
          %s889 = ssub.s32 64, 64
          %890 = vsyncadd %s881, %s889
          %s891 = sadd.s32 %s31, %s30
          %s892 = smul.addr %s891, 64
          %s893 = scalar_lea.hbm %s5, %s892
          %s895 = sshll.u32 %s884, 4
          %s896 = int_to_ptr.vmem [resolvable:$true] %s895
          %898 = dma.vmem_to_hbm [thread:$0]  %s896, 64, %s893, %s881
        $region64: #{_lambda_.14} parent=39 // pred_fallthru
          _
      $region40: #{_lambda_.14} parent=5 // pred_fallthru
        _
      %p899 = scmp.le.s32.totalorder 2, %s21
      // Predicated region
      $region65: #{_lambda_.14} parent=5 // pred_check
        %p900 = pneg %p899
      $region66: #{_lambda_.14} parent=5 // pred_check_branch
        %902 = sbr.rel (%p900) target = $region68
      $region67: #{_lambda_.14} parent=5 // pred_region
        %s903 = ssub.s32 %s21, 2
        // Predicated region
        $region69: #{_lambda_.14} parent=67 // pred_check
          %p904 = pneg %p190
        $region70: #{_lambda_.14} parent=67 // pred_check_branch
          %906 = sbr.rel (%p904) target = $region72
        $region71: #{_lambda_.14} parent=67 // pred_region
          %s907 = sand.u32 %s175, 1
          %s908 = scalar_lea.sflag [#allocation4], %s907
          %s909 = sand.u32 %s175, 1
          %s910 = smul.addr %s909, 4
          %s911 = scalar_lea.vmem [#allocation11], %s910
          %912 = dma.done %s908, 64
        $region72: #{_lambda_.14} parent=67 // pred_fallthru
          _
      $region68: #{_lambda_.14} parent=5 // pred_fallthru
        _
    $region6: #{_lambda_.14} parent=1 // loop_footer
      %s25 = sadd.s32 1, %s21
    $region7: #{_lambda_.14} parent=1 // loop_footer_branch
      %20 = sbr.rel target = $region3
    $region8: #{_lambda_.14} parent=1 // loop_exit
      _
    %913 = vsyncpa [#allocation3], 1
    %s914 = scalar_lea.sflag [#allocation3], 1
    %915 = vsyncpa %s914, 1
    %916 = vsyncpa [#allocation6], 1
    %917 = vsyncpa [#allocation9], 1
    %s918 = scalar_lea.sflag [#allocation9], 1
    %919 = vsyncpa %s918, 1
    %920 = vsyncpa [#allocation4], 1
    %s921 = scalar_lea.sflag [#allocation4], 1
    %922 = vsyncpa %s921, 1

// kernel: _lambda_.15
$region0: #{_lambda_.15}
  #allocation0 [shape = 'u32[]', space=smem, size = 0x4, offset = 0x4, fixed_abs, tag = 'smem constant byte address 0x4 - core index']
  #allocation1 [shape = 'u32[144,128]{1,0:T(1,128)}', space=vmem, size = 0x12000, scoped, tag = 'internal scratch']
  %s0 = inlined_call_operand.hbm [shape: f32[2,1,4,40], index: 0, kind: input, shape index: {}]
  %s1 = inlined_call_operand.hbm [shape: f32[4,12], index: 1, kind: input, shape index: {}]
  %s2 = inlined_call_operand.hbm [shape: f32[4,1], index: 2, kind: input, shape index: {}]
  %s3 = inlined_call_operand.hbm [shape: f32[2,4,16,12], index: 3, kind: input, shape index: {}]
  %s4 = inlined_call_operand.hbm [shape: f32[2,4,16,1], index: 4, kind: input, shape index: {}]
  %s5 = inlined_call_operand.hbm [shape: f32[2,4,32], index: 5, kind: output, shape index: {}]
  %s6 = sld [smem:[#allocation0]]
  $region73: #{_lambda_.15} parent=0
    _
  %s8 = ssub.s32 1, %s6
  %s9 = scalar_select 0, %s8, %s6
  $region1: #{_lambda_.15} parent=0
    #allocation2 [shape = 'u8[4096]{0}', space=vmem, size = 0x1000, scoped, tag = 'input window, operand 0']
    #allocation3 [shape = 's32[2]{0}', space=sflag, size = 0x8, scoped, tag = 'scoped memory for _lambda_.15']
    #allocation4 [shape = 's32[2]{0}', space=sflag, size = 0x8, scoped, tag = 'scoped memory for _lambda_.15']
    #allocation5 [shape = 'u8[2048]{0}', space=vmem, size = 0x800, scoped, tag = 'input window, operand 1, single buffered']
    #allocation6 [shape = 's32[1]{0}', space=sflag, size = 0x4, scoped, tag = 'scoped memory for _lambda_.15']
    #allocation7 [shape = 'u8[2048]{0}', space=vmem, size = 0x800, scoped, tag = 'input window, operand 2, single buffered']
    #allocation8 [shape = 'u8[32768]{0}', space=vmem, size = 0x8000, scoped, tag = 'input window, operand 3']
    #allocation9 [shape = 's32[2]{0}', space=sflag, size = 0x8, scoped, tag = 'scoped memory for _lambda_.15']
    #allocation10 [shape = 'u8[32768]{0}', space=vmem, size = 0x8000, scoped, tag = 'input window, operand 4']
    #allocation11 [shape = 'u8[4096]{0}', space=vmem, size = 0x1000, scoped, tag = 'output window, operand 0']
    %10 = vsyncpa [#allocation3], 0
    %s11 = scalar_lea.sflag [#allocation3], 1
    %12 = vsyncpa %s11, 0
    %13 = vsyncpa [#allocation6], 0
    %14 = vsyncpa [#allocation9], 0
    %s15 = scalar_lea.sflag [#allocation9], 1
    %16 = vsyncpa %s15, 0
    %17 = vsyncpa [#allocation4], 0
    %s18 = scalar_lea.sflag [#allocation4], 1
    %19 = vsyncpa %s18, 0
    loop: start=0, step=1, limit=4
    $region2: #{_lambda_.15} parent=1 // loop_pre_header
      _
    $region3: #{_lambda_.15} parent=1 // loop_header
      %s21 = sphi 0, %s25
      %p22 = scmp.ge.s32.totalorder %s21, 4
      %s28 = sphi 0, %s40
      %s29 = sphi 0, %s36
      %s30 = sphi 0, %s28
      %s31 = sphi 0, %s29
      %s32 = sphi 0, %s30
      %s33 = sphi 0, %s31
      %s45 = sphi 0, %s47
      %s48 = sphi 0, %s45
      %s49 = sphi 0, %s48
      %s65 = sphi 0, %s49
      %s69 = sphi 0, %s69
      %s71 = sphi 0, %s69
      %s72 = sphi 0, %s71
      %s86 = sphi 0, %s72
      %s90 = sphi 0, %s90
      %s92 = sphi 0, %s90
      %s93 = sphi 0, %s92
      %s107 = sphi 0, %s93
      %s115 = sphi 0, %s117
      %s118 = sphi 0, %s115
      %s119 = sphi 0, %s118
      %s135 = sphi 0, %s119
      %s143 = sphi 0, %s145
      %s146 = sphi 0, %s143
      %s147 = sphi 0, %s146
      %s163 = sphi 0, %s147
      %s171 = sphi 0, %s173
      %s174 = sphi 0, %s171
      %s175 = sphi 0, %s174
      %s191 = sphi 0, %s175
    $region4: #{_lambda_.15} parent=1 // loop_header_branch
      %24 = sbr.rel (%p22) target = $region8
    $region5: #{_lambda_.15} parent=1 // loop_body
      %s26 = ssub.s32 %s21, 1
      %s27 = ssub.s32 %s21, 2
      %s34 = sadd.s32 1, %s29
      %p35 = scmp.ge.s32.totalorder %s34, 1
      %s36 = scalar_select %p35, 0, %s34
      %s37 = sadd.s32 1, %s28
      %s38 = scalar_select %p35, %s37, %s28
      %p39 = scmp.ge.s32.totalorder %s38, 2
      %s40 = scalar_select %p39, 0, %s38
      %s41 = ssub.s32 %s28, %s40
      %s42 = ssub.s32 %s29, %s36
      %s43 = sor.u32 %s41, %s42
      %p44 = scmp.eq.s32.totalorder %s43, 0
      %s46 = sadd.s32 %s45, 1
      %s47 = scalar_select %p44, %s45, %s46
      %p50 = pneg %p44
      %p51 = scmp.eq.s32.totalorder %s21, 1
      %p52 = por %p50, %p51
      %p53 = scmp.ne.s32.totalorder %s45, %s48
      %p54 = scmp.eq.s32.totalorder %s21, 0
      %p55 = por %p53, %p54
      %p56 = scmp.ne.s32.totalorder %s45, %s48
      %p57 = scmp.eq.s32.totalorder %s26, 1
      %p58 = por %p56, %p57
      %p59 = scmp.ne.s32.totalorder %s48, %s49
      %p60 = scmp.eq.s32.totalorder %s26, 0
      %p61 = por %p59, %p60
      %p62 = scmp.ne.s32.totalorder %s48, %s49
      %p63 = scmp.eq.s32.totalorder %s27, 1
      %p64 = por %p62, %p63
      %p66 = scmp.ne.s32.totalorder %s49, %s65
      %p67 = scmp.eq.s32.totalorder %s27, 0
      %p68 = por %p66, %p67
      %s70 = sadd.s32 %s69, 1
      %p73 = scmp.eq.s32.totalorder %s21, 1
      %p74 = scmp.ne.s32.totalorder %s69, %s71
      %p75 = scmp.eq.s32.totalorder %s21, 0
      %p76 = por %p74, %p75
      %p77 = scmp.ne.s32.totalorder %s69, %s71
      %p78 = scmp.eq.s32.totalorder %s26, 1
      %p79 = por %p77, %p78
      %p80 = scmp.ne.s32.totalorder %s71, %s72
      %p81 = scmp.eq.s32.totalorder %s26, 0
      %p82 = por %p80, %p81
      %p83 = scmp.ne.s32.totalorder %s71, %s72
      %p84 = scmp.eq.s32.totalorder %s27, 1
      %p85 = por %p83, %p84
      %p87 = scmp.ne.s32.totalorder %s72, %s86
      %p88 = scmp.eq.s32.totalorder %s27, 0
      %p89 = por %p87, %p88
      %s91 = sadd.s32 %s90, 1
      %p94 = scmp.eq.s32.totalorder %s21, 1
      %p95 = scmp.ne.s32.totalorder %s90, %s92
      %p96 = scmp.eq.s32.totalorder %s21, 0
      %p97 = por %p95, %p96
      %p98 = scmp.ne.s32.totalorder %s90, %s92
      %p99 = scmp.eq.s32.totalorder %s26, 1
      %p100 = por %p98, %p99
      %p101 = scmp.ne.s32.totalorder %s92, %s93
      %p102 = scmp.eq.s32.totalorder %s26, 0
      %p103 = por %p101, %p102
      %p104 = scmp.ne.s32.totalorder %s92, %s93
      %p105 = scmp.eq.s32.totalorder %s27, 1
      %p106 = por %p104, %p105
      %p108 = scmp.ne.s32.totalorder %s93, %s107
      %p109 = scmp.eq.s32.totalorder %s27, 0
      %p110 = por %p108, %p109
      %s111 = ssub.s32 %s28, %s40
      %s112 = ssub.s32 %s29, %s36
      %s113 = sor.u32 %s111, %s112
      %p114 = scmp.eq.s32.totalorder %s113, 0
      %s116 = sadd.s32 %s115, 1
      %s117 = scalar_select %p114, %s115, %s116
      %p120 = pneg %p114
      %p121 = scmp.eq.s32.totalorder %s21, 1
      %p122 = por %p120, %p121
      %p123 = scmp.ne.s32.totalorder %s115, %s118
      %p124 = scmp.eq.s32.totalorder %s21, 0
      %p125 = por %p123, %p124
      %p126 = scmp.ne.s32.totalorder %s115, %s118
      %p127 = scmp.eq.s32.totalorder %s26, 1
      %p128 = por %p126, %p127
      %p129 = scmp.ne.s32.totalorder %s118, %s119
      %p130 = scmp.eq.s32.totalorder %s26, 0
      %p131 = por %p129, %p130
      %p132 = scmp.ne.s32.totalorder %s118, %s119
      %p133 = scmp.eq.s32.totalorder %s27, 1
      %p134 = por %p132, %p133
      %p136 = scmp.ne.s32.totalorder %s119, %s135
      %p137 = scmp.eq.s32.totalorder %s27, 0
      %p138 = por %p136, %p137
      %s139 = ssub.s32 %s28, %s40
      %s140 = ssub.s32 %s29, %s36
      %s141 = sor.u32 %s139, %s140
      %p142 = scmp.eq.s32.totalorder %s141, 0
      %s144 = sadd.s32 %s143, 1
      %s145 = scalar_select %p142, %s143, %s144
      %p148 = pneg %p142
      %p149 = scmp.eq.s32.totalorder %s21, 1
      %p150 = por %p148, %p149
      %p151 = scmp.ne.s32.totalorder %s143, %s146
      %p152 = scmp.eq.s32.totalorder %s21, 0
      %p153 = por %p151, %p152
      %p154 = scmp.ne.s32.totalorder %s143, %s146
      %p155 = scmp.eq.s32.totalorder %s26, 1
      %p156 = por %p154, %p155
      %p157 = scmp.ne.s32.totalorder %s146, %s147
      %p158 = scmp.eq.s32.totalorder %s26, 0
      %p159 = por %p157, %p158
      %p160 = scmp.ne.s32.totalorder %s146, %s147
      %p161 = scmp.eq.s32.totalorder %s27, 1
      %p162 = por %p160, %p161
      %p164 = scmp.ne.s32.totalorder %s147, %s163
      %p165 = scmp.eq.s32.totalorder %s27, 0
      %p166 = por %p164, %p165
      %s167 = ssub.s32 %s28, %s40
      %s168 = ssub.s32 %s29, %s36
      %s169 = sor.u32 %s167, %s168
      %p170 = scmp.eq.s32.totalorder %s169, 0
      %s172 = sadd.s32 %s171, 1
      %s173 = scalar_select %p170, %s171, %s172
      %p176 = pneg %p170
      %p177 = scmp.eq.s32.totalorder %s21, 1
      %p178 = por %p176, %p177
      %p179 = scmp.ne.s32.totalorder %s171, %s174
      %p180 = scmp.eq.s32.totalorder %s21, 0
      %p181 = por %p179, %p180
      %p182 = scmp.ne.s32.totalorder %s171, %s174
      %p183 = scmp.eq.s32.totalorder %s26, 1
      %p184 = por %p182, %p183
      %p185 = scmp.ne.s32.totalorder %s174, %s175
      %p186 = scmp.eq.s32.totalorder %s26, 0
      %p187 = por %p185, %p186
      %p188 = scmp.ne.s32.totalorder %s174, %s175
      %p189 = scmp.eq.s32.totalorder %s27, 1
      %p190 = por %p188, %p189
      %p192 = scmp.ne.s32.totalorder %s175, %s191
      %p193 = scmp.eq.s32.totalorder %s27, 0
      %p194 = por %p192, %p193
      %p195 = scmp.le.s32.totalorder 1, %s21
      %p196 = scmp.lt.s32.totalorder %s21, 3
      %p197 = pnand %p195, %p196
      %p198 = pneg %p197
      // Predicated region
      $region9: #{_lambda_.15} parent=5 // pred_check
        _
      $region10: #{_lambda_.15} parent=5 // pred_check_branch
        %200 = sbr.rel (%p197) target = $region12
      $region11: #{_lambda_.15} parent=5 // pred_region
        %s201 = ssub.s32 %s21, 1
        // Predicated region
        $region13: #{_lambda_.15} parent=11 // pred_check
          %p202 = pneg %p82
        $region14: #{_lambda_.15} parent=11 // pred_check_branch
          %204 = sbr.rel (%p202) target = $region16
        $region15: #{_lambda_.15} parent=11 // pred_region
          %s206 = ssub.s32 64, 64
          %207 = vsyncadd [#allocation6], %s206
          %s209 = sshll.u32 [#allocation5], 4
          %s210 = int_to_ptr.vmem [resolvable:$true] %s209
          %212 = dma.hbm_to_vmem [thread:$0]  %s1, 64, %s210, [#allocation6]
        $region16: #{_lambda_.15} parent=11 // pred_fallthru
          _
        // Predicated region
        $region17: #{_lambda_.15} parent=11 // pred_check
          %p213 = pneg %p103
        $region18: #{_lambda_.15} parent=11 // pred_check_branch
          %215 = sbr.rel (%p213) target = $region20
        $region19: #{_lambda_.15} parent=11 // pred_region
          %s217 = ssub.s32 64, 64
          %218 = vsyncadd [#allocation6], %s217
          %s220 = sshll.u32 [#allocation7], 4
          %s221 = int_to_ptr.vmem [resolvable:$true] %s220
          %223 = dma.hbm_to_vmem [thread:$0]  %s2, 64, %s221, [#allocation6]
        $region20: #{_lambda_.15} parent=11 // pred_fallthru
          _
      $region12: #{_lambda_.15} parent=5 // pred_fallthru
        _
      %p224 = scmp.lt.s32.totalorder %s21, 2
      // Predicated region
      $region21: #{_lambda_.15} parent=5 // pred_check
        %p225 = pneg %p224
      $region22: #{_lambda_.15} parent=5 // pred_check_branch
        %227 = sbr.rel (%p225) target = $region24
      $region23: #{_lambda_.15} parent=5 // pred_region
        // Predicated region
        $region25: #{_lambda_.15} parent=23 // pred_check
          %p228 = pneg %p55
        $region26: #{_lambda_.15} parent=23 // pred_check_branch
          %230 = sbr.rel (%p228) target = $region28
        $region27: #{_lambda_.15} parent=23 // pred_region
          %s231 = sand.u32 %s45, 1
          %s232 = scalar_lea.sflag [#allocation3], %s231
          %s233 = sand.u32 %s45, 1
          %s234 = smul.addr %s233, 4
          %s235 = scalar_lea.vmem [#allocation2], %s234
          %s237 = ssub.s32 64, 64
          %238 = vsyncadd %s232, %s237
          %s239 = sadd.s32 %s29, %s28
          %s240 = smul.addr %s239, 64
          %s241 = scalar_lea.hbm %s0, %s240
          %s243 = sshll.u32 %s235, 4
          %s244 = int_to_ptr.vmem [resolvable:$true] %s243
          %246 = dma.hbm_to_vmem [thread:$0]  %s241, 64, %s244, %s232
        $region28: #{_lambda_.15} parent=23 // pred_fallthru
          _
        // Predicated region
        $region29: #{_lambda_.15} parent=23 // pred_check
          %p247 = pneg %p125
        $region30: #{_lambda_.15} parent=23 // pred_check_branch
          %249 = sbr.rel (%p247) target = $region32
        $region31: #{_lambda_.15} parent=23 // pred_region
          %s250 = sand.u32 %s21, 1
          %s251 = scalar_lea.sflag [#allocation9], %s250
          %s252 = sand.u32 %s115, 1
          %s253 = smul.addr %s252, 32
          %s254 = scalar_lea.vmem [#allocation8], %s253
          %s255 = smul.u32 4, %s29
          %s257 = ssub.s32 512, 512
          %258 = vsyncadd %s251, %s257
          %s259 = smul.addr %s255, 2
          %s260 = sadd.s32 1, %s259
          %s261 = smul.addr %s28, 8
          %s262 = sadd.s32 %s260, %s261
          %s263 = smul.addr %s262, 128
          %s264 = scalar_lea.hbm %s3, %s263
          %s265 = sshll.u32 %s254, 4
          %s266 = int_to_ptr.vmem [resolvable:$true] %s265
          %271 = dma.hbm_to_vmem [thread:$0]  %s264, 512, %s266, %s251, 256, 128, 8
        $region32: #{_lambda_.15} parent=23 // pred_fallthru
          _
        // Predicated region
        $region33: #{_lambda_.15} parent=23 // pred_check
          %p272 = pneg %p153
        $region34: #{_lambda_.15} parent=23 // pred_check_branch
          %274 = sbr.rel (%p272) target = $region36
        $region35: #{_lambda_.15} parent=23 // pred_region
          %s275 = sand.u32 %s21, 1
          %s276 = scalar_lea.sflag [#allocation9], %s275
          %s277 = sand.u32 %s143, 1
          %s278 = smul.addr %s277, 32
          %s279 = scalar_lea.vmem [#allocation10], %s278
          %s280 = smul.u32 4, %s29
          %s282 = ssub.s32 512, 512
          %283 = vsyncadd %s276, %s282
          %s284 = smul.addr %s280, 2
          %s285 = sadd.s32 1, %s284
          %s286 = smul.addr %s28, 8
          %s287 = sadd.s32 %s285, %s286
          %s288 = smul.addr %s287, 128
          %s289 = scalar_lea.hbm %s4, %s288
          %s290 = sshll.u32 %s279, 4
          %s291 = int_to_ptr.vmem [resolvable:$true] %s290
          %296 = dma.hbm_to_vmem [thread:$0]  %s289, 512, %s291, %s276, 256, 128, 8
        $region36: #{_lambda_.15} parent=23 // pred_fallthru
          _
      $region24: #{_lambda_.15} parent=5 // pred_fallthru
        _
      %p297 = scmp.le.s32.totalorder 1, %s21
      %p298 = scmp.lt.s32.totalorder %s21, 3
      %p299 = pnand %p297, %p298
      %p300 = pneg %p299
      // Predicated region
      $region37: #{_lambda_.15} parent=5 // pred_check
        _
      $region38: #{_lambda_.15} parent=5 // pred_check_branch
        %302 = sbr.rel (%p299) target = $region40
      $region39: #{_lambda_.15} parent=5 // pred_region
        %s303 = ssub.s32 %s21, 1
        %s304 = sand.u32 %s48, 1
        %s305 = scalar_lea.sflag [#allocation3], %s304
        %s306 = sand.u32 %s48, 1
        %s307 = smul.addr %s306, 4
        %s308 = scalar_lea.vmem [#allocation2], %s307
        // Predicated region
        $region41: #{_lambda_.15} parent=39 // pred_check
          %p309 = pneg %p61
        $region42: #{_lambda_.15} parent=39 // pred_check_branch
          %311 = sbr.rel (%p309) target = $region44
        $region43: #{_lambda_.15} parent=39 // pred_region
          %312 = dma.done %s305, 64
        $region44: #{_lambda_.15} parent=39 // pred_fallthru
          _
        // Predicated region
        $region45: #{_lambda_.15} parent=39 // pred_check
          %p313 = pneg %p82
        $region46: #{_lambda_.15} parent=39 // pred_check_branch
          %315 = sbr.rel (%p313) target = $region48
        $region47: #{_lambda_.15} parent=39 // pred_region
          %316 = dma.done [#allocation6], 64
        $region48: #{_lambda_.15} parent=39 // pred_fallthru
          _
        // Predicated region
        $region49: #{_lambda_.15} parent=39 // pred_check
          %p317 = pneg %p103
        $region50: #{_lambda_.15} parent=39 // pred_check_branch
          %319 = sbr.rel (%p317) target = $region52
        $region51: #{_lambda_.15} parent=39 // pred_region
          %320 = dma.done [#allocation6], 64
        $region52: #{_lambda_.15} parent=39 // pred_fallthru
          _
        %s321 = sand.u32 %s26, 1
        %s322 = scalar_lea.sflag [#allocation9], %s321
        %s323 = sand.u32 %s118, 1
        %s324 = smul.addr %s323, 32
        %s325 = scalar_lea.vmem [#allocation8], %s324
        // Predicated region
        $region53: #{_lambda_.15} parent=39 // pred_check
          %p326 = pneg %p131
        $region54: #{_lambda_.15} parent=39 // pred_check_branch
          %328 = sbr.rel (%p326) target = $region56
        $region55: #{_lambda_.15} parent=39 // pred_region
          %329 = dma.done %s322, 512
        $region56: #{_lambda_.15} parent=39 // pred_fallthru
          _
        %s330 = sand.u32 %s26, 1
        %s331 = scalar_lea.sflag [#allocation9], %s330
        %s332 = sand.u32 %s146, 1
        %s333 = smul.addr %s332, 32
        %s334 = scalar_lea.vmem [#allocation10], %s333
        // Predicated region
        $region57: #{_lambda_.15} parent=39 // pred_check
          %p335 = pneg %p159
        $region58: #{_lambda_.15} parent=39 // pred_check_branch
          %337 = sbr.rel (%p335) target = $region60
        $region59: #{_lambda_.15} parent=39 // pred_region
          %338 = dma.done %s331, 512
        $region60: #{_lambda_.15} parent=39 // pred_fallthru
          _
        %s339 = sand.u32 %s48, 1
        %s340 = scalar_lea.sflag [#allocation3], %s339
        %s341 = sand.u32 %s48, 1
        %s342 = smul.addr %s341, 4
        %s343 = scalar_lea.vmem [#allocation2], %s342
        %p344 = pneg %p61
        %p345 = pneg %p58
        %p346 = pneg %p82
        %p347 = pneg %p79
        %p348 = pneg %p103
        %p349 = pneg %p100
        %s350 = sand.u32 %s26, 1
        %s351 = scalar_lea.sflag [#allocation9], %s350
        %s352 = sand.u32 %s118, 1
        %s353 = smul.addr %s352, 32
        %s354 = scalar_lea.vmem [#allocation8], %s353
        %p355 = pneg %p131
        %p356 = pneg %p128
        %s357 = sand.u32 %s26, 1
        %s358 = scalar_lea.sflag [#allocation9], %s357
        %s359 = sand.u32 %s146, 1
        %s360 = smul.addr %s359, 32
        %s361 = scalar_lea.vmem [#allocation10], %s360
        %p362 = pneg %p159
        %p363 = pneg %p156
        %p364 = pneg %p187
        %p365 = pneg %p184
        %s366 = sand.u32 %s174, 1
        %s367 = scalar_lea.sflag [#allocation4], %s366
        %s368 = sand.u32 %s174, 1
        %s369 = smul.addr %s368, 4
        %s370 = scalar_lea.vmem [#allocation11], %s369
        %s371 = smul.u32 4, %s31
        %s372 = smul.u32 4, %s31
        %v373 = vld [vmem:[%s308] sm:$0xf]
        %vm374 = vcmp.ge.f32.partialorder %v373, 0.0
        %v375 = vmul.f32 %v373, 0.2
        %v376 = vsel %vm374, %v373, %v375
        %v378 = vrot.slane %v376, 4
        %379 = vrot.lane.b32.xlu0 %v378, 125
        %v380 = vpop.permute.xlu0 %379
        %382 = vrot.lane.b32.xlu0 %v376, 122
        %v383 = vpop.permute.xlu0 %382
        %vm384 = vcmask 1043456
        %v385 = vsel %vm384, %v376, %v380
        %v386 = vld [vmem:[#allocation5] sm:$0xf]
        %v387 = vld [vmem:[#allocation7] sm:$0xf]
        %389 = vset.pattern.permute.xlu0 0
        %390 = vperm.xlu0 %389, %v387
        %v391 = vpop.permute.xlu0 %390
        %vm393 = vcmask 97280
        %v395 = vsel %vm393, %v386, 0
        %v397 = vsel %vm384, %v383, 0
        %399 = vmatprep.subr.mxu0 0.0
        %400 = vmatpush1.msra.mxu0 %v385
        %401 = vmatprep.subr.mxu0 0.0
        %402 = vmatpush1.msra.mxu0 %v397
        %403 = vmatprep.subr.mxu0 0.0
        %404 = vmatpush1.msra.mxu0 0.0
        %405 = vmatprep.subr.mxu0 0.0
        %406 = vmatpush1.msra.mxu0 0.0
        %407 = vmatprep.subr.mxu0 0.0
        %408 = vmatpush1.msra.mxu0 0.0
        %409 = vmatprep.subr.mxu0 0.0
        %410 = vmatpush1.msra.mxu0 0.0
        %411 = vmatprep.subr.mxu0 0.0
        %412 = vmatpush1.msra.mxu0 0.0
        %413 = vmatprep.subr.mxu0 0.0
        %414 = vmatpush1.msra.mxu0 0.0
        %415 = vmatprep.subr.mxu0 0.0
        %416 = vmatpush1.msra.mxu0 0.0
        %417 = vmatprep.subr.mxu0 0.0
        %418 = vmatpush1.msra.mxu0 0.0
        %419 = vmatprep.subr.mxu0 0.0
        %420 = vmatpush1.msra.mxu0 0.0
        %421 = vmatprep.subr.mxu0 0.0
        %422 = vmatpush1.msra.mxu0 0.0
        %423 = vmatprep.subr.mxu0 0.0
        %424 = vmatpush1.msra.mxu0 0.0
        %425 = vmatprep.subr.mxu0 0.0
        %426 = vmatpush1.msra.mxu0 0.0
        %427 = vmatprep.subr.mxu0 0.0
        %428 = vmatpush1.msra.mxu0 0.0
        %429 = vmatprep.subr.mxu0 0.0
        %430 = vmatpush1.msra.mxu0 0.0
        %431 = vmatprep.subr.mxu0 0.0
        %432 = vmatpush1.msra.mxu0 0.0
        %433 = vmatprep.subr.mxu0 0.0
        %434 = vmatpush1.msra.mxu0 0.0
        %435 = vmatprep.subr.mxu0 0.0
        %436 = vmatpush1.msra.mxu0 0.0
        %437 = vmatprep.subr.mxu0 0.0
        %438 = vmatpush1.msra.mxu0 0.0
        %439 = vmatprep.subr.mxu0 0.0
        %440 = vmatpush1.msra.mxu0 0.0
        %441 = vmatprep.subr.mxu0 0.0
        %442 = vmatpush1.msra.mxu0 0.0
        %443 = vmatprep.subr.mxu0 0.0
        %444 = vmatpush1.msra.mxu0 0.0
        %445 = vmatprep.subr.mxu0 0.0
        %446 = vmatpush1.msra.mxu0 0.0
        %447 = vmatprep.subr.mxu0 0.0
        %448 = vmatpush1.msra.mxu0 0.0
        %449 = vmatprep.subr.mxu0 0.0
        %450 = vmatpush1.msra.mxu0 0.0
        %451 = vmatprep.subr.mxu0 0.0
        %452 = vmatpush1.msra.mxu0 0.0
        %453 = vmatprep.subr.mxu0 0.0
        %454 = vmatpush1.msra.mxu0 0.0
        %455 = vmatprep.subr.mxu0 0.0
        %456 = vmatpush1.msra.mxu0 0.0
        %457 = vmatprep.subr.mxu0 0.0
        %458 = vmatpush1.msra.mxu0 0.0
        %459 = vmatprep.subr.mxu0 0.0
        %460 = vmatpush1.msra.mxu0 0.0
        %461 = vmatprep.subr.mxu0 0.0
        %462 = vmatpush1.msra.mxu0 0.0
        %463 = vmatprep.mubr.f32.mxu0 0.0
        %464 = vmatmul.mubr.f32.gmra.mrb[0].mxu0 %v395
        %v465 = vpop.f32.mrb[0].mxu0
        %v466 = vadd.f32 %v391, %v465
        %v467 = vpop.f32.mrb[0].mxu0
        %468 = vdwg.mxu0
        %vm469 = vcmp.ge.f32.partialorder %v466, 0.0
        %v470 = vmul.f32 %v466, 0.2
        %v471 = vsel %vm469, %v466, %v470
        %s472 = smul.u32 %s31, 32
        %s473 = ssub.s32 %s472, 1
        %v474 = vlaneseq
        %v475 = vand.u32 %v474, 127
        %v476 = vstv %s473
        %v477 = vadd.s32 %v476, %v475
        %vm478 = vcmp.ge.s32.totalorder %v477, 0
        %vm479 = vcmp.lt.s32.totalorder %v477, 32
        %vm480 = vmand %vm478, %vm479
        %v481 = vsel %vm480, 1, 0
        %vm482 = vcmp.eq.s32.totalorder %v481, 1
        %v483 = vsel %vm482, %v471, 0.0
        %v485 = vrot.slane %v483, 4
        %486 = vrot.lane.b32.xlu0 %v485, 127
        %v487 = vpop.permute.xlu0 %486
        %489 = vrot.lane.b32.xlu0 %v483, 126
        %v490 = vpop.permute.xlu0 %489
        %v491 = vsel %vm384, %v483, %v487
        %v492 = vld [vmem:[%s325] sm:$0xff]
        %v493 = vld [vmem:[%s334] sm:$0xff]
        %495 = vset.pattern.permute.xlu0 0
        %496 = vperm.xlu0 %495, %v493
        %v497 = vpop.permute.xlu0 %496
        %v500 = vsel %vm393, %v492, 0
        %v502 = vsel %vm384, %v490, 0
        %504 = vmatprep.subr.mxu0 0.0
        %505 = vmatpush1.msra.mxu0 %v491
        %506 = vmatprep.subr.mxu0 0.0
        %507 = vmatpush1.msra.mxu0 %v502
        %508 = vmatprep.subr.mxu0 0.0
        %509 = vmatpush1.msra.mxu0 0.0
        %510 = vmatprep.subr.mxu0 0.0
        %511 = vmatpush1.msra.mxu0 0.0
        %512 = vmatprep.subr.mxu0 0.0
        %513 = vmatpush1.msra.mxu0 0.0
        %514 = vmatprep.subr.mxu0 0.0
        %515 = vmatpush1.msra.mxu0 0.0
        %516 = vmatprep.subr.mxu0 0.0
        %517 = vmatpush1.msra.mxu0 0.0
        %518 = vmatprep.subr.mxu0 0.0
        %519 = vmatpush1.msra.mxu0 0.0
        %520 = vmatprep.subr.mxu0 0.0
        %521 = vmatpush1.msra.mxu0 0.0
        %522 = vmatprep.subr.mxu0 0.0
        %523 = vmatpush1.msra.mxu0 0.0
        %524 = vmatprep.subr.mxu0 0.0
        %525 = vmatpush1.msra.mxu0 0.0
        %526 = vmatprep.subr.mxu0 0.0
        %527 = vmatpush1.msra.mxu0 0.0
        %528 = vmatprep.subr.mxu0 0.0
        %529 = vmatpush1.msra.mxu0 0.0
        %530 = vmatprep.subr.mxu0 0.0
        %531 = vmatpush1.msra.mxu0 0.0
        %532 = vmatprep.subr.mxu0 0.0
        %533 = vmatpush1.msra.mxu0 0.0
        %534 = vmatprep.subr.mxu0 0.0
        %535 = vmatpush1.msra.mxu0 0.0
        %536 = vmatprep.subr.mxu0 0.0
        %537 = vmatpush1.msra.mxu0 0.0
        %538 = vmatprep.subr.mxu0 0.0
        %539 = vmatpush1.msra.mxu0 0.0
        %540 = vmatprep.subr.mxu0 0.0
        %541 = vmatpush1.msra.mxu0 0.0
        %542 = vmatprep.subr.mxu0 0.0
        %543 = vmatpush1.msra.mxu0 0.0
        %544 = vmatprep.subr.mxu0 0.0
        %545 = vmatpush1.msra.mxu0 0.0
        %546 = vmatprep.subr.mxu0 0.0
        %547 = vmatpush1.msra.mxu0 0.0
        %548 = vmatprep.subr.mxu0 0.0
        %549 = vmatpush1.msra.mxu0 0.0
        %550 = vmatprep.subr.mxu0 0.0
        %551 = vmatpush1.msra.mxu0 0.0
        %552 = vmatprep.subr.mxu0 0.0
        %553 = vmatpush1.msra.mxu0 0.0
        %554 = vmatprep.subr.mxu0 0.0
        %555 = vmatpush1.msra.mxu0 0.0
        %556 = vmatprep.subr.mxu0 0.0
        %557 = vmatpush1.msra.mxu0 0.0
        %558 = vmatprep.subr.mxu0 0.0
        %559 = vmatpush1.msra.mxu0 0.0
        %560 = vmatprep.subr.mxu0 0.0
        %561 = vmatpush1.msra.mxu0 0.0
        %562 = vmatprep.subr.mxu0 0.0
        %563 = vmatpush1.msra.mxu0 0.0
        %564 = vmatprep.subr.mxu0 0.0
        %565 = vmatpush1.msra.mxu0 0.0
        %566 = vmatprep.subr.mxu0 0.0
        %567 = vmatpush1.msra.mxu0 0.0
        %568 = vmatprep.mubr.f32.mxu0 0.0
        %569 = vmatmul.mubr.f32.gmra.mrb[0].mxu0 %v500
        %v570 = vpop.f32.mrb[0].mxu0
        %v571 = vadd.f32 %v497, %v570
        %v572 = vpop.f32.mrb[0].mxu0
        %573 = vdwg.mxu0
        %s574 = scalar_lea.vmem %s325, 8 [#allocation8]
        %v575 = vld [vmem:[%s574] sm:$0xff]
        %s576 = scalar_lea.vmem %s334, 8 [#allocation10]
        %v577 = vld [vmem:[%s576] sm:$0xff]
        %579 = vset.pattern.permute.xlu0 0
        %580 = vperm.xlu0 %579, %v577
        %v581 = vpop.permute.xlu0 %580
        %584 = vrot.lane.b32.xlu0 %v491, 120
        %v585 = vpop.permute.xlu0 %584
        %586 = vrot.lane.b32.xlu0 %v490, 120
        %v587 = vpop.permute.xlu0 %586
        %v590 = vsel %vm393, %v575, 0
        %v592 = vsel %vm384, %v587, 0
        %594 = vmatprep.subr.mxu0 0.0
        %595 = vmatpush1.msra.mxu0 %v585
        %596 = vmatprep.subr.mxu0 0.0
        %597 = vmatpush1.msra.mxu0 %v592
        %598 = vmatprep.subr.mxu0 0.0
        %599 = vmatpush1.msra.mxu0 0.0
        %600 = vmatprep.subr.mxu0 0.0
        %601 = vmatpush1.msra.mxu0 0.0
        %602 = vmatprep.subr.mxu0 0.0
        %603 = vmatpush1.msra.mxu0 0.0
        %604 = vmatprep.subr.mxu0 0.0
        %605 = vmatpush1.msra.mxu0 0.0
        %606 = vmatprep.subr.mxu0 0.0
        %607 = vmatpush1.msra.mxu0 0.0
        %608 = vmatprep.subr.mxu0 0.0
        %609 = vmatpush1.msra.mxu0 0.0
        %610 = vmatprep.subr.mxu0 0.0
        %611 = vmatpush1.msra.mxu0 0.0
        %612 = vmatprep.subr.mxu0 0.0
        %613 = vmatpush1.msra.mxu0 0.0
        %614 = vmatprep.subr.mxu0 0.0
        %615 = vmatpush1.msra.mxu0 0.0
        %616 = vmatprep.subr.mxu0 0.0
        %617 = vmatpush1.msra.mxu0 0.0
        %618 = vmatprep.subr.mxu0 0.0
        %619 = vmatpush1.msra.mxu0 0.0
        %620 = vmatprep.subr.mxu0 0.0
        %621 = vmatpush1.msra.mxu0 0.0
        %622 = vmatprep.subr.mxu0 0.0
        %623 = vmatpush1.msra.mxu0 0.0
        %624 = vmatprep.subr.mxu0 0.0
        %625 = vmatpush1.msra.mxu0 0.0
        %626 = vmatprep.subr.mxu0 0.0
        %627 = vmatpush1.msra.mxu0 0.0
        %628 = vmatprep.subr.mxu0 0.0
        %629 = vmatpush1.msra.mxu0 0.0
        %630 = vmatprep.subr.mxu0 0.0
        %631 = vmatpush1.msra.mxu0 0.0
        %632 = vmatprep.subr.mxu0 0.0
        %633 = vmatpush1.msra.mxu0 0.0
        %634 = vmatprep.subr.mxu0 0.0
        %635 = vmatpush1.msra.mxu0 0.0
        %636 = vmatprep.subr.mxu0 0.0
        %637 = vmatpush1.msra.mxu0 0.0
        %638 = vmatprep.subr.mxu0 0.0
        %639 = vmatpush1.msra.mxu0 0.0
        %640 = vmatprep.subr.mxu0 0.0
        %641 = vmatpush1.msra.mxu0 0.0
        %642 = vmatprep.subr.mxu0 0.0
        %643 = vmatpush1.msra.mxu0 0.0
        %644 = vmatprep.subr.mxu0 0.0
        %645 = vmatpush1.msra.mxu0 0.0
        %646 = vmatprep.subr.mxu0 0.0
        %647 = vmatpush1.msra.mxu0 0.0
        %648 = vmatprep.subr.mxu0 0.0
        %649 = vmatpush1.msra.mxu0 0.0
        %650 = vmatprep.subr.mxu0 0.0
        %651 = vmatpush1.msra.mxu0 0.0
        %652 = vmatprep.subr.mxu0 0.0
        %653 = vmatpush1.msra.mxu0 0.0
        %654 = vmatprep.subr.mxu0 0.0
        %655 = vmatpush1.msra.mxu0 0.0
        %656 = vmatprep.subr.mxu0 0.0
        %657 = vmatpush1.msra.mxu0 0.0
        %658 = vmatprep.mubr.f32.mxu0 0.0
        %659 = vmatmul.mubr.f32.gmra.mrb[0].mxu0 %v590
        %v660 = vpop.f32.mrb[0].mxu0
        %v661 = vadd.f32 %v581, %v660
        %v662 = vpop.f32.mrb[0].mxu0
        %663 = vdwg.mxu0
        %s664 = scalar_lea.vmem %s325, 16 [#allocation8]
        %v665 = vld [vmem:[%s664] sm:$0xff]
        %s666 = scalar_lea.vmem %s334, 16 [#allocation10]
        %v667 = vld [vmem:[%s666] sm:$0xff]
        %669 = vset.pattern.permute.xlu0 0
        %670 = vperm.xlu0 %669, %v667
        %v671 = vpop.permute.xlu0 %670
        %673 = vrot.lane.b32.xlu0 %v491, 112
        %v674 = vpop.permute.xlu0 %673
        %675 = vrot.lane.b32.xlu0 %v490, 112
        %v676 = vpop.permute.xlu0 %675
        %v679 = vsel %vm393, %v665, 0
        %v681 = vsel %vm384, %v676, 0
        %683 = vmatprep.subr.mxu0 0.0
        %684 = vmatpush1.msra.mxu0 %v674
        %685 = vmatprep.subr.mxu0 0.0
        %686 = vmatpush1.msra.mxu0 %v681
        %687 = vmatprep.subr.mxu0 0.0
        %688 = vmatpush1.msra.mxu0 0.0
        %689 = vmatprep.subr.mxu0 0.0
        %690 = vmatpush1.msra.mxu0 0.0
        %691 = vmatprep.subr.mxu0 0.0
        %692 = vmatpush1.msra.mxu0 0.0
        %693 = vmatprep.subr.mxu0 0.0
        %694 = vmatpush1.msra.mxu0 0.0
        %695 = vmatprep.subr.mxu0 0.0
        %696 = vmatpush1.msra.mxu0 0.0
        %697 = vmatprep.subr.mxu0 0.0
        %698 = vmatpush1.msra.mxu0 0.0
        %699 = vmatprep.subr.mxu0 0.0
        %700 = vmatpush1.msra.mxu0 0.0
        %701 = vmatprep.subr.mxu0 0.0
        %702 = vmatpush1.msra.mxu0 0.0
        %703 = vmatprep.subr.mxu0 0.0
        %704 = vmatpush1.msra.mxu0 0.0
        %705 = vmatprep.subr.mxu0 0.0
        %706 = vmatpush1.msra.mxu0 0.0
        %707 = vmatprep.subr.mxu0 0.0
        %708 = vmatpush1.msra.mxu0 0.0
        %709 = vmatprep.subr.mxu0 0.0
        %710 = vmatpush1.msra.mxu0 0.0
        %711 = vmatprep.subr.mxu0 0.0
        %712 = vmatpush1.msra.mxu0 0.0
        %713 = vmatprep.subr.mxu0 0.0
        %714 = vmatpush1.msra.mxu0 0.0
        %715 = vmatprep.subr.mxu0 0.0
        %716 = vmatpush1.msra.mxu0 0.0
        %717 = vmatprep.subr.mxu0 0.0
        %718 = vmatpush1.msra.mxu0 0.0
        %719 = vmatprep.subr.mxu0 0.0
        %720 = vmatpush1.msra.mxu0 0.0
        %721 = vmatprep.subr.mxu0 0.0
        %722 = vmatpush1.msra.mxu0 0.0
        %723 = vmatprep.subr.mxu0 0.0
        %724 = vmatpush1.msra.mxu0 0.0
        %725 = vmatprep.subr.mxu0 0.0
        %726 = vmatpush1.msra.mxu0 0.0
        %727 = vmatprep.subr.mxu0 0.0
        %728 = vmatpush1.msra.mxu0 0.0
        %729 = vmatprep.subr.mxu0 0.0
        %730 = vmatpush1.msra.mxu0 0.0
        %731 = vmatprep.subr.mxu0 0.0
        %732 = vmatpush1.msra.mxu0 0.0
        %733 = vmatprep.subr.mxu0 0.0
        %734 = vmatpush1.msra.mxu0 0.0
        %735 = vmatprep.subr.mxu0 0.0
        %736 = vmatpush1.msra.mxu0 0.0
        %737 = vmatprep.subr.mxu0 0.0
        %738 = vmatpush1.msra.mxu0 0.0
        %739 = vmatprep.subr.mxu0 0.0
        %740 = vmatpush1.msra.mxu0 0.0
        %741 = vmatprep.subr.mxu0 0.0
        %742 = vmatpush1.msra.mxu0 0.0
        %743 = vmatprep.subr.mxu0 0.0
        %744 = vmatpush1.msra.mxu0 0.0
        %745 = vmatprep.subr.mxu0 0.0
        %746 = vmatpush1.msra.mxu0 0.0
        %747 = vmatprep.mubr.f32.mxu0 0.0
        %748 = vmatmul.mubr.f32.gmra.mrb[0].mxu0 %v679
        %v749 = vpop.f32.mrb[0].mxu0
        %v750 = vadd.f32 %v671, %v749
        %v751 = vpop.f32.mrb[0].mxu0
        %752 = vdwg.mxu0
        %s753 = scalar_lea.vmem %s325, 24 [#allocation8]
        %v754 = vld [vmem:[%s753] sm:$0xff]
        %s755 = scalar_lea.vmem %s334, 24 [#allocation10]
        %v756 = vld [vmem:[%s755] sm:$0xff]
        %758 = vset.pattern.permute.xlu0 0
        %759 = vperm.xlu0 %758, %v756
        %v760 = vpop.permute.xlu0 %759
        %762 = vrot.lane.b32.xlu0 %v491, 104
        %v763 = vpop.permute.xlu0 %762
        %764 = vrot.lane.b32.xlu0 %v490, 104
        %v765 = vpop.permute.xlu0 %764
        %v768 = vsel %vm393, %v754, 0
        %v770 = vsel %vm384, %v765, 0
        %772 = vmatprep.subr.mxu0 0.0
        %773 = vmatpush1.msra.mxu0 %v763
        %774 = vmatprep.subr.mxu0 0.0
        %775 = vmatpush1.msra.mxu0 %v770
        %776 = vmatprep.subr.mxu0 0.0
        %777 = vmatpush1.msra.mxu0 0.0
        %778 = vmatprep.subr.mxu0 0.0
        %779 = vmatpush1.msra.mxu0 0.0
        %780 = vmatprep.subr.mxu0 0.0
        %781 = vmatpush1.msra.mxu0 0.0
        %782 = vmatprep.subr.mxu0 0.0
        %783 = vmatpush1.msra.mxu0 0.0
        %784 = vmatprep.subr.mxu0 0.0
        %785 = vmatpush1.msra.mxu0 0.0
        %786 = vmatprep.subr.mxu0 0.0
        %787 = vmatpush1.msra.mxu0 0.0
        %788 = vmatprep.subr.mxu0 0.0
        %789 = vmatpush1.msra.mxu0 0.0
        %790 = vmatprep.subr.mxu0 0.0
        %791 = vmatpush1.msra.mxu0 0.0
        %792 = vmatprep.subr.mxu0 0.0
        %793 = vmatpush1.msra.mxu0 0.0
        %794 = vmatprep.subr.mxu0 0.0
        %795 = vmatpush1.msra.mxu0 0.0
        %796 = vmatprep.subr.mxu0 0.0
        %797 = vmatpush1.msra.mxu0 0.0
        %798 = vmatprep.subr.mxu0 0.0
        %799 = vmatpush1.msra.mxu0 0.0
        %800 = vmatprep.subr.mxu0 0.0
        %801 = vmatpush1.msra.mxu0 0.0
        %802 = vmatprep.subr.mxu0 0.0
        %803 = vmatpush1.msra.mxu0 0.0
        %804 = vmatprep.subr.mxu0 0.0
        %805 = vmatpush1.msra.mxu0 0.0
        %806 = vmatprep.subr.mxu0 0.0
        %807 = vmatpush1.msra.mxu0 0.0
        %808 = vmatprep.subr.mxu0 0.0
        %809 = vmatpush1.msra.mxu0 0.0
        %810 = vmatprep.subr.mxu0 0.0
        %811 = vmatpush1.msra.mxu0 0.0
        %812 = vmatprep.subr.mxu0 0.0
        %813 = vmatpush1.msra.mxu0 0.0
        %814 = vmatprep.subr.mxu0 0.0
        %815 = vmatpush1.msra.mxu0 0.0
        %816 = vmatprep.subr.mxu0 0.0
        %817 = vmatpush1.msra.mxu0 0.0
        %818 = vmatprep.subr.mxu0 0.0
        %819 = vmatpush1.msra.mxu0 0.0
        %820 = vmatprep.subr.mxu0 0.0
        %821 = vmatpush1.msra.mxu0 0.0
        %822 = vmatprep.subr.mxu0 0.0
        %823 = vmatpush1.msra.mxu0 0.0
        %824 = vmatprep.subr.mxu0 0.0
        %825 = vmatpush1.msra.mxu0 0.0
        %826 = vmatprep.subr.mxu0 0.0
        %827 = vmatpush1.msra.mxu0 0.0
        %828 = vmatprep.subr.mxu0 0.0
        %829 = vmatpush1.msra.mxu0 0.0
        %830 = vmatprep.subr.mxu0 0.0
        %831 = vmatpush1.msra.mxu0 0.0
        %832 = vmatprep.subr.mxu0 0.0
        %833 = vmatpush1.msra.mxu0 0.0
        %834 = vmatprep.subr.mxu0 0.0
        %835 = vmatpush1.msra.mxu0 0.0
        %836 = vmatprep.mubr.f32.mxu0 0.0
        %837 = vmatmul.mubr.f32.gmra.mrb[0].mxu0 %v768
        %v838 = vpop.f32.mrb[0].mxu0
        %v839 = vadd.f32 %v760, %v838
        %v840 = vpop.f32.mrb[0].mxu0
        %841 = vdwg.mxu0
        %843 = vrot.lane.b32.xlu0 %v661, 8
        %v844 = vpop.permute.xlu0 %843
        %847 = vrot.lane.b32.xlu0 %v750, 16
        %v848 = vpop.permute.xlu0 %847
        %851 = vrot.lane.b32.xlu0 %v839, 24
        %v852 = vpop.permute.xlu0 %851
        %vm854 = vcmask 64512
        %v855 = vsel %vm854, %v571, %v844
        %vm856 = vcmask 130048
        %v857 = vsel %vm856, %v855, %v848
        %vm858 = vcmask 195584
        %v859 = vsel %vm858, %v857, %v852
        %v860 = vxor.u32 %v859, 2147483648
        %v861 = vmul.f32 %v860, 1.442695
        %v862 = vpow.pop %v861
        %v863 = vadd.f32 %v862, 1.0
        %v864 = vrcp.pop %v863
        %v865 = vmul.f32 1.0, %v864
        %v866 = vtanh.pop %v859
        %v868 = vrot.slane %v866, 4
        %v870 = vmul.f32 %v865, %v868
        %872 = vrot.lane.b32.xlu0 %v870, 4
        %v873 = vpop.permute.xlu0 %872
        %v875 = vadd.f32 %v373, %v873
        %877 = vrot.lane.b32.xlu0 %v875, 124
        %v878 = vpop.permute.xlu0 %877
        %vm880 = vcmask 257024
        %881 = vst.msk [vmem:[%s370] sm:$0xf] %vm880, %v878
        %s882 = sand.u32 %s174, 1
        %s883 = scalar_lea.sflag [#allocation4], %s882
        %s884 = sand.u32 %s174, 1
        %s885 = smul.addr %s884, 4
        %s886 = scalar_lea.vmem [#allocation11], %s885
        // Predicated region
        $region61: #{_lambda_.15} parent=39 // pred_check
          %p887 = pneg %p184
        $region62: #{_lambda_.15} parent=39 // pred_check_branch
          %889 = sbr.rel (%p887) target = $region64
        $region63: #{_lambda_.15} parent=39 // pred_region
          %s891 = ssub.s32 64, 64
          %892 = vsyncadd %s883, %s891
          %s893 = sadd.s32 %s31, %s30
          %s894 = smul.addr %s893, 64
          %s895 = scalar_lea.hbm %s5, %s894
          %s897 = sshll.u32 %s886, 4
          %s898 = int_to_ptr.vmem [resolvable:$true] %s897
          %900 = dma.vmem_to_hbm [thread:$0]  %s898, 64, %s895, %s883
        $region64: #{_lambda_.15} parent=39 // pred_fallthru
          _
      $region40: #{_lambda_.15} parent=5 // pred_fallthru
        _
      %p901 = scmp.le.s32.totalorder 2, %s21
      // Predicated region
      $region65: #{_lambda_.15} parent=5 // pred_check
        %p902 = pneg %p901
      $region66: #{_lambda_.15} parent=5 // pred_check_branch
        %904 = sbr.rel (%p902) target = $region68
      $region67: #{_lambda_.15} parent=5 // pred_region
        %s905 = ssub.s32 %s21, 2
        // Predicated region
        $region69: #{_lambda_.15} parent=67 // pred_check
          %p906 = pneg %p190
        $region70: #{_lambda_.15} parent=67 // pred_check_branch
          %908 = sbr.rel (%p906) target = $region72
        $region71: #{_lambda_.15} parent=67 // pred_region
          %s909 = sand.u32 %s175, 1
          %s910 = scalar_lea.sflag [#allocation4], %s909
          %s911 = sand.u32 %s175, 1
          %s912 = smul.addr %s911, 4
          %s913 = scalar_lea.vmem [#allocation11], %s912
          %914 = dma.done %s910, 64
        $region72: #{_lambda_.15} parent=67 // pred_fallthru
          _
      $region68: #{_lambda_.15} parent=5 // pred_fallthru
        _
    $region6: #{_lambda_.15} parent=1 // loop_footer
      %s25 = sadd.s32 1, %s21
    $region7: #{_lambda_.15} parent=1 // loop_footer_branch
      %20 = sbr.rel target = $region3
    $region8: #{_lambda_.15} parent=1 // loop_exit
      _
    %915 = vsyncpa [#allocation3], 1
    %s916 = scalar_lea.sflag [#allocation3], 1
    %917 = vsyncpa %s916, 1
    %918 = vsyncpa [#allocation6], 1
    %919 = vsyncpa [#allocation9], 1
    %s920 = scalar_lea.sflag [#allocation9], 1
    %921 = vsyncpa %s920, 1
    %922 = vsyncpa [#allocation4], 1
    %s923 = scalar_lea.sflag [#allocation4], 1
    %924 = vsyncpa %s923, 1

</llo_original>
